<compile_context>
chip_gen: v7x
topology: tpu7x:2x2x1
jax: 0.10.0
libtpu: 0.0.40
codegen_flags: <defaults>
</compile_context>

<pallas_src>
import functools

import jax
import jax.numpy as jnp
from jax import lax
from jax.experimental import pallas as pl
from jax.experimental.pallas import tpu as pltpu


def _convt_stats_kernel(x_ref, w_ref, mask_ref, conv_ref, stats_ref, lhs_ref, *,
                        n_rows, Wp):
    # x_ref:    (1, Lp, Ci)        bf16  padded image, (row, col) flattened row-major
    # w_ref:    (9*Ci, 4*Co)       bf16  block-sparse [shift*Ci+ci, parity*Co+co]
    # mask_ref: (n_rows, 1)        f32   1.0 on valid rows (col-within-row < W)
    # conv_ref: (1, n_rows, 4*Co)  bf16  conv output, parities folded into lanes
    # stats_ref:(1, 2, 4*Co)       f32   per-image per-lane (sum, sum_of_squares)
    # lhs_ref:  (n_rows, 9*Ci)     bf16  VMEM scratch for the fused-matmul LHS
    ci = x_ref.shape[-1]

    # Build the LHS: 9 statically shifted windows of the flattened padded image.
    for sy in range(3):
        for sx in range(3):
            s = sy * 3 + sx
            start = sy * Wp + sx                      # static shift of the window
            lhs_ref[:, s * ci:(s + 1) * ci] = x_ref[0, start:start + n_rows, :]

    # One MXU matmul produces all 4 output parities at once (f32 accumulation).
    acc = jnp.dot(lhs_ref[...], w_ref[...], preferred_element_type=jnp.float32)

    # Fused BN partial statistics while acc is live; junk pad columns masked out.
    accm = acc * mask_ref[...]                        # single (n_rows,1) broadcast
    stats_ref[0, 0:1, :] = jnp.sum(accm, axis=0, keepdims=True)
    stats_ref[0, 1:2, :] = jnp.sum(accm * acc, axis=0, keepdims=True)

    conv_ref[0] = acc.astype(jnp.bfloat16)            # bf16 intermediate (HBM halved)


def _bn_relu_kernel(conv_ref, scale_ref, shift_ref, out_ref, *, H, W, Wp, apply_sigmoid):
    # conv_ref: (1, n_rows, 4*Co) bf16 ; scale/shift: (1, 4*Co) f32
    # out_ref:  (1, H, W, 4*Co)   f32   junk Wp columns dropped before hitting HBM
    y = conv_ref[0].astype(jnp.float32) * scale_ref[...] + shift_ref[...]
    y = jnp.maximum(y, 0.0)                           # ReLU
    if apply_sigmoid:                                 # for_mask
        y = jax.nn.sigmoid(y)
    for yy in range(H):                               # static slices: drop 2 pad cols/row
        out_ref[0, yy] = y[yy * Wp:yy * Wp + W, :]


def upsample_block(x_nchw, w, gamma, beta, *, for_mask=False, eps=1e-5):
    """Forward of UpsampleBlock. `w` has PyTorch ConvTranspose2d layout (Cin, Cout, 4, 4)."""
    N, Ci, H, W = x_nchw.shape
    Co = w.shape[1]
    Hp, Wp = H + 2, W + 2
    n_rows = H * Wp                                   # Wp-strided rows per image
    Lp = Hp * Wp + 2                                  # keeps the largest shift in-bounds
    C4 = 4 * Co                                       # 4 parities folded into lanes

    # ---- one bf16 flattened padded copy of x (single upfront cast, no im2col) ----
    x = jnp.transpose(x_nchw, (0, 2, 3, 1))                               # NHWC
    xp = jnp.pad(x, ((0, 0), (1, 1), (1, 1), (0, 0)))                     # zero pad by 1
    xflat = jnp.pad(xp.reshape(N, Hp * Wp, Ci),
                    ((0, 0), (0, Lp - Hp * Wp), (0, 0))).astype(jnp.bfloat16)

    # ---- block-sparse RHS: rows = 9 shifts x Ci, cols = 4 parities x Co ----
    wb = jnp.zeros((9, Ci, 4, Co), jnp.float32)
    for ry in range(2):
        for rx in range(2):
            p = 2 * ry + rx
            for dy in range(2):
                for dx in range(2):
                    s = (ry + dy) * 3 + (rx + dx)
                    wb = wb.at[s, :, p, :].set(
                        w[:, :, 3 - 2 * dy - ry, 3 - 2 * dx - rx].astype(jnp.float32))
    wbig = wb.reshape(9 * Ci, C4).astype(jnp.bfloat16)

    # validity mask for the Wp-strided row layout (drops the 2 pad columns per row)
    col = jnp.arange(n_rows, dtype=jnp.int32) % Wp
    mask = (col < W).astype(jnp.float32).reshape(n_rows, 1)

    # ---- kernel 1: fused conv-transpose (one matmul / image) + BN partial stats ----
    conv, stats = pl.pallas_call(
        functools.partial(_convt_stats_kernel, n_rows=n_rows, Wp=Wp),
        out_shape=(jax.ShapeDtypeStruct((N, n_rows, C4), jnp.bfloat16),
                   jax.ShapeDtypeStruct((N, 2, C4), jnp.float32)),
        grid=(N,),
        in_specs=[pl.BlockSpec((1, Lp, Ci), lambda n: (n, 0, 0)),
                  pl.BlockSpec((9 * Ci, C4), lambda n: (0, 0)),
                  pl.BlockSpec((n_rows, 1), lambda n: (0, 0))],
        out_specs=(pl.BlockSpec((1, n_rows, C4), lambda n: (n, 0, 0)),
                   pl.BlockSpec((1, 2, C4), lambda n: (n, 0, 0))),
        scratch_shapes=[pltpu.VMEM((n_rows, 9 * Ci), jnp.bfloat16)],
        compiler_params=pltpu.CompilerParams(
            dimension_semantics=("parallel",)),       # per-image stats -> no carry
    )(xflat, wbig, mask)

    # ---- tiny XLA merge of per-image stats (stable within/between decomposition) ----
    nb = float(4 * H * W)                             # valid elements / channel / image
    sum_i = stats[:, 0, :].reshape(N, 4, Co).sum(axis=1)          # (N, Co)
    sq_i = stats[:, 1, :].reshape(N, 4, Co).sum(axis=1)           # (N, Co)
    mean_i = sum_i / nb
    m2_i = jnp.maximum(sq_i - nb * mean_i * mean_i, 0.0)
    mean = jnp.mean(mean_i, axis=0)                               # (Co,)
    m2 = jnp.sum(m2_i, axis=0) + nb * jnp.sum((mean_i - mean[None, :]) ** 2, axis=0)
    var = m2 / (N * nb)                               # biased variance (BN training mode)
    scale = gamma.astype(jnp.float32) * lax.rsqrt(var + eps)
    shift = beta.astype(jnp.float32) - mean * scale
    scale4 = jnp.tile(scale, 4).reshape(1, C4)        # lane order: (parity, channel)
    shift4 = jnp.tile(shift, 4).reshape(1, C4)

    # ---- kernel 2: BN apply + ReLU (+ sigmoid), whole-image blocks, junk dropped ----
    out = pl.pallas_call(
        functools.partial(_bn_relu_kernel, H=H, W=W, Wp=Wp, apply_sigmoid=for_mask),
        out_shape=jax.ShapeDtypeStruct((N, H, W, C4), jnp.float32),
        grid=(N,),
        in_specs=[pl.BlockSpec((1, n_rows, C4), lambda n: (n, 0, 0)),
                  pl.BlockSpec((1, C4), lambda n: (0, 0)),
                  pl.BlockSpec((1, C4), lambda n: (0, 0))],
        out_specs=pl.BlockSpec((1, H, W, C4), lambda n: (n, 0, 0, 0)),
        compiler_params=pltpu.CompilerParams(
            dimension_semantics=("parallel",)),
    )(conv, scale4, shift4)

    # ---- single real-data-only layout pass: sub-pixel scatter + NHWC->NCHW ----
    out = out.reshape(N, H, W, 2, 2, Co)              # (n, y, x, ry, rx, co)
    return out.transpose(0, 5, 1, 3, 2, 4).reshape(N, Co, 2 * H, 2 * W)


def _reference(x, w, gamma, beta, for_mask, eps=1e-5):
    # Pure-JAX reference (ConvTranspose2d == dilated conv with flipped, transposed
    # kernel), using the same bf16-rounded matmul operands as the kernel.
    xq = x.astype(jnp.bfloat16).astype(jnp.float32)
    wq = w.astype(jnp.bfloat16).astype(jnp.float32)
    wf = jnp.transpose(wq[:, :, ::-1, ::-1], (1, 0, 2, 3))            # (Co, Ci, 4, 4)
    conv = lax.conv_general_dilated(
        xq, wf, window_strides=(1, 1), padding=((2, 2), (2, 2)),
        lhs_dilation=(2, 2), dimension_numbers=("NCHW", "OIHW", "NCHW"),
        precision=lax.Precision.HIGHEST)
    mean = conv.mean(axis=(0, 2, 3), keepdims=True)
    var = conv.var(axis=(0, 2, 3), keepdims=True)                     # biased (training)
    out = (conv - mean) * lax.rsqrt(var + eps) * gamma.reshape(1, -1, 1, 1) \
          + beta.reshape(1, -1, 1, 1)
    out = jnp.maximum(out, 0.0)
    if for_mask:
        out = jax.nn.sigmoid(out)
    return out


if __name__ == "__main__":
    key = jax.random.PRNGKey(0)
    k1, k2, k3, k4 = jax.random.split(key, 4)

    N, Ci, Co, H, W = 2, 4, 8, 16, 16                                 # output: (2, 8, 32, 32)
    x = jax.random.normal(k1, (N, Ci, H, W), jnp.float32)
    w = jax.random.normal(k2, (Ci, Co, 4, 4), jnp.float32) * 0.1      # ConvTranspose2d (in,out,kh,kw)
    gamma = 1.0 + 0.1 * jax.random.normal(k3, (Co,), jnp.float32)
    beta = 0.1 * jax.random.normal(k4, (Co,), jnp.float32)

    ok = True
    for for_mask in (False, True):
        out = jax.block_until_ready(
            upsample_block(x, w, gamma, beta, for_mask=for_mask))
        ref = _reference(x, w, gamma, beta, for_mask)
        # Tolerance reflects the bf16 conv intermediate (kernel 2 normalizes
        # bf16-rounded conv values against f32-accumulated batch statistics).
        if not jnp.allclose(out, ref, atol=3e-3, rtol=3e-3):
            ok = False
            print("MISMATCH for_mask=%s max_abs_err=%g"
                  % (for_mask, float(jnp.max(jnp.abs(out - ref)))))
    assert ok
    print("KERNEL_OK")
</pallas_src>

<mosaic_0001>
module attributes {stable_mosaic.version = 11 : i64} {
  func.func @_convt_stats_kernel(%arg0: i32, %arg1: memref<1x326x4xbf16, #tpu.memory_space<vmem>>, %arg2: memref<36x32xbf16, #tpu.memory_space<vmem>>, %arg3: memref<288x1xf32, #tpu.memory_space<vmem>>, %arg4: memref<1x288x32xbf16, #tpu.memory_space<vmem>>, %arg5: memref<1x2x32xf32, #tpu.memory_space<vmem>>, %arg6: memref<288x36xbf16, #tpu.memory_space<vmem>>) attributes {dimension_semantics = [#tpu.dimension_semantics<parallel>], iteration_bounds = array<i64: 2>, scalar_prefetch = 0 : i64, scratch_operands = 1 : i64, tpu.core_type = #tpu.core_type<tc>, window_params = [{transform_indices = @transform_0, window_bounds = array<i64: 1, 326, 4>}, {pipeline_mode = #tpu.pipeline_mode<synchronous>, transform_indices = @transform_1, window_bounds = array<i64: 36, 32>}, {pipeline_mode = #tpu.pipeline_mode<synchronous>, transform_indices = @transform_2, window_bounds = array<i64: 288, 1>}, {transform_indices = @transform_3, window_bounds = array<i64: 1, 288, 32>}, {transform_indices = @transform_4, window_bounds = array<i64: 1, 2, 32>}]} {
    %c0 = arith.constant 0 : index
    %c0_0 = arith.constant 0 : index
    %c0_1 = arith.constant 0 : index
    %0 = vector.load %arg1[%c0, %c0_0, %c0_1] : memref<1x326x4xbf16, #tpu.memory_space<vmem>>, vector<1x288x4xbf16>
    %1 = vector.shape_cast %0 : vector<1x288x4xbf16> to vector<288x4xbf16>
    %c0_2 = arith.constant 0 : index
    %c0_3 = arith.constant 0 : index
    %2 = vector.load %arg6[%c0_2, %c0_3] : memref<288x36xbf16, #tpu.memory_space<vmem>>, vector<288x4xbf16>
    tpu.vector_store %arg6[%c0_2, %c0_3], %1 {strides = array<i32>} : memref<288x36xbf16, #tpu.memory_space<vmem>>, vector<288x4xbf16>,
    %c0_4 = arith.constant 0 : index
    %c1 = arith.constant 1 : index
    %c0_5 = arith.constant 0 : index
    %3 = vector.load %arg1[%c0_4, %c1, %c0_5] : memref<1x326x4xbf16, #tpu.memory_space<vmem>>, vector<1x288x4xbf16>
    %4 = vector.shape_cast %3 : vector<1x288x4xbf16> to vector<288x4xbf16>
    %c0_6 = arith.constant 0 : index
    %c4 = arith.constant 4 : index
    %5 = vector.load %arg6[%c0_6, %c4] : memref<288x36xbf16, #tpu.memory_space<vmem>>, vector<288x4xbf16>
    tpu.vector_store %arg6[%c0_6, %c4], %4 {strides = array<i32>} : memref<288x36xbf16, #tpu.memory_space<vmem>>, vector<288x4xbf16>,
    %c0_7 = arith.constant 0 : index
    %c2 = arith.constant 2 : index
    %c0_8 = arith.constant 0 : index
    %6 = vector.load %arg1[%c0_7, %c2, %c0_8] : memref<1x326x4xbf16, #tpu.memory_space<vmem>>, vector<1x288x4xbf16>
    %7 = vector.shape_cast %6 : vector<1x288x4xbf16> to vector<288x4xbf16>
    %c0_9 = arith.constant 0 : index
    %c8 = arith.constant 8 : index
    %8 = vector.load %arg6[%c0_9, %c8] : memref<288x36xbf16, #tpu.memory_space<vmem>>, vector<288x4xbf16>
    tpu.vector_store %arg6[%c0_9, %c8], %7 {strides = array<i32>} : memref<288x36xbf16, #tpu.memory_space<vmem>>, vector<288x4xbf16>,
    %c0_10 = arith.constant 0 : index
    %c18 = arith.constant 18 : index
    %c0_11 = arith.constant 0 : index
    %9 = vector.load %arg1[%c0_10, %c18, %c0_11] : memref<1x326x4xbf16, #tpu.memory_space<vmem>>, vector<1x288x4xbf16>
    %10 = vector.shape_cast %9 : vector<1x288x4xbf16> to vector<288x4xbf16>
    %c0_12 = arith.constant 0 : index
    %c12 = arith.constant 12 : index
    %11 = vector.load %arg6[%c0_12, %c12] : memref<288x36xbf16, #tpu.memory_space<vmem>>, vector<288x4xbf16>
    tpu.vector_store %arg6[%c0_12, %c12], %10 {strides = array<i32>} : memref<288x36xbf16, #tpu.memory_space<vmem>>, vector<288x4xbf16>,
    %c0_13 = arith.constant 0 : index
    %c19 = arith.constant 19 : index
    %c0_14 = arith.constant 0 : index
    %12 = vector.load %arg1[%c0_13, %c19, %c0_14] : memref<1x326x4xbf16, #tpu.memory_space<vmem>>, vector<1x288x4xbf16>
    %13 = vector.shape_cast %12 : vector<1x288x4xbf16> to vector<288x4xbf16>
    %c0_15 = arith.constant 0 : index
    %c16 = arith.constant 16 : index
    %14 = vector.load %arg6[%c0_15, %c16] : memref<288x36xbf16, #tpu.memory_space<vmem>>, vector<288x4xbf16>
    tpu.vector_store %arg6[%c0_15, %c16], %13 {strides = array<i32>} : memref<288x36xbf16, #tpu.memory_space<vmem>>, vector<288x4xbf16>,
    %c0_16 = arith.constant 0 : index
    %c20 = arith.constant 20 : index
    %c0_17 = arith.constant 0 : index
    %15 = vector.load %arg1[%c0_16, %c20, %c0_17] : memref<1x326x4xbf16, #tpu.memory_space<vmem>>, vector<1x288x4xbf16>
    %16 = vector.shape_cast %15 : vector<1x288x4xbf16> to vector<288x4xbf16>
    %c0_18 = arith.constant 0 : index
    %c20_19 = arith.constant 20 : index
    %17 = vector.load %arg6[%c0_18, %c20_19] : memref<288x36xbf16, #tpu.memory_space<vmem>>, vector<288x4xbf16>
    tpu.vector_store %arg6[%c0_18, %c20_19], %16 {strides = array<i32>} : memref<288x36xbf16, #tpu.memory_space<vmem>>, vector<288x4xbf16>,
    %c0_20 = arith.constant 0 : index
    %c36 = arith.constant 36 : index
    %c0_21 = arith.constant 0 : index
    %18 = vector.load %arg1[%c0_20, %c36, %c0_21] : memref<1x326x4xbf16, #tpu.memory_space<vmem>>, vector<1x288x4xbf16>
    %19 = vector.shape_cast %18 : vector<1x288x4xbf16> to vector<288x4xbf16>
    %c0_22 = arith.constant 0 : index
    %c24 = arith.constant 24 : index
    %20 = vector.load %arg6[%c0_22, %c24] : memref<288x36xbf16, #tpu.memory_space<vmem>>, vector<288x4xbf16>
    tpu.vector_store %arg6[%c0_22, %c24], %19 {strides = array<i32>} : memref<288x36xbf16, #tpu.memory_space<vmem>>, vector<288x4xbf16>,
    %c0_23 = arith.constant 0 : index
    %c37 = arith.constant 37 : index
    %c0_24 = arith.constant 0 : index
    %21 = vector.load %arg1[%c0_23, %c37, %c0_24] : memref<1x326x4xbf16, #tpu.memory_space<vmem>>, vector<1x288x4xbf16>
    %22 = vector.shape_cast %21 : vector<1x288x4xbf16> to vector<288x4xbf16>
    %c0_25 = arith.constant 0 : index
    %c28 = arith.constant 28 : index
    %23 = vector.load %arg6[%c0_25, %c28] : memref<288x36xbf16, #tpu.memory_space<vmem>>, vector<288x4xbf16>
    tpu.vector_store %arg6[%c0_25, %c28], %22 {strides = array<i32>} : memref<288x36xbf16, #tpu.memory_space<vmem>>, vector<288x4xbf16>,
    %c0_26 = arith.constant 0 : index
    %c38 = arith.constant 38 : index
    %c0_27 = arith.constant 0 : index
    %24 = vector.load %arg1[%c0_26, %c38, %c0_27] : memref<1x326x4xbf16, #tpu.memory_space<vmem>>, vector<1x288x4xbf16>
    %25 = vector.shape_cast %24 : vector<1x288x4xbf16> to vector<288x4xbf16>
    %c0_28 = arith.constant 0 : index
    %c32 = arith.constant 32 : index
    %26 = vector.load %arg6[%c0_28, %c32] : memref<288x36xbf16, #tpu.memory_space<vmem>>, vector<288x4xbf16>
    tpu.vector_store %arg6[%c0_28, %c32], %25 {strides = array<i32>} : memref<288x36xbf16, #tpu.memory_space<vmem>>, vector<288x4xbf16>,
    %c0_29 = arith.constant 0 : index
    %c0_30 = arith.constant 0 : index
    %27 = vector.load %arg6[%c0_29, %c0_30] : memref<288x36xbf16, #tpu.memory_space<vmem>>, vector<288x36xbf16>
    %c0_31 = arith.constant 0 : index
    %c0_32 = arith.constant 0 : index
    %28 = vector.load %arg2[%c0_31, %c0_32] : memref<36x32xbf16, #tpu.memory_space<vmem>>, vector<36x32xbf16>
    %cst = arith.constant dense<0.000000e+00> : vector<288x32xf32>
    %29 = tpu.matmul %27, %28, %cst {dimension_numbers = #tpu.dot_dimension_numbers<[1], [0], [0], [1], [0, 0, 1, 1], [], []>} : vector<288x36xbf16>, vector<36x32xbf16>, vector<288x32xf32> -> vector<288x32xf32>
    %c0_33 = arith.constant 0 : index
    %c0_34 = arith.constant 0 : index
    %30 = vector.load %arg3[%c0_33, %c0_34] : memref<288x1xf32, #tpu.memory_space<vmem>>, vector<288x1xf32>
    %31 = vector.broadcast %30 : vector<288x1xf32> to vector<288x32xf32>
    %32 = arith.mulf %29, %31 : vector<288x32xf32>
    %cst_35 = arith.constant dense<0.000000e+00> : vector<32xf32>
    %33 = vector.multi_reduction <add>, %32, %cst_35 [0] : vector<288x32xf32> to vector<32xf32>
    %34 = vector.shape_cast %33 : vector<32xf32> to vector<1x32xf32>
    %c0_36 = arith.constant 0 : index
    %c0_37 = arith.constant 0 : index
    %c0_38 = arith.constant 0 : index
    %35 = vector.load %arg5[%c0_36, %c0_37, %c0_38] : memref<1x2x32xf32, #tpu.memory_space<vmem>>, vector<1x1x32xf32>
    %36 = vector.shape_cast %35 : vector<1x1x32xf32> to vector<1x32xf32>
    %37 = vector.shape_cast %34 : vector<1x32xf32> to vector<1x1x32xf32>
    tpu.vector_store %arg5[%c0_36, %c0_37, %c0_38], %37 {strides = array<i32>} : memref<1x2x32xf32, #tpu.memory_space<vmem>>, vector<1x1x32xf32>,
    %38 = arith.mulf %32, %29 : vector<288x32xf32>
    %cst_39 = arith.constant dense<0.000000e+00> : vector<32xf32>
    %39 = vector.multi_reduction <add>, %38, %cst_39 [0] : vector<288x32xf32> to vector<32xf32>
    %40 = vector.shape_cast %39 : vector<32xf32> to vector<1x32xf32>
    %c0_40 = arith.constant 0 : index
    %c1_41 = arith.constant 1 : index
    %c0_42 = arith.constant 0 : index
    %41 = vector.load %arg5[%c0_40, %c1_41, %c0_42] : memref<1x2x32xf32, #tpu.memory_space<vmem>>, vector<1x1x32xf32>
    %42 = vector.shape_cast %41 : vector<1x1x32xf32> to vector<1x32xf32>
    %43 = vector.shape_cast %40 : vector<1x32xf32> to vector<1x1x32xf32>
    tpu.vector_store %arg5[%c0_40, %c1_41, %c0_42], %43 {strides = array<i32>} : memref<1x2x32xf32, #tpu.memory_space<vmem>>, vector<1x1x32xf32>,
    %44 = arith.truncf %29 : vector<288x32xf32> to vector<288x32xbf16>
    %c0_43 = arith.constant 0 : index
    %c0_44 = arith.constant 0 : index
    %c0_45 = arith.constant 0 : index
    %45 = vector.load %arg4[%c0_43, %c0_44, %c0_45] : memref<1x288x32xbf16, #tpu.memory_space<vmem>>, vector<1x288x32xbf16>
    %46 = vector.shape_cast %45 : vector<1x288x32xbf16> to vector<288x32xbf16>
    %47 = vector.shape_cast %44 : vector<288x32xbf16> to vector<1x288x32xbf16>
    tpu.vector_store %arg4[%c0_43, %c0_44, %c0_45], %47 {strides = array<i32>} : memref<1x288x32xbf16, #tpu.memory_space<vmem>>, vector<1x288x32xbf16>,
    return
  }
  func.func @transform_0(%arg0: i32) -> (i32, i32, i32) {
    %c0_i32 = arith.constant 0 : i32
    %c0_i32_0 = arith.constant 0 : i32
    %c0_i32_1 = arith.constant 0 : i32
    return %arg0, %c0_i32, %c0_i32_0 : i32, i32, i32
  }
  func.func @transform_1(%arg0: i32) -> (i32, i32) {
    %c0_i32 = arith.constant 0 : i32
    %c0_i32_0 = arith.constant 0 : i32
    %c0_i32_1 = arith.constant 0 : i32
    return %c0_i32, %c0_i32_0 : i32, i32
  }
  func.func @transform_2(%arg0: i32) -> (i32, i32) {
    %c0_i32 = arith.constant 0 : i32
    %c0_i32_0 = arith.constant 0 : i32
    %c0_i32_1 = arith.constant 0 : i32
    return %c0_i32, %c0_i32_0 : i32, i32
  }
  func.func @transform_3(%arg0: i32) -> (i32, i32, i32) {
    %c0_i32 = arith.constant 0 : i32
    %c0_i32_0 = arith.constant 0 : i32
    %c0_i32_1 = arith.constant 0 : i32
    return %arg0, %c0_i32, %c0_i32_0 : i32, i32, i32
  }
  func.func @transform_4(%arg0: i32) -> (i32, i32, i32) {
    %c0_i32 = arith.constant 0 : i32
    %c0_i32_0 = arith.constant 0 : i32
    %c0_i32_1 = arith.constant 0 : i32
    return %arg0, %c0_i32, %c0_i32_0 : i32, i32, i32
  }
}

</mosaic_0001>

<llo_original>
// kernel: tpu_custom_call.1
$region0: #{tpu_custom_call.1}
  #allocation0 [shape = 'u32[]', space=smem, size = 0x4, offset = 0x4, fixed_abs, tag = 'smem constant byte address 0x4 - core index']
  #allocation1 [shape = 'u32[144,128]{1,0:T(1,128)}', space=vmem, size = 0x12000, scoped, tag = 'internal scratch']
  #allocation2 [shape = 'bf16[288,36]{1,0:T(16,128)(2,1)}', space=vmem, size = 0x12000, scoped, tag = 'scratch operand']
  %s0 = inlined_call_operand.vmem [shape: bf16[2,326,4], index: 0, kind: input, shape index: {}]
  %s1 = inlined_call_operand.vmem [shape: bf16[36,32], index: 1, kind: input, shape index: {}]
  %s2 = inlined_call_operand.vmem [shape: f32[288,1], index: 2, kind: input, shape index: {}]
  %s3 = inlined_call_operand.vmem [shape: bf16[2,288,32], index: 3, kind: output, shape index: {0}]
  %s4 = inlined_call_operand.hbm [shape: f32[2,2,32], index: 4, kind: output, shape index: {1}]
  %5 = xla_tuple %s3, %s4
  %s6 = sld [smem:[#allocation0]]
  $region53: #{tpu_custom_call.1} parent=0
    _
  %s8 = ssub.s32 1, %s6
  %s9 = scalar_select 0, %s8, %s6
  $region1: #{tpu_custom_call.1} parent=0
    #allocation3 [shape = 'u8[2048]{0}', space=vmem, size = 0x800, scoped, tag = 'output window, operand 1']
    #allocation4 [shape = 's32[2]{0}', space=sflag, size = 0x8, scoped, tag = 'scoped memory for tpu_custom_call.1']
    %10 = vsyncpa [#allocation4], 0
    %s11 = scalar_lea.sflag [#allocation4], 1
    %12 = vsyncpa %s11, 0
    loop: start=0, step=1, limit=4
    $region2: #{tpu_custom_call.1} parent=1 // loop_pre_header
      _
    $region3: #{tpu_custom_call.1} parent=1 // loop_header
      %s14 = sphi 0, %s18
      %p15 = scmp.ge.s32.totalorder %s14, 4
      %s24 = sphi 0, %s26
      %s27 = sphi 0, %s24
      %s28 = sphi 0, %s27
      %s44 = sphi 0, %s28
      %s48 = sphi 0, %s48
      %s50 = sphi 0, %s48
      %s51 = sphi 0, %s50
      %s65 = sphi 0, %s51
      %s69 = sphi 0, %s69
      %s71 = sphi 0, %s69
      %s72 = sphi 0, %s71
      %s86 = sphi 0, %s72
      %s92 = sphi 0, %s94
      %s95 = sphi 0, %s92
      %s96 = sphi 0, %s95
      %s112 = sphi 0, %s96
      %s118 = sphi 0, %s120
      %s121 = sphi 0, %s118
      %s122 = sphi 0, %s121
      %s138 = sphi 0, %s122
    $region4: #{tpu_custom_call.1} parent=1 // loop_header_branch
      %17 = sbr.rel (%p15) target = $region8
    $region5: #{tpu_custom_call.1} parent=1 // loop_body
      %s19 = ssub.s32 %s14, 1
      %s20 = ssub.s32 %s14, 2
      %s21 = sadd.s32 %s14, 1
      %s22 = ssub.s32 %s14, %s21
      %p23 = scmp.eq.s32.totalorder %s22, 0
      %s25 = sadd.s32 %s24, 1
      %s26 = scalar_select %p23, %s24, %s25
      %p29 = pneg %p23
      %p30 = scmp.eq.s32.totalorder %s14, 1
      %p31 = por %p29, %p30
      %p32 = scmp.ne.s32.totalorder %s24, %s27
      %p33 = scmp.eq.s32.totalorder %s14, 0
      %p34 = por %p32, %p33
      %p35 = scmp.ne.s32.totalorder %s24, %s27
      %p36 = scmp.eq.s32.totalorder %s19, 1
      %p37 = por %p35, %p36
      %p38 = scmp.ne.s32.totalorder %s27, %s28
      %p39 = scmp.eq.s32.totalorder %s19, 0
      %p40 = por %p38, %p39
      %p41 = scmp.ne.s32.totalorder %s27, %s28
      %p42 = scmp.eq.s32.totalorder %s20, 1
      %p43 = por %p41, %p42
      %p45 = scmp.ne.s32.totalorder %s28, %s44
      %p46 = scmp.eq.s32.totalorder %s20, 0
      %p47 = por %p45, %p46
      %s49 = sadd.s32 %s48, 1
      %p52 = scmp.eq.s32.totalorder %s14, 1
      %p53 = scmp.ne.s32.totalorder %s48, %s50
      %p54 = scmp.eq.s32.totalorder %s14, 0
      %p55 = por %p53, %p54
      %p56 = scmp.ne.s32.totalorder %s48, %s50
      %p57 = scmp.eq.s32.totalorder %s19, 1
      %p58 = por %p56, %p57
      %p59 = scmp.ne.s32.totalorder %s50, %s51
      %p60 = scmp.eq.s32.totalorder %s19, 0
      %p61 = por %p59, %p60
      %p62 = scmp.ne.s32.totalorder %s50, %s51
      %p63 = scmp.eq.s32.totalorder %s20, 1
      %p64 = por %p62, %p63
      %p66 = scmp.ne.s32.totalorder %s51, %s65
      %p67 = scmp.eq.s32.totalorder %s20, 0
      %p68 = por %p66, %p67
      %s70 = sadd.s32 %s69, 1
      %p73 = scmp.eq.s32.totalorder %s14, 1
      %p74 = scmp.ne.s32.totalorder %s69, %s71
      %p75 = scmp.eq.s32.totalorder %s14, 0
      %p76 = por %p74, %p75
      %p77 = scmp.ne.s32.totalorder %s69, %s71
      %p78 = scmp.eq.s32.totalorder %s19, 1
      %p79 = por %p77, %p78
      %p80 = scmp.ne.s32.totalorder %s71, %s72
      %p81 = scmp.eq.s32.totalorder %s19, 0
      %p82 = por %p80, %p81
      %p83 = scmp.ne.s32.totalorder %s71, %s72
      %p84 = scmp.eq.s32.totalorder %s20, 1
      %p85 = por %p83, %p84
      %p87 = scmp.ne.s32.totalorder %s72, %s86
      %p88 = scmp.eq.s32.totalorder %s20, 0
      %p89 = por %p87, %p88
      %s90 = ssub.s32 %s14, %s21
      %p91 = scmp.eq.s32.totalorder %s90, 0
      %s93 = sadd.s32 %s92, 1
      %s94 = scalar_select %p91, %s92, %s93
      %p97 = pneg %p91
      %p98 = scmp.eq.s32.totalorder %s14, 1
      %p99 = por %p97, %p98
      %p100 = scmp.ne.s32.totalorder %s92, %s95
      %p101 = scmp.eq.s32.totalorder %s14, 0
      %p102 = por %p100, %p101
      %p103 = scmp.ne.s32.totalorder %s92, %s95
      %p104 = scmp.eq.s32.totalorder %s19, 1
      %p105 = por %p103, %p104
      %p106 = scmp.ne.s32.totalorder %s95, %s96
      %p107 = scmp.eq.s32.totalorder %s19, 0
      %p108 = por %p106, %p107
      %p109 = scmp.ne.s32.totalorder %s95, %s96
      %p110 = scmp.eq.s32.totalorder %s20, 1
      %p111 = por %p109, %p110
      %p113 = scmp.ne.s32.totalorder %s96, %s112
      %p114 = scmp.eq.s32.totalorder %s20, 0
      %p115 = por %p113, %p114
      %s116 = ssub.s32 %s14, %s21
      %p117 = scmp.eq.s32.totalorder %s116, 0
      %s119 = sadd.s32 %s118, 1
      %s120 = scalar_select %p117, %s118, %s119
      %p123 = pneg %p117
      %p124 = scmp.eq.s32.totalorder %s14, 1
      %p125 = por %p123, %p124
      %p126 = scmp.ne.s32.totalorder %s118, %s121
      %p127 = scmp.eq.s32.totalorder %s14, 0
      %p128 = por %p126, %p127
      %p129 = scmp.ne.s32.totalorder %s118, %s121
      %p130 = scmp.eq.s32.totalorder %s19, 1
      %p131 = por %p129, %p130
      %p132 = scmp.ne.s32.totalorder %s121, %s122
      %p133 = scmp.eq.s32.totalorder %s19, 0
      %p134 = por %p132, %p133
      %p135 = scmp.ne.s32.totalorder %s121, %s122
      %p136 = scmp.eq.s32.totalorder %s20, 1
      %p137 = por %p135, %p136
      %p139 = scmp.ne.s32.totalorder %s122, %s138
      %p140 = scmp.eq.s32.totalorder %s20, 0
      %p141 = por %p139, %p140
      %p142 = scmp.le.s32.totalorder 1, %s14
      %p143 = scmp.lt.s32.totalorder %s14, 3
      %p144 = pnand %p142, %p143
      %p145 = pneg %p144
      // Predicated region
      $region9: #{tpu_custom_call.1} parent=5 // pred_check
        _
      $region10: #{tpu_custom_call.1} parent=5 // pred_check_branch
        %147 = sbr.rel (%p144) target = $region12
      $region11: #{tpu_custom_call.1} parent=5 // pred_region
        %s148 = ssub.s32 %s14, 1
        // Predicated region
        $region13: #{tpu_custom_call.1} parent=11 // pred_check
          %p149 = pneg %p61
        $region14: #{tpu_custom_call.1} parent=11 // pred_check_branch
          %151 = sbr.rel (%p149) target = $region16
        $region15: #{tpu_custom_call.1} parent=11 // pred_region
          _
        $region16: #{tpu_custom_call.1} parent=11 // pred_fallthru
          _
        // Predicated region
        $region17: #{tpu_custom_call.1} parent=11 // pred_check
          %p152 = pneg %p82
        $region18: #{tpu_custom_call.1} parent=11 // pred_check_branch
          %154 = sbr.rel (%p152) target = $region20
        $region19: #{tpu_custom_call.1} parent=11 // pred_region
          _
        $region20: #{tpu_custom_call.1} parent=11 // pred_fallthru
          _
      $region12: #{tpu_custom_call.1} parent=5 // pred_fallthru
        _
      %p155 = scmp.lt.s32.totalorder %s14, 2
      // Predicated region
      $region21: #{tpu_custom_call.1} parent=5 // pred_check
        %p156 = pneg %p155
      $region22: #{tpu_custom_call.1} parent=5 // pred_check_branch
        %158 = sbr.rel (%p156) target = $region24
      $region23: #{tpu_custom_call.1} parent=5 // pred_region
        // Predicated region
        $region25: #{tpu_custom_call.1} parent=23 // pred_check
          %p159 = pneg %p34
        $region26: #{tpu_custom_call.1} parent=23 // pred_check_branch
          %161 = sbr.rel (%p159) target = $region28
        $region27: #{tpu_custom_call.1} parent=23 // pred_region
          %p162 = scmp.lt.s32.totalorder %s14, 1
          %s163 = scalar_select %p162, %s14, 1
          %s164 = smul.addr %s163, 41
          %s165 = smul.addr %s164, 4
          %s166 = scalar_lea.vmem %s0, %s165
        $region28: #{tpu_custom_call.1} parent=23 // pred_fallthru
          _
      $region24: #{tpu_custom_call.1} parent=5 // pred_fallthru
        _
      %p167 = scmp.le.s32.totalorder 1, %s14
      %p168 = scmp.lt.s32.totalorder %s14, 3
      %p169 = pnand %p167, %p168
      %p170 = pneg %p169
      // Predicated region
      $region29: #{tpu_custom_call.1} parent=5 // pred_check
        _
      $region30: #{tpu_custom_call.1} parent=5 // pred_check_branch
        %172 = sbr.rel (%p169) target = $region32
      $region31: #{tpu_custom_call.1} parent=5 // pred_region
        %s173 = ssub.s32 %s14, 1
        %p174 = scmp.lt.s32.totalorder %s19, 1
        %s175 = scalar_select %p174, %s19, 1
        %s176 = smul.addr %s175, 41
        %s177 = smul.addr %s176, 4
        %s178 = scalar_lea.vmem %s0, %s177
        %p179 = pneg %p40
        %p180 = pneg %p37
        %p181 = pneg %p61
        %p182 = pneg %p58
        %p183 = pneg %p82
        %p184 = pneg %p79
        %p185 = pneg %p108
        %p186 = pneg %p105
        %p187 = scmp.lt.s32.totalorder %s19, 1
        %s188 = scalar_select %p187, %s19, 1
        %s189 = smul.addr %s188, 36
        %s190 = smul.addr %s189, 4
        %s191 = scalar_lea.vmem %s3, %s190
        %p192 = pneg %p134
        %p193 = pneg %p131
        %s194 = sand.u32 %s121, 1
        %s195 = scalar_lea.sflag [#allocation4], %s194
        %s196 = sand.u32 %s121, 1
        %s197 = smul.addr %s196, 2
        %s198 = scalar_lea.vmem [#allocation3], %s197
        %p199 = scmp.lt.s32.totalorder %s19, 1
        %s200 = scalar_select %p199, %s19, 1
        %s201 = smul.addr %s200, 41
        %s202 = smul.addr %s201, 4
        %s203 = scalar_lea.vmem %s0, %s202
        %p204 = scmp.lt.s32.totalorder %s19, 1
        %s205 = scalar_select %p204, %s19, 1
        %s206 = smul.addr %s205, 36
        %s207 = smul.addr %s206, 4
        %s208 = scalar_lea.vmem %s3, %s207
        %v210 = vld [vmem:[%s203] sm:$0xf]
        %v211 = vld [vmem:[%s203 + $0x4] sm:$0xf]
        %v212 = vld [vmem:[%s203 + $0x8] sm:$0xf]
        %v213 = vld [vmem:[%s203 + $0xc] sm:$0xf]
        %v214 = vld [vmem:[%s203 + $0x10] sm:$0xf]
        %v215 = vld [vmem:[%s203 + $0x14] sm:$0xf]
        %v216 = vld [vmem:[%s203 + $0x18] sm:$0xf]
        %v217 = vld [vmem:[%s203 + $0x1c] sm:$0xf]
        %v218 = vld [vmem:[%s203 + $0x20] sm:$0xf]
        %v219 = vld [vmem:[%s203 + $0x24] sm:$0xf]
        %v220 = vld [vmem:[%s203 + $0x28] sm:$0xf]
        %v221 = vld [vmem:[%s203 + $0x2c] sm:$0xf]
        %v222 = vld [vmem:[%s203 + $0x30] sm:$0xf]
        %v223 = vld [vmem:[%s203 + $0x34] sm:$0xf]
        %v224 = vld [vmem:[%s203 + $0x38] sm:$0xf]
        %v225 = vld [vmem:[%s203 + $0x3c] sm:$0xf]
        %v226 = vld [vmem:[%s203 + $0x40] sm:$0xf]
        %v227 = vld [vmem:[%s203 + $0x44] sm:$0xf]
        %v228 = vld [vmem:[%s203 + $0x48] sm:$0xf]
        %v229 = vld [vmem:[%s203 + $0x4c] sm:$0xf]
        %v230 = vld [vmem:[%s203 + $0x50] sm:$0xf]
        %v231 = vld [vmem:[%s203 + $0x54] sm:$0xf]
        %v232 = vld [vmem:[%s203 + $0x58] sm:$0xf]
        %v233 = vld [vmem:[%s203 + $0x5c] sm:$0xf]
        %v234 = vld [vmem:[%s203 + $0x60] sm:$0xf]
        %v235 = vld [vmem:[%s203 + $0x64] sm:$0xf]
        %v236 = vld [vmem:[%s203 + $0x68] sm:$0xf]
        %v237 = vld [vmem:[%s203 + $0x6c] sm:$0xf]
        %v238 = vld [vmem:[%s203 + $0x70] sm:$0xf]
        %v239 = vld [vmem:[%s203 + $0x74] sm:$0xf]
        %v240 = vld [vmem:[%s203 + $0x78] sm:$0xf]
        %v241 = vld [vmem:[%s203 + $0x7c] sm:$0xf]
        %v242 = vld [vmem:[%s203 + $0x80] sm:$0xf]
        %v243 = vld [vmem:[%s203 + $0x84] sm:$0xf]
        %v244 = vld [vmem:[%s203 + $0x88] sm:$0xf]
        %v245 = vld [vmem:[%s203 + $0x8c] sm:$0xf]
        %v282 = vunpack.c.l.b16 %v210
        %v283 = vunpack.c.l.b16 %v211
        %v284 = vunpack.c.l.b16 %v212
        %v285 = vunpack.c.l.b16 %v213
        %v286 = vunpack.c.l.b16 %v214
        %v287 = vunpack.c.l.b16 %v215
        %v288 = vunpack.c.l.b16 %v216
        %v289 = vunpack.c.l.b16 %v217
        %v290 = vunpack.c.l.b16 %v218
        %v291 = vunpack.c.l.b16 %v219
        %v292 = vunpack.c.l.b16 %v220
        %v293 = vunpack.c.l.b16 %v221
        %v294 = vunpack.c.l.b16 %v222
        %v295 = vunpack.c.l.b16 %v223
        %v296 = vunpack.c.l.b16 %v224
        %v297 = vunpack.c.l.b16 %v225
        %v298 = vunpack.c.l.b16 %v226
        %v299 = vunpack.c.l.b16 %v227
        %v300 = vunpack.c.l.b16 %v228
        %v301 = vunpack.c.l.b16 %v229
        %v302 = vunpack.c.l.b16 %v230
        %v303 = vunpack.c.l.b16 %v231
        %v304 = vunpack.c.l.b16 %v232
        %v305 = vunpack.c.l.b16 %v233
        %v306 = vunpack.c.l.b16 %v234
        %v307 = vunpack.c.l.b16 %v235
        %v308 = vunpack.c.l.b16 %v236
        %v309 = vunpack.c.l.b16 %v237
        %v310 = vunpack.c.l.b16 %v238
        %v311 = vunpack.c.l.b16 %v239
        %v312 = vunpack.c.l.b16 %v240
        %v313 = vunpack.c.l.b16 %v241
        %v314 = vunpack.c.l.b16 %v242
        %v315 = vunpack.c.l.b16 %v243
        %v316 = vunpack.c.l.b16 %v244
        %v317 = vunpack.c.l.b16 %v245
        %v318 = vpack.c.b16 %v283, %v282
        %v319 = vpack.c.b16 %v285, %v284
        %v320 = vpack.c.b16 %v287, %v286
        %v321 = vpack.c.b16 %v289, %v288
        %v322 = vpack.c.b16 %v291, %v290
        %v323 = vpack.c.b16 %v293, %v292
        %v324 = vpack.c.b16 %v295, %v294
        %v325 = vpack.c.b16 %v297, %v296
        %v326 = vpack.c.b16 %v299, %v298
        %v327 = vpack.c.b16 %v301, %v300
        %v328 = vpack.c.b16 %v303, %v302
        %v329 = vpack.c.b16 %v305, %v304
        %v330 = vpack.c.b16 %v307, %v306
        %v331 = vpack.c.b16 %v309, %v308
        %v332 = vpack.c.b16 %v311, %v310
        %v333 = vpack.c.b16 %v313, %v312
        %v334 = vpack.c.b16 %v315, %v314
        %v335 = vpack.c.b16 %v317, %v316
        %vm354 = vcmask 31744
        %355 = vst.msk [vmem:[#allocation2] sm:$0xff] %vm354, %v318
        %356 = vst.msk [vmem:[#allocation2 + $0x8] sm:$0xff] %vm354, %v319
        %357 = vst.msk [vmem:[#allocation2 + $0x10] sm:$0xff] %vm354, %v320
        %358 = vst.msk [vmem:[#allocation2 + $0x18] sm:$0xff] %vm354, %v321
        %359 = vst.msk [vmem:[#allocation2 + $0x20] sm:$0xff] %vm354, %v322
        %360 = vst.msk [vmem:[#allocation2 + $0x28] sm:$0xff] %vm354, %v323
        %361 = vst.msk [vmem:[#allocation2 + $0x30] sm:$0xff] %vm354, %v324
        %362 = vst.msk [vmem:[#allocation2 + $0x38] sm:$0xff] %vm354, %v325
        %363 = vst.msk [vmem:[#allocation2 + $0x40] sm:$0xff] %vm354, %v326
        %364 = vst.msk [vmem:[#allocation2 + $0x48] sm:$0xff] %vm354, %v327
        %365 = vst.msk [vmem:[#allocation2 + $0x50] sm:$0xff] %vm354, %v328
        %366 = vst.msk [vmem:[#allocation2 + $0x58] sm:$0xff] %vm354, %v329
        %367 = vst.msk [vmem:[#allocation2 + $0x60] sm:$0xff] %vm354, %v330
        %368 = vst.msk [vmem:[#allocation2 + $0x68] sm:$0xff] %vm354, %v331
        %369 = vst.msk [vmem:[#allocation2 + $0x70] sm:$0xff] %vm354, %v332
        %370 = vst.msk [vmem:[#allocation2 + $0x78] sm:$0xff] %vm354, %v333
        %371 = vst.msk [vmem:[#allocation2 + $0x80] sm:$0xff] %vm354, %v334
        %372 = vst.msk [vmem:[#allocation2 + $0x88] sm:$0xff] %vm354, %v335
        %v373 = vld [vmem:[%s203] sm:$0xf]
        %v374 = vld [vmem:[%s203 + $0x4] sm:$0xf]
        %v375 = vld [vmem:[%s203 + $0x8] sm:$0xf]
        %v376 = vld [vmem:[%s203 + $0xc] sm:$0xf]
        %v377 = vld [vmem:[%s203 + $0x10] sm:$0xf]
        %v378 = vld [vmem:[%s203 + $0x14] sm:$0xf]
        %v379 = vld [vmem:[%s203 + $0x18] sm:$0xf]
        %v380 = vld [vmem:[%s203 + $0x1c] sm:$0xf]
        %v381 = vld [vmem:[%s203 + $0x20] sm:$0xf]
        %v382 = vld [vmem:[%s203 + $0x24] sm:$0xf]
        %v383 = vld [vmem:[%s203 + $0x28] sm:$0xf]
        %v384 = vld [vmem:[%s203 + $0x2c] sm:$0xf]
        %v385 = vld [vmem:[%s203 + $0x30] sm:$0xf]
        %v386 = vld [vmem:[%s203 + $0x34] sm:$0xf]
        %v387 = vld [vmem:[%s203 + $0x38] sm:$0xf]
        %v388 = vld [vmem:[%s203 + $0x3c] sm:$0xf]
        %v389 = vld [vmem:[%s203 + $0x40] sm:$0xf]
        %v390 = vld [vmem:[%s203 + $0x44] sm:$0xf]
        %v391 = vld [vmem:[%s203 + $0x48] sm:$0xf]
        %v392 = vld [vmem:[%s203 + $0x4c] sm:$0xf]
        %v393 = vld [vmem:[%s203 + $0x50] sm:$0xf]
        %v394 = vld [vmem:[%s203 + $0x54] sm:$0xf]
        %v395 = vld [vmem:[%s203 + $0x58] sm:$0xf]
        %v396 = vld [vmem:[%s203 + $0x5c] sm:$0xf]
        %v397 = vld [vmem:[%s203 + $0x60] sm:$0xf]
        %v398 = vld [vmem:[%s203 + $0x64] sm:$0xf]
        %v399 = vld [vmem:[%s203 + $0x68] sm:$0xf]
        %v400 = vld [vmem:[%s203 + $0x6c] sm:$0xf]
        %v401 = vld [vmem:[%s203 + $0x70] sm:$0xf]
        %v402 = vld [vmem:[%s203 + $0x74] sm:$0xf]
        %v403 = vld [vmem:[%s203 + $0x78] sm:$0xf]
        %v404 = vld [vmem:[%s203 + $0x7c] sm:$0xf]
        %v405 = vld [vmem:[%s203 + $0x80] sm:$0xf]
        %v406 = vld [vmem:[%s203 + $0x84] sm:$0xf]
        %v407 = vld [vmem:[%s203 + $0x88] sm:$0xf]
        %v408 = vld [vmem:[%s203 + $0x8c] sm:$0xf]
        %v409 = vld [vmem:[%s203 + $0x90] sm:$0x1]
        %v447 = vunpack.c.l.b16 %v373
        %v448 = vunpack.c.l.b16 %v374
        %v449 = vunpack.c.l.b16 %v375
        %v450 = vunpack.c.l.b16 %v376
        %v451 = vunpack.c.l.b16 %v377
        %v452 = vunpack.c.l.b16 %v378
        %v453 = vunpack.c.l.b16 %v379
        %v454 = vunpack.c.l.b16 %v380
        %v455 = vunpack.c.l.b16 %v381
        %v456 = vunpack.c.l.b16 %v382
        %v457 = vunpack.c.l.b16 %v383
        %v458 = vunpack.c.l.b16 %v384
        %v459 = vunpack.c.l.b16 %v385
        %v460 = vunpack.c.l.b16 %v386
        %v461 = vunpack.c.l.b16 %v387
        %v462 = vunpack.c.l.b16 %v388
        %v463 = vunpack.c.l.b16 %v389
        %v464 = vunpack.c.l.b16 %v390
        %v465 = vunpack.c.l.b16 %v391
        %v466 = vunpack.c.l.b16 %v392
        %v467 = vunpack.c.l.b16 %v393
        %v468 = vunpack.c.l.b16 %v394
        %v469 = vunpack.c.l.b16 %v395
        %v470 = vunpack.c.l.b16 %v396
        %v471 = vunpack.c.l.b16 %v397
        %v472 = vunpack.c.l.b16 %v398
        %v473 = vunpack.c.l.b16 %v399
        %v474 = vunpack.c.l.b16 %v400
        %v475 = vunpack.c.l.b16 %v401
        %v476 = vunpack.c.l.b16 %v402
        %v477 = vunpack.c.l.b16 %v403
        %v478 = vunpack.c.l.b16 %v404
        %v479 = vunpack.c.l.b16 %v405
        %v480 = vunpack.c.l.b16 %v406
        %v481 = vunpack.c.l.b16 %v407
        %v482 = vunpack.c.l.b16 %v408
        %v483 = vunpack.c.l.b16 %v409
        %v484 = vpack.c.b16 %v448, %v447
        %v485 = vpack.c.b16 %v450, %v449
        %v486 = vpack.c.b16 %v452, %v451
        %v487 = vpack.c.b16 %v454, %v453
        %v488 = vpack.c.b16 %v456, %v455
        %v489 = vpack.c.b16 %v458, %v457
        %v490 = vpack.c.b16 %v460, %v459
        %v491 = vpack.c.b16 %v462, %v461
        %v492 = vpack.c.b16 %v464, %v463
        %v493 = vpack.c.b16 %v466, %v465
        %v494 = vpack.c.b16 %v468, %v467
        %v495 = vpack.c.b16 %v470, %v469
        %v496 = vpack.c.b16 %v472, %v471
        %v497 = vpack.c.b16 %v474, %v473
        %v498 = vpack.c.b16 %v476, %v475
        %v499 = vpack.c.b16 %v478, %v477
        %v500 = vpack.c.b16 %v480, %v479
        %v501 = vpack.c.b16 %v482, %v481
        %v502 = vpack.c.b16 %v483, %v483
        %vm503 = vsmask.f32 7424
        %v505 = vshrl.u32 %v484, 16
        %v507 = vshll.u32 %v484, 16
        %v509 = vrot.slane %v507, 1
        %v510 = vor.u32 %v505, %v509
        %v512 = vshll.u32 %v485, 16
        %v514 = vrot.slane %v512, 1
        %v515 = vsel %vm503, %v510, %v514
        %v516 = vshrl.u32 %v485, 16
        %v518 = vor.u32 %v516, %v514
        %v520 = vshll.u32 %v486, 16
        %v522 = vrot.slane %v520, 1
        %v523 = vsel %vm503, %v518, %v522
        %v524 = vshrl.u32 %v486, 16
        %v526 = vor.u32 %v524, %v522
        %v528 = vshll.u32 %v487, 16
        %v530 = vrot.slane %v528, 1
        %v531 = vsel %vm503, %v526, %v530
        %v532 = vshrl.u32 %v487, 16
        %v534 = vor.u32 %v532, %v530
        %v536 = vshll.u32 %v488, 16
        %v538 = vrot.slane %v536, 1
        %v539 = vsel %vm503, %v534, %v538
        %v540 = vshrl.u32 %v488, 16
        %v542 = vor.u32 %v540, %v538
        %v544 = vshll.u32 %v489, 16
        %v546 = vrot.slane %v544, 1
        %v547 = vsel %vm503, %v542, %v546
        %v548 = vshrl.u32 %v489, 16
        %v550 = vor.u32 %v548, %v546
        %v552 = vshll.u32 %v490, 16
        %v554 = vrot.slane %v552, 1
        %v555 = vsel %vm503, %v550, %v554
        %v556 = vshrl.u32 %v490, 16
        %v558 = vor.u32 %v556, %v554
        %v560 = vshll.u32 %v491, 16
        %v562 = vrot.slane %v560, 1
        %v563 = vsel %vm503, %v558, %v562
        %v564 = vshrl.u32 %v491, 16
        %v566 = vor.u32 %v564, %v562
        %v568 = vshll.u32 %v492, 16
        %v570 = vrot.slane %v568, 1
        %v571 = vsel %vm503, %v566, %v570
        %v572 = vshrl.u32 %v492, 16
        %v574 = vor.u32 %v572, %v570
        %v576 = vshll.u32 %v493, 16
        %v578 = vrot.slane %v576, 1
        %v579 = vsel %vm503, %v574, %v578
        %v580 = vshrl.u32 %v493, 16
        %v582 = vor.u32 %v580, %v578
        %v584 = vshll.u32 %v494, 16
        %v586 = vrot.slane %v584, 1
        %v587 = vsel %vm503, %v582, %v586
        %v588 = vshrl.u32 %v494, 16
        %v590 = vor.u32 %v588, %v586
        %v592 = vshll.u32 %v495, 16
        %v594 = vrot.slane %v592, 1
        %v595 = vsel %vm503, %v590, %v594
        %v596 = vshrl.u32 %v495, 16
        %v598 = vor.u32 %v596, %v594
        %v600 = vshll.u32 %v496, 16
        %v602 = vrot.slane %v600, 1
        %v603 = vsel %vm503, %v598, %v602
        %v604 = vshrl.u32 %v496, 16
        %v606 = vor.u32 %v604, %v602
        %v608 = vshll.u32 %v497, 16
        %v610 = vrot.slane %v608, 1
        %v611 = vsel %vm503, %v606, %v610
        %v612 = vshrl.u32 %v497, 16
        %v614 = vor.u32 %v612, %v610
        %v616 = vshll.u32 %v498, 16
        %v618 = vrot.slane %v616, 1
        %v619 = vsel %vm503, %v614, %v618
        %v620 = vshrl.u32 %v498, 16
        %v622 = vor.u32 %v620, %v618
        %v624 = vshll.u32 %v499, 16
        %v626 = vrot.slane %v624, 1
        %v627 = vsel %vm503, %v622, %v626
        %v628 = vshrl.u32 %v499, 16
        %v630 = vor.u32 %v628, %v626
        %v632 = vshll.u32 %v500, 16
        %v634 = vrot.slane %v632, 1
        %v635 = vsel %vm503, %v630, %v634
        %v636 = vshrl.u32 %v500, 16
        %v638 = vor.u32 %v636, %v634
        %v640 = vshll.u32 %v501, 16
        %v642 = vrot.slane %v640, 1
        %v643 = vsel %vm503, %v638, %v642
        %v644 = vshrl.u32 %v501, 16
        %v646 = vor.u32 %v644, %v642
        %v648 = vshll.u32 %v502, 16
        %v650 = vrot.slane %v648, 1
        %v651 = vsel %vm503, %v646, %v650
        %652 = vrot.lane.b32.xlu0 %v515, 4
        %v653 = vpop.permute.xlu0 %652
        %654 = vrot.lane.b32.xlu0 %v523, 4
        %v655 = vpop.permute.xlu0 %654
        %656 = vrot.lane.b32.xlu0 %v531, 4
        %v657 = vpop.permute.xlu0 %656
        %658 = vrot.lane.b32.xlu0 %v539, 4
        %v659 = vpop.permute.xlu0 %658
        %660 = vrot.lane.b32.xlu0 %v547, 4
        %v661 = vpop.permute.xlu0 %660
        %662 = vrot.lane.b32.xlu0 %v555, 4
        %v663 = vpop.permute.xlu0 %662
        %664 = vrot.lane.b32.xlu0 %v563, 4
        %v665 = vpop.permute.xlu0 %664
        %666 = vrot.lane.b32.xlu0 %v571, 4
        %v667 = vpop.permute.xlu0 %666
        %668 = vrot.lane.b32.xlu0 %v579, 4
        %v669 = vpop.permute.xlu0 %668
        %670 = vrot.lane.b32.xlu0 %v587, 4
        %v671 = vpop.permute.xlu0 %670
        %672 = vrot.lane.b32.xlu0 %v595, 4
        %v673 = vpop.permute.xlu0 %672
        %674 = vrot.lane.b32.xlu0 %v603, 4
        %v675 = vpop.permute.xlu0 %674
        %676 = vrot.lane.b32.xlu0 %v611, 4
        %v677 = vpop.permute.xlu0 %676
        %678 = vrot.lane.b32.xlu0 %v619, 4
        %v679 = vpop.permute.xlu0 %678
        %680 = vrot.lane.b32.xlu0 %v627, 4
        %v681 = vpop.permute.xlu0 %680
        %682 = vrot.lane.b32.xlu0 %v635, 4
        %v683 = vpop.permute.xlu0 %682
        %684 = vrot.lane.b32.xlu0 %v643, 4
        %v685 = vpop.permute.xlu0 %684
        %686 = vrot.lane.b32.xlu0 %v651, 4
        %v687 = vpop.permute.xlu0 %686
        %vm706 = vcmask 64544
        %707 = vst.msk [vmem:[#allocation2] sm:$0xff] %vm706, %v653
        %708 = vst.msk [vmem:[#allocation2 + $0x8] sm:$0xff] %vm706, %v655
        %709 = vst.msk [vmem:[#allocation2 + $0x10] sm:$0xff] %vm706, %v657
        %710 = vst.msk [vmem:[#allocation2 + $0x18] sm:$0xff] %vm706, %v659
        %711 = vst.msk [vmem:[#allocation2 + $0x20] sm:$0xff] %vm706, %v661
        %712 = vst.msk [vmem:[#allocation2 + $0x28] sm:$0xff] %vm706, %v663
        %713 = vst.msk [vmem:[#allocation2 + $0x30] sm:$0xff] %vm706, %v665
        %714 = vst.msk [vmem:[#allocation2 + $0x38] sm:$0xff] %vm706, %v667
        %715 = vst.msk [vmem:[#allocation2 + $0x40] sm:$0xff] %vm706, %v669
        %716 = vst.msk [vmem:[#allocation2 + $0x48] sm:$0xff] %vm706, %v671
        %717 = vst.msk [vmem:[#allocation2 + $0x50] sm:$0xff] %vm706, %v673
        %718 = vst.msk [vmem:[#allocation2 + $0x58] sm:$0xff] %vm706, %v675
        %719 = vst.msk [vmem:[#allocation2 + $0x60] sm:$0xff] %vm706, %v677
        %720 = vst.msk [vmem:[#allocation2 + $0x68] sm:$0xff] %vm706, %v679
        %721 = vst.msk [vmem:[#allocation2 + $0x70] sm:$0xff] %vm706, %v681
        %722 = vst.msk [vmem:[#allocation2 + $0x78] sm:$0xff] %vm706, %v683
        %723 = vst.msk [vmem:[#allocation2 + $0x80] sm:$0xff] %vm706, %v685
        %724 = vst.msk [vmem:[#allocation2 + $0x88] sm:$0xff] %vm706, %v687
        %v725 = vld [vmem:[%s203] sm:$0xe]
        %v726 = vld [vmem:[%s203 + $0x4] sm:$0xf]
        %v727 = vld [vmem:[%s203 + $0x8] sm:$0xf]
        %v728 = vld [vmem:[%s203 + $0xc] sm:$0xf]
        %v729 = vld [vmem:[%s203 + $0x10] sm:$0xf]
        %v730 = vld [vmem:[%s203 + $0x14] sm:$0xf]
        %v731 = vld [vmem:[%s203 + $0x18] sm:$0xf]
        %v732 = vld [vmem:[%s203 + $0x1c] sm:$0xf]
        %v733 = vld [vmem:[%s203 + $0x20] sm:$0xf]
        %v734 = vld [vmem:[%s203 + $0x24] sm:$0xf]
        %v735 = vld [vmem:[%s203 + $0x28] sm:$0xf]
        %v736 = vld [vmem:[%s203 + $0x2c] sm:$0xf]
        %v737 = vld [vmem:[%s203 + $0x30] sm:$0xf]
        %v738 = vld [vmem:[%s203 + $0x34] sm:$0xf]
        %v739 = vld [vmem:[%s203 + $0x38] sm:$0xf]
        %v740 = vld [vmem:[%s203 + $0x3c] sm:$0xf]
        %v741 = vld [vmem:[%s203 + $0x40] sm:$0xf]
        %v742 = vld [vmem:[%s203 + $0x44] sm:$0xf]
        %v743 = vld [vmem:[%s203 + $0x48] sm:$0xf]
        %v744 = vld [vmem:[%s203 + $0x4c] sm:$0xf]
        %v745 = vld [vmem:[%s203 + $0x50] sm:$0xf]
        %v746 = vld [vmem:[%s203 + $0x54] sm:$0xf]
        %v747 = vld [vmem:[%s203 + $0x58] sm:$0xf]
        %v748 = vld [vmem:[%s203 + $0x5c] sm:$0xf]
        %v749 = vld [vmem:[%s203 + $0x60] sm:$0xf]
        %v750 = vld [vmem:[%s203 + $0x64] sm:$0xf]
        %v751 = vld [vmem:[%s203 + $0x68] sm:$0xf]
        %v752 = vld [vmem:[%s203 + $0x6c] sm:$0xf]
        %v753 = vld [vmem:[%s203 + $0x70] sm:$0xf]
        %v754 = vld [vmem:[%s203 + $0x74] sm:$0xf]
        %v755 = vld [vmem:[%s203 + $0x78] sm:$0xf]
        %v756 = vld [vmem:[%s203 + $0x7c] sm:$0xf]
        %v757 = vld [vmem:[%s203 + $0x80] sm:$0xf]
        %v758 = vld [vmem:[%s203 + $0x84] sm:$0xf]
        %v759 = vld [vmem:[%s203 + $0x88] sm:$0xf]
        %v760 = vld [vmem:[%s203 + $0x8c] sm:$0xf]
        %v761 = vld [vmem:[%s203 + $0x90] sm:$0x1]
        %v799 = vunpack.c.l.b16 %v725
        %v800 = vunpack.c.l.b16 %v726
        %v801 = vunpack.c.l.b16 %v727
        %v802 = vunpack.c.l.b16 %v728
        %v803 = vunpack.c.l.b16 %v729
        %v804 = vunpack.c.l.b16 %v730
        %v805 = vunpack.c.l.b16 %v731
        %v806 = vunpack.c.l.b16 %v732
        %v807 = vunpack.c.l.b16 %v733
        %v808 = vunpack.c.l.b16 %v734
        %v809 = vunpack.c.l.b16 %v735
        %v810 = vunpack.c.l.b16 %v736
        %v811 = vunpack.c.l.b16 %v737
        %v812 = vunpack.c.l.b16 %v738
        %v813 = vunpack.c.l.b16 %v739
        %v814 = vunpack.c.l.b16 %v740
        %v815 = vunpack.c.l.b16 %v741
        %v816 = vunpack.c.l.b16 %v742
        %v817 = vunpack.c.l.b16 %v743
        %v818 = vunpack.c.l.b16 %v744
        %v819 = vunpack.c.l.b16 %v745
        %v820 = vunpack.c.l.b16 %v746
        %v821 = vunpack.c.l.b16 %v747
        %v822 = vunpack.c.l.b16 %v748
        %v823 = vunpack.c.l.b16 %v749
        %v824 = vunpack.c.l.b16 %v750
        %v825 = vunpack.c.l.b16 %v751
        %v826 = vunpack.c.l.b16 %v752
        %v827 = vunpack.c.l.b16 %v753
        %v828 = vunpack.c.l.b16 %v754
        %v829 = vunpack.c.l.b16 %v755
        %v830 = vunpack.c.l.b16 %v756
        %v831 = vunpack.c.l.b16 %v757
        %v832 = vunpack.c.l.b16 %v758
        %v833 = vunpack.c.l.b16 %v759
        %v834 = vunpack.c.l.b16 %v760
        %v835 = vunpack.c.l.b16 %v761
        %v836 = vpack.c.b16 %v800, %v799
        %v837 = vpack.c.b16 %v802, %v801
        %v838 = vpack.c.b16 %v804, %v803
        %v839 = vpack.c.b16 %v806, %v805
        %v840 = vpack.c.b16 %v808, %v807
        %v841 = vpack.c.b16 %v810, %v809
        %v842 = vpack.c.b16 %v812, %v811
        %v843 = vpack.c.b16 %v814, %v813
        %v844 = vpack.c.b16 %v816, %v815
        %v845 = vpack.c.b16 %v818, %v817
        %v846 = vpack.c.b16 %v820, %v819
        %v847 = vpack.c.b16 %v822, %v821
        %v848 = vpack.c.b16 %v824, %v823
        %v849 = vpack.c.b16 %v826, %v825
        %v850 = vpack.c.b16 %v828, %v827
        %v851 = vpack.c.b16 %v830, %v829
        %v852 = vpack.c.b16 %v832, %v831
        %v853 = vpack.c.b16 %v834, %v833
        %v854 = vpack.c.b16 %v835, %v835
        %vm855 = vcmask 1046528
        %v856 = vrot.slane %v836, 1
        %v857 = vrot.slane %v837, 1
        %v858 = vsel %vm855, %v856, %v857
        %v859 = vrot.slane %v838, 1
        %v860 = vsel %vm855, %v857, %v859
        %v861 = vrot.slane %v839, 1
        %v862 = vsel %vm855, %v859, %v861
        %v863 = vrot.slane %v840, 1
        %v864 = vsel %vm855, %v861, %v863
        %v865 = vrot.slane %v841, 1
        %v866 = vsel %vm855, %v863, %v865
        %v867 = vrot.slane %v842, 1
        %v868 = vsel %vm855, %v865, %v867
        %v869 = vrot.slane %v843, 1
        %v870 = vsel %vm855, %v867, %v869
        %v871 = vrot.slane %v844, 1
        %v872 = vsel %vm855, %v869, %v871
        %v873 = vrot.slane %v845, 1
        %v874 = vsel %vm855, %v871, %v873
        %v875 = vrot.slane %v846, 1
        %v876 = vsel %vm855, %v873, %v875
        %v877 = vrot.slane %v847, 1
        %v878 = vsel %vm855, %v875, %v877
        %v879 = vrot.slane %v848, 1
        %v880 = vsel %vm855, %v877, %v879
        %v881 = vrot.slane %v849, 1
        %v882 = vsel %vm855, %v879, %v881
        %v883 = vrot.slane %v850, 1
        %v884 = vsel %vm855, %v881, %v883
        %v885 = vrot.slane %v851, 1
        %v886 = vsel %vm855, %v883, %v885
        %v887 = vrot.slane %v852, 1
        %v888 = vsel %vm855, %v885, %v887
        %v889 = vrot.slane %v853, 1
        %v890 = vsel %vm855, %v887, %v889
        %v891 = vrot.slane %v854, 1
        %v892 = vsel %vm855, %v889, %v891
        %893 = vrot.lane.b32.xlu0 %v858, 8
        %v894 = vpop.permute.xlu0 %893
        %895 = vrot.lane.b32.xlu0 %v860, 8
        %v896 = vpop.permute.xlu0 %895
        %897 = vrot.lane.b32.xlu0 %v862, 8
        %v898 = vpop.permute.xlu0 %897
        %899 = vrot.lane.b32.xlu0 %v864, 8
        %v900 = vpop.permute.xlu0 %899
        %901 = vrot.lane.b32.xlu0 %v866, 8
        %v902 = vpop.permute.xlu0 %901
        %903 = vrot.lane.b32.xlu0 %v868, 8
        %v904 = vpop.permute.xlu0 %903
        %905 = vrot.lane.b32.xlu0 %v870, 8
        %v906 = vpop.permute.xlu0 %905
        %907 = vrot.lane.b32.xlu0 %v872, 8
        %v908 = vpop.permute.xlu0 %907
        %909 = vrot.lane.b32.xlu0 %v874, 8
        %v910 = vpop.permute.xlu0 %909
        %911 = vrot.lane.b32.xlu0 %v876, 8
        %v912 = vpop.permute.xlu0 %911
        %913 = vrot.lane.b32.xlu0 %v878, 8
        %v914 = vpop.permute.xlu0 %913
        %915 = vrot.lane.b32.xlu0 %v880, 8
        %v916 = vpop.permute.xlu0 %915
        %917 = vrot.lane.b32.xlu0 %v882, 8
        %v918 = vpop.permute.xlu0 %917
        %919 = vrot.lane.b32.xlu0 %v884, 8
        %v920 = vpop.permute.xlu0 %919
        %921 = vrot.lane.b32.xlu0 %v886, 8
        %v922 = vpop.permute.xlu0 %921
        %923 = vrot.lane.b32.xlu0 %v888, 8
        %v924 = vpop.permute.xlu0 %923
        %925 = vrot.lane.b32.xlu0 %v890, 8
        %v926 = vpop.permute.xlu0 %925
        %927 = vrot.lane.b32.xlu0 %v892, 8
        %v928 = vpop.permute.xlu0 %927
        %vm947 = vcmask 97344
        %948 = vst.msk [vmem:[#allocation2] sm:$0xff] %vm947, %v894
        %949 = vst.msk [vmem:[#allocation2 + $0x8] sm:$0xff] %vm947, %v896
        %950 = vst.msk [vmem:[#allocation2 + $0x10] sm:$0xff] %vm947, %v898
        %951 = vst.msk [vmem:[#allocation2 + $0x18] sm:$0xff] %vm947, %v900
        %952 = vst.msk [vmem:[#allocation2 + $0x20] sm:$0xff] %vm947, %v902
        %953 = vst.msk [vmem:[#allocation2 + $0x28] sm:$0xff] %vm947, %v904
        %954 = vst.msk [vmem:[#allocation2 + $0x30] sm:$0xff] %vm947, %v906
        %955 = vst.msk [vmem:[#allocation2 + $0x38] sm:$0xff] %vm947, %v908
        %956 = vst.msk [vmem:[#allocation2 + $0x40] sm:$0xff] %vm947, %v910
        %957 = vst.msk [vmem:[#allocation2 + $0x48] sm:$0xff] %vm947, %v912
        %958 = vst.msk [vmem:[#allocation2 + $0x50] sm:$0xff] %vm947, %v914
        %959 = vst.msk [vmem:[#allocation2 + $0x58] sm:$0xff] %vm947, %v916
        %960 = vst.msk [vmem:[#allocation2 + $0x60] sm:$0xff] %vm947, %v918
        %961 = vst.msk [vmem:[#allocation2 + $0x68] sm:$0xff] %vm947, %v920
        %962 = vst.msk [vmem:[#allocation2 + $0x70] sm:$0xff] %vm947, %v922
        %963 = vst.msk [vmem:[#allocation2 + $0x78] sm:$0xff] %vm947, %v924
        %964 = vst.msk [vmem:[#allocation2 + $0x80] sm:$0xff] %vm947, %v926
        %965 = vst.msk [vmem:[#allocation2 + $0x88] sm:$0xff] %vm947, %v928
        %v966 = vld [vmem:[%s203 + $0x8] sm:$0xe]
        %v967 = vld [vmem:[%s203 + $0xc] sm:$0xf]
        %v968 = vld [vmem:[%s203 + $0x10] sm:$0xf]
        %v969 = vld [vmem:[%s203 + $0x14] sm:$0xf]
        %v970 = vld [vmem:[%s203 + $0x18] sm:$0xf]
        %v971 = vld [vmem:[%s203 + $0x1c] sm:$0xf]
        %v972 = vld [vmem:[%s203 + $0x20] sm:$0xf]
        %v973 = vld [vmem:[%s203 + $0x24] sm:$0xf]
        %v974 = vld [vmem:[%s203 + $0x28] sm:$0xf]
        %v975 = vld [vmem:[%s203 + $0x2c] sm:$0xf]
        %v976 = vld [vmem:[%s203 + $0x30] sm:$0xf]
        %v977 = vld [vmem:[%s203 + $0x34] sm:$0xf]
        %v978 = vld [vmem:[%s203 + $0x38] sm:$0xf]
        %v979 = vld [vmem:[%s203 + $0x3c] sm:$0xf]
        %v980 = vld [vmem:[%s203 + $0x40] sm:$0xf]
        %v981 = vld [vmem:[%s203 + $0x44] sm:$0xf]
        %v982 = vld [vmem:[%s203 + $0x48] sm:$0xf]
        %v983 = vld [vmem:[%s203 + $0x4c] sm:$0xf]
        %v984 = vld [vmem:[%s203 + $0x50] sm:$0xf]
        %v985 = vld [vmem:[%s203 + $0x54] sm:$0xf]
        %v986 = vld [vmem:[%s203 + $0x58] sm:$0xf]
        %v987 = vld [vmem:[%s203 + $0x5c] sm:$0xf]
        %v988 = vld [vmem:[%s203 + $0x60] sm:$0xf]
        %v989 = vld [vmem:[%s203 + $0x64] sm:$0xf]
        %v990 = vld [vmem:[%s203 + $0x68] sm:$0xf]
        %v991 = vld [vmem:[%s203 + $0x6c] sm:$0xf]
        %v992 = vld [vmem:[%s203 + $0x70] sm:$0xf]
        %v993 = vld [vmem:[%s203 + $0x74] sm:$0xf]
        %v994 = vld [vmem:[%s203 + $0x78] sm:$0xf]
        %v995 = vld [vmem:[%s203 + $0x7c] sm:$0xf]
        %v996 = vld [vmem:[%s203 + $0x80] sm:$0xf]
        %v997 = vld [vmem:[%s203 + $0x84] sm:$0xf]
        %v998 = vld [vmem:[%s203 + $0x88] sm:$0xf]
        %v999 = vld [vmem:[%s203 + $0x8c] sm:$0xf]
        %v1000 = vld [vmem:[%s203 + $0x90] sm:$0xf]
        %v1001 = vld [vmem:[%s203 + $0x94] sm:$0xf]
        %v1002 = vld [vmem:[%s203 + $0x98] sm:$0x1]
        %v1040 = vunpack.c.l.b16 %v966
        %v1041 = vunpack.c.l.b16 %v967
        %v1042 = vunpack.c.l.b16 %v968
        %v1043 = vunpack.c.l.b16 %v969
        %v1044 = vunpack.c.l.b16 %v970
        %v1045 = vunpack.c.l.b16 %v971
        %v1046 = vunpack.c.l.b16 %v972
        %v1047 = vunpack.c.l.b16 %v973
        %v1048 = vunpack.c.l.b16 %v974
        %v1049 = vunpack.c.l.b16 %v975
        %v1050 = vunpack.c.l.b16 %v976
        %v1051 = vunpack.c.l.b16 %v977
        %v1052 = vunpack.c.l.b16 %v978
        %v1053 = vunpack.c.l.b16 %v979
        %v1054 = vunpack.c.l.b16 %v980
        %v1055 = vunpack.c.l.b16 %v981
        %v1056 = vunpack.c.l.b16 %v982
        %v1057 = vunpack.c.l.b16 %v983
        %v1058 = vunpack.c.l.b16 %v984
        %v1059 = vunpack.c.l.b16 %v985
        %v1060 = vunpack.c.l.b16 %v986
        %v1061 = vunpack.c.l.b16 %v987
        %v1062 = vunpack.c.l.b16 %v988
        %v1063 = vunpack.c.l.b16 %v989
        %v1064 = vunpack.c.l.b16 %v990
        %v1065 = vunpack.c.l.b16 %v991
        %v1066 = vunpack.c.l.b16 %v992
        %v1067 = vunpack.c.l.b16 %v993
        %v1068 = vunpack.c.l.b16 %v994
        %v1069 = vunpack.c.l.b16 %v995
        %v1070 = vunpack.c.l.b16 %v996
        %v1071 = vunpack.c.l.b16 %v997
        %v1072 = vunpack.c.l.b16 %v998
        %v1073 = vunpack.c.l.b16 %v999
        %v1074 = vunpack.c.l.b16 %v1000
        %v1075 = vunpack.c.l.b16 %v1001
        %v1076 = vunpack.c.l.b16 %v1002
        %v1077 = vpack.c.b16 %v1041, %v1040
        %v1078 = vpack.c.b16 %v1043, %v1042
        %v1079 = vpack.c.b16 %v1045, %v1044
        %v1080 = vpack.c.b16 %v1047, %v1046
        %v1081 = vpack.c.b16 %v1049, %v1048
        %v1082 = vpack.c.b16 %v1051, %v1050
        %v1083 = vpack.c.b16 %v1053, %v1052
        %v1084 = vpack.c.b16 %v1055, %v1054
        %v1085 = vpack.c.b16 %v1057, %v1056
        %v1086 = vpack.c.b16 %v1059, %v1058
        %v1087 = vpack.c.b16 %v1061, %v1060
        %v1088 = vpack.c.b16 %v1063, %v1062
        %v1089 = vpack.c.b16 %v1065, %v1064
        %v1090 = vpack.c.b16 %v1067, %v1066
        %v1091 = vpack.c.b16 %v1069, %v1068
        %v1092 = vpack.c.b16 %v1071, %v1070
        %v1093 = vpack.c.b16 %v1073, %v1072
        %v1094 = vpack.c.b16 %v1075, %v1074
        %v1095 = vpack.c.b16 %v1076, %v1076
        %v1096 = vrot.slane %v1077, 1
        %v1097 = vrot.slane %v1078, 1
        %v1098 = vsel %vm855, %v1096, %v1097
        %v1099 = vrot.slane %v1079, 1
        %v1100 = vsel %vm855, %v1097, %v1099
        %v1101 = vrot.slane %v1080, 1
        %v1102 = vsel %vm855, %v1099, %v1101
        %v1103 = vrot.slane %v1081, 1
        %v1104 = vsel %vm855, %v1101, %v1103
        %v1105 = vrot.slane %v1082, 1
        %v1106 = vsel %vm855, %v1103, %v1105
        %v1107 = vrot.slane %v1083, 1
        %v1108 = vsel %vm855, %v1105, %v1107
        %v1109 = vrot.slane %v1084, 1
        %v1110 = vsel %vm855, %v1107, %v1109
        %v1111 = vrot.slane %v1085, 1
        %v1112 = vsel %vm855, %v1109, %v1111
        %v1113 = vrot.slane %v1086, 1
        %v1114 = vsel %vm855, %v1111, %v1113
        %v1115 = vrot.slane %v1087, 1
        %v1116 = vsel %vm855, %v1113, %v1115
        %v1117 = vrot.slane %v1088, 1
        %v1118 = vsel %vm855, %v1115, %v1117
        %v1119 = vrot.slane %v1089, 1
        %v1120 = vsel %vm855, %v1117, %v1119
        %v1121 = vrot.slane %v1090, 1
        %v1122 = vsel %vm855, %v1119, %v1121
        %v1123 = vrot.slane %v1091, 1
        %v1124 = vsel %vm855, %v1121, %v1123
        %v1125 = vrot.slane %v1092, 1
        %v1126 = vsel %vm855, %v1123, %v1125
        %v1127 = vrot.slane %v1093, 1
        %v1128 = vsel %vm855, %v1125, %v1127
        %v1129 = vrot.slane %v1094, 1
        %v1130 = vsel %vm855, %v1127, %v1129
        %v1131 = vrot.slane %v1095, 1
        %v1132 = vsel %vm855, %v1129, %v1131
        %1133 = vrot.lane.b32.xlu0 %v1098, 12
        %v1134 = vpop.permute.xlu0 %1133
        %1135 = vrot.lane.b32.xlu0 %v1100, 12
        %v1136 = vpop.permute.xlu0 %1135
        %1137 = vrot.lane.b32.xlu0 %v1102, 12
        %v1138 = vpop.permute.xlu0 %1137
        %1139 = vrot.lane.b32.xlu0 %v1104, 12
        %v1140 = vpop.permute.xlu0 %1139
        %1141 = vrot.lane.b32.xlu0 %v1106, 12
        %v1142 = vpop.permute.xlu0 %1141
        %1143 = vrot.lane.b32.xlu0 %v1108, 12
        %v1144 = vpop.permute.xlu0 %1143
        %1145 = vrot.lane.b32.xlu0 %v1110, 12
        %v1146 = vpop.permute.xlu0 %1145
        %1147 = vrot.lane.b32.xlu0 %v1112, 12
        %v1148 = vpop.permute.xlu0 %1147
        %1149 = vrot.lane.b32.xlu0 %v1114, 12
        %v1150 = vpop.permute.xlu0 %1149
        %1151 = vrot.lane.b32.xlu0 %v1116, 12
        %v1152 = vpop.permute.xlu0 %1151
        %1153 = vrot.lane.b32.xlu0 %v1118, 12
        %v1154 = vpop.permute.xlu0 %1153
        %1155 = vrot.lane.b32.xlu0 %v1120, 12
        %v1156 = vpop.permute.xlu0 %1155
        %1157 = vrot.lane.b32.xlu0 %v1122, 12
        %v1158 = vpop.permute.xlu0 %1157
        %1159 = vrot.lane.b32.xlu0 %v1124, 12
        %v1160 = vpop.permute.xlu0 %1159
        %1161 = vrot.lane.b32.xlu0 %v1126, 12
        %v1162 = vpop.permute.xlu0 %1161
        %1163 = vrot.lane.b32.xlu0 %v1128, 12
        %v1164 = vpop.permute.xlu0 %1163
        %1165 = vrot.lane.b32.xlu0 %v1130, 12
        %v1166 = vpop.permute.xlu0 %1165
        %1167 = vrot.lane.b32.xlu0 %v1132, 12
        %v1168 = vpop.permute.xlu0 %1167
        %vm1187 = vcmask 130144
        %1188 = vst.msk [vmem:[#allocation2] sm:$0xff] %vm1187, %v1134
        %1189 = vst.msk [vmem:[#allocation2 + $0x8] sm:$0xff] %vm1187, %v1136
        %1190 = vst.msk [vmem:[#allocation2 + $0x10] sm:$0xff] %vm1187, %v1138
        %1191 = vst.msk [vmem:[#allocation2 + $0x18] sm:$0xff] %vm1187, %v1140
        %1192 = vst.msk [vmem:[#allocation2 + $0x20] sm:$0xff] %vm1187, %v1142
        %1193 = vst.msk [vmem:[#allocation2 + $0x28] sm:$0xff] %vm1187, %v1144
        %1194 = vst.msk [vmem:[#allocation2 + $0x30] sm:$0xff] %vm1187, %v1146
        %1195 = vst.msk [vmem:[#allocation2 + $0x38] sm:$0xff] %vm1187, %v1148
        %1196 = vst.msk [vmem:[#allocation2 + $0x40] sm:$0xff] %vm1187, %v1150
        %1197 = vst.msk [vmem:[#allocation2 + $0x48] sm:$0xff] %vm1187, %v1152
        %1198 = vst.msk [vmem:[#allocation2 + $0x50] sm:$0xff] %vm1187, %v1154
        %1199 = vst.msk [vmem:[#allocation2 + $0x58] sm:$0xff] %vm1187, %v1156
        %1200 = vst.msk [vmem:[#allocation2 + $0x60] sm:$0xff] %vm1187, %v1158
        %1201 = vst.msk [vmem:[#allocation2 + $0x68] sm:$0xff] %vm1187, %v1160
        %1202 = vst.msk [vmem:[#allocation2 + $0x70] sm:$0xff] %vm1187, %v1162
        %1203 = vst.msk [vmem:[#allocation2 + $0x78] sm:$0xff] %vm1187, %v1164
        %1204 = vst.msk [vmem:[#allocation2 + $0x80] sm:$0xff] %vm1187, %v1166
        %1205 = vst.msk [vmem:[#allocation2 + $0x88] sm:$0xff] %vm1187, %v1168
        %v1206 = vld [vmem:[%s203 + $0x8] sm:$0xe]
        %v1207 = vld [vmem:[%s203 + $0xc] sm:$0xf]
        %v1208 = vld [vmem:[%s203 + $0x10] sm:$0xf]
        %v1209 = vld [vmem:[%s203 + $0x14] sm:$0xf]
        %v1210 = vld [vmem:[%s203 + $0x18] sm:$0xf]
        %v1211 = vld [vmem:[%s203 + $0x1c] sm:$0xf]
        %v1212 = vld [vmem:[%s203 + $0x20] sm:$0xf]
        %v1213 = vld [vmem:[%s203 + $0x24] sm:$0xf]
        %v1214 = vld [vmem:[%s203 + $0x28] sm:$0xf]
        %v1215 = vld [vmem:[%s203 + $0x2c] sm:$0xf]
        %v1216 = vld [vmem:[%s203 + $0x30] sm:$0xf]
        %v1217 = vld [vmem:[%s203 + $0x34] sm:$0xf]
        %v1218 = vld [vmem:[%s203 + $0x38] sm:$0xf]
        %v1219 = vld [vmem:[%s203 + $0x3c] sm:$0xf]
        %v1220 = vld [vmem:[%s203 + $0x40] sm:$0xf]
        %v1221 = vld [vmem:[%s203 + $0x44] sm:$0xf]
        %v1222 = vld [vmem:[%s203 + $0x48] sm:$0xf]
        %v1223 = vld [vmem:[%s203 + $0x4c] sm:$0xf]
        %v1224 = vld [vmem:[%s203 + $0x50] sm:$0xf]
        %v1225 = vld [vmem:[%s203 + $0x54] sm:$0xf]
        %v1226 = vld [vmem:[%s203 + $0x58] sm:$0xf]
        %v1227 = vld [vmem:[%s203 + $0x5c] sm:$0xf]
        %v1228 = vld [vmem:[%s203 + $0x60] sm:$0xf]
        %v1229 = vld [vmem:[%s203 + $0x64] sm:$0xf]
        %v1230 = vld [vmem:[%s203 + $0x68] sm:$0xf]
        %v1231 = vld [vmem:[%s203 + $0x6c] sm:$0xf]
        %v1232 = vld [vmem:[%s203 + $0x70] sm:$0xf]
        %v1233 = vld [vmem:[%s203 + $0x74] sm:$0xf]
        %v1234 = vld [vmem:[%s203 + $0x78] sm:$0xf]
        %v1235 = vld [vmem:[%s203 + $0x7c] sm:$0xf]
        %v1236 = vld [vmem:[%s203 + $0x80] sm:$0xf]
        %v1237 = vld [vmem:[%s203 + $0x84] sm:$0xf]
        %v1238 = vld [vmem:[%s203 + $0x88] sm:$0xf]
        %v1239 = vld [vmem:[%s203 + $0x8c] sm:$0xf]
        %v1240 = vld [vmem:[%s203 + $0x90] sm:$0xf]
        %v1241 = vld [vmem:[%s203 + $0x94] sm:$0xf]
        %v1242 = vld [vmem:[%s203 + $0x98] sm:$0x3]
        %v1280 = vunpack.c.l.b16 %v1206
        %v1281 = vunpack.c.l.b16 %v1207
        %v1282 = vunpack.c.l.b16 %v1208
        %v1283 = vunpack.c.l.b16 %v1209
        %v1284 = vunpack.c.l.b16 %v1210
        %v1285 = vunpack.c.l.b16 %v1211
        %v1286 = vunpack.c.l.b16 %v1212
        %v1287 = vunpack.c.l.b16 %v1213
        %v1288 = vunpack.c.l.b16 %v1214
        %v1289 = vunpack.c.l.b16 %v1215
        %v1290 = vunpack.c.l.b16 %v1216
        %v1291 = vunpack.c.l.b16 %v1217
        %v1292 = vunpack.c.l.b16 %v1218
        %v1293 = vunpack.c.l.b16 %v1219
        %v1294 = vunpack.c.l.b16 %v1220
        %v1295 = vunpack.c.l.b16 %v1221
        %v1296 = vunpack.c.l.b16 %v1222
        %v1297 = vunpack.c.l.b16 %v1223
        %v1298 = vunpack.c.l.b16 %v1224
        %v1299 = vunpack.c.l.b16 %v1225
        %v1300 = vunpack.c.l.b16 %v1226
        %v1301 = vunpack.c.l.b16 %v1227
        %v1302 = vunpack.c.l.b16 %v1228
        %v1303 = vunpack.c.l.b16 %v1229
        %v1304 = vunpack.c.l.b16 %v1230
        %v1305 = vunpack.c.l.b16 %v1231
        %v1306 = vunpack.c.l.b16 %v1232
        %v1307 = vunpack.c.l.b16 %v1233
        %v1308 = vunpack.c.l.b16 %v1234
        %v1309 = vunpack.c.l.b16 %v1235
        %v1310 = vunpack.c.l.b16 %v1236
        %v1311 = vunpack.c.l.b16 %v1237
        %v1312 = vunpack.c.l.b16 %v1238
        %v1313 = vunpack.c.l.b16 %v1239
        %v1314 = vunpack.c.l.b16 %v1240
        %v1315 = vunpack.c.l.b16 %v1241
        %v1316 = vunpack.c.l.b16 %v1242
        %v1317 = vpack.c.b16 %v1281, %v1280
        %v1318 = vpack.c.b16 %v1283, %v1282
        %v1319 = vpack.c.b16 %v1285, %v1284
        %v1320 = vpack.c.b16 %v1287, %v1286
        %v1321 = vpack.c.b16 %v1289, %v1288
        %v1322 = vpack.c.b16 %v1291, %v1290
        %v1323 = vpack.c.b16 %v1293, %v1292
        %v1324 = vpack.c.b16 %v1295, %v1294
        %v1325 = vpack.c.b16 %v1297, %v1296
        %v1326 = vpack.c.b16 %v1299, %v1298
        %v1327 = vpack.c.b16 %v1301, %v1300
        %v1328 = vpack.c.b16 %v1303, %v1302
        %v1329 = vpack.c.b16 %v1305, %v1304
        %v1330 = vpack.c.b16 %v1307, %v1306
        %v1331 = vpack.c.b16 %v1309, %v1308
        %v1332 = vpack.c.b16 %v1311, %v1310
        %v1333 = vpack.c.b16 %v1313, %v1312
        %v1334 = vpack.c.b16 %v1315, %v1314
        %v1335 = vpack.c.b16 %v1316, %v1316
        %vm1336 = vsmask.f32 6400
        %v1338 = vshrl.u32 %v1317, 16
        %v1340 = vrot.slane %v1338, 1
        %v1341 = vshll.u32 %v1317, 16
        %v1343 = vrot.slane %v1341, 2
        %v1344 = vor.u32 %v1340, %v1343
        %v1346 = vshrl.u32 %v1318, 16
        %v1348 = vrot.slane %v1346, 1
        %v1349 = vshll.u32 %v1318, 16
        %v1351 = vrot.slane %v1349, 2
        %v1352 = vor.u32 %v1348, %v1351
        %v1353 = vsel %vm1336, %v1344, %v1352
        %v1355 = vshrl.u32 %v1319, 16
        %v1357 = vrot.slane %v1355, 1
        %v1358 = vshll.u32 %v1319, 16
        %v1360 = vrot.slane %v1358, 2
        %v1361 = vor.u32 %v1357, %v1360
        %v1362 = vsel %vm1336, %v1352, %v1361
        %v1364 = vshrl.u32 %v1320, 16
        %v1366 = vrot.slane %v1364, 1
        %v1367 = vshll.u32 %v1320, 16
        %v1369 = vrot.slane %v1367, 2
        %v1370 = vor.u32 %v1366, %v1369
        %v1371 = vsel %vm1336, %v1361, %v1370
        %v1373 = vshrl.u32 %v1321, 16
        %v1375 = vrot.slane %v1373, 1
        %v1376 = vshll.u32 %v1321, 16
        %v1378 = vrot.slane %v1376, 2
        %v1379 = vor.u32 %v1375, %v1378
        %v1380 = vsel %vm1336, %v1370, %v1379
        %v1382 = vshrl.u32 %v1322, 16
        %v1384 = vrot.slane %v1382, 1
        %v1385 = vshll.u32 %v1322, 16
        %v1387 = vrot.slane %v1385, 2
        %v1388 = vor.u32 %v1384, %v1387
        %v1389 = vsel %vm1336, %v1379, %v1388
        %v1391 = vshrl.u32 %v1323, 16
        %v1393 = vrot.slane %v1391, 1
        %v1394 = vshll.u32 %v1323, 16
        %v1396 = vrot.slane %v1394, 2
        %v1397 = vor.u32 %v1393, %v1396
        %v1398 = vsel %vm1336, %v1388, %v1397
        %v1400 = vshrl.u32 %v1324, 16
        %v1402 = vrot.slane %v1400, 1
        %v1403 = vshll.u32 %v1324, 16
        %v1405 = vrot.slane %v1403, 2
        %v1406 = vor.u32 %v1402, %v1405
        %v1407 = vsel %vm1336, %v1397, %v1406
        %v1409 = vshrl.u32 %v1325, 16
        %v1411 = vrot.slane %v1409, 1
        %v1412 = vshll.u32 %v1325, 16
        %v1414 = vrot.slane %v1412, 2
        %v1415 = vor.u32 %v1411, %v1414
        %v1416 = vsel %vm1336, %v1406, %v1415
        %v1418 = vshrl.u32 %v1326, 16
        %v1420 = vrot.slane %v1418, 1
        %v1421 = vshll.u32 %v1326, 16
        %v1423 = vrot.slane %v1421, 2
        %v1424 = vor.u32 %v1420, %v1423
        %v1425 = vsel %vm1336, %v1415, %v1424
        %v1427 = vshrl.u32 %v1327, 16
        %v1429 = vrot.slane %v1427, 1
        %v1430 = vshll.u32 %v1327, 16
        %v1432 = vrot.slane %v1430, 2
        %v1433 = vor.u32 %v1429, %v1432
        %v1434 = vsel %vm1336, %v1424, %v1433
        %v1436 = vshrl.u32 %v1328, 16
        %v1438 = vrot.slane %v1436, 1
        %v1439 = vshll.u32 %v1328, 16
        %v1441 = vrot.slane %v1439, 2
        %v1442 = vor.u32 %v1438, %v1441
        %v1443 = vsel %vm1336, %v1433, %v1442
        %v1445 = vshrl.u32 %v1329, 16
        %v1447 = vrot.slane %v1445, 1
        %v1448 = vshll.u32 %v1329, 16
        %v1450 = vrot.slane %v1448, 2
        %v1451 = vor.u32 %v1447, %v1450
        %v1452 = vsel %vm1336, %v1442, %v1451
        %v1454 = vshrl.u32 %v1330, 16
        %v1456 = vrot.slane %v1454, 1
        %v1457 = vshll.u32 %v1330, 16
        %v1459 = vrot.slane %v1457, 2
        %v1460 = vor.u32 %v1456, %v1459
        %v1461 = vsel %vm1336, %v1451, %v1460
        %v1463 = vshrl.u32 %v1331, 16
        %v1465 = vrot.slane %v1463, 1
        %v1466 = vshll.u32 %v1331, 16
        %v1468 = vrot.slane %v1466, 2
        %v1469 = vor.u32 %v1465, %v1468
        %v1470 = vsel %vm1336, %v1460, %v1469
        %v1472 = vshrl.u32 %v1332, 16
        %v1474 = vrot.slane %v1472, 1
        %v1475 = vshll.u32 %v1332, 16
        %v1477 = vrot.slane %v1475, 2
        %v1478 = vor.u32 %v1474, %v1477
        %v1479 = vsel %vm1336, %v1469, %v1478
        %v1481 = vshrl.u32 %v1333, 16
        %v1483 = vrot.slane %v1481, 1
        %v1484 = vshll.u32 %v1333, 16
        %v1486 = vrot.slane %v1484, 2
        %v1487 = vor.u32 %v1483, %v1486
        %v1488 = vsel %vm1336, %v1478, %v1487
        %v1490 = vshrl.u32 %v1334, 16
        %v1492 = vrot.slane %v1490, 1
        %v1493 = vshll.u32 %v1334, 16
        %v1495 = vrot.slane %v1493, 2
        %v1496 = vor.u32 %v1492, %v1495
        %v1497 = vsel %vm1336, %v1487, %v1496
        %v1499 = vshrl.u32 %v1335, 16
        %v1501 = vrot.slane %v1499, 1
        %v1502 = vshll.u32 %v1335, 16
        %v1504 = vrot.slane %v1502, 2
        %v1505 = vor.u32 %v1501, %v1504
        %v1506 = vsel %vm1336, %v1496, %v1505
        %1507 = vrot.lane.b32.xlu0 %v1353, 16
        %v1508 = vpop.permute.xlu0 %1507
        %1509 = vrot.lane.b32.xlu0 %v1362, 16
        %v1510 = vpop.permute.xlu0 %1509
        %1511 = vrot.lane.b32.xlu0 %v1371, 16
        %v1512 = vpop.permute.xlu0 %1511
        %1513 = vrot.lane.b32.xlu0 %v1380, 16
        %v1514 = vpop.permute.xlu0 %1513
        %1515 = vrot.lane.b32.xlu0 %v1389, 16
        %v1516 = vpop.permute.xlu0 %1515
        %1517 = vrot.lane.b32.xlu0 %v1398, 16
        %v1518 = vpop.permute.xlu0 %1517
        %1519 = vrot.lane.b32.xlu0 %v1407, 16
        %v1520 = vpop.permute.xlu0 %1519
        %1521 = vrot.lane.b32.xlu0 %v1416, 16
        %v1522 = vpop.permute.xlu0 %1521
        %1523 = vrot.lane.b32.xlu0 %v1425, 16
        %v1524 = vpop.permute.xlu0 %1523
        %1525 = vrot.lane.b32.xlu0 %v1434, 16
        %v1526 = vpop.permute.xlu0 %1525
        %1527 = vrot.lane.b32.xlu0 %v1443, 16
        %v1528 = vpop.permute.xlu0 %1527
        %1529 = vrot.lane.b32.xlu0 %v1452, 16
        %v1530 = vpop.permute.xlu0 %1529
        %1531 = vrot.lane.b32.xlu0 %v1461, 16
        %v1532 = vpop.permute.xlu0 %1531
        %1533 = vrot.lane.b32.xlu0 %v1470, 16
        %v1534 = vpop.permute.xlu0 %1533
        %1535 = vrot.lane.b32.xlu0 %v1479, 16
        %v1536 = vpop.permute.xlu0 %1535
        %1537 = vrot.lane.b32.xlu0 %v1488, 16
        %v1538 = vpop.permute.xlu0 %1537
        %1539 = vrot.lane.b32.xlu0 %v1497, 16
        %v1540 = vpop.permute.xlu0 %1539
        %1541 = vrot.lane.b32.xlu0 %v1506, 16
        %v1542 = vpop.permute.xlu0 %1541
        %vm1561 = vcmask 162944
        %1562 = vst.msk [vmem:[#allocation2] sm:$0xff] %vm1561, %v1508
        %1563 = vst.msk [vmem:[#allocation2 + $0x8] sm:$0xff] %vm1561, %v1510
        %1564 = vst.msk [vmem:[#allocation2 + $0x10] sm:$0xff] %vm1561, %v1512
        %1565 = vst.msk [vmem:[#allocation2 + $0x18] sm:$0xff] %vm1561, %v1514
        %1566 = vst.msk [vmem:[#allocation2 + $0x20] sm:$0xff] %vm1561, %v1516
        %1567 = vst.msk [vmem:[#allocation2 + $0x28] sm:$0xff] %vm1561, %v1518
        %1568 = vst.msk [vmem:[#allocation2 + $0x30] sm:$0xff] %vm1561, %v1520
        %1569 = vst.msk [vmem:[#allocation2 + $0x38] sm:$0xff] %vm1561, %v1522
        %1570 = vst.msk [vmem:[#allocation2 + $0x40] sm:$0xff] %vm1561, %v1524
        %1571 = vst.msk [vmem:[#allocation2 + $0x48] sm:$0xff] %vm1561, %v1526
        %1572 = vst.msk [vmem:[#allocation2 + $0x50] sm:$0xff] %vm1561, %v1528
        %1573 = vst.msk [vmem:[#allocation2 + $0x58] sm:$0xff] %vm1561, %v1530
        %1574 = vst.msk [vmem:[#allocation2 + $0x60] sm:$0xff] %vm1561, %v1532
        %1575 = vst.msk [vmem:[#allocation2 + $0x68] sm:$0xff] %vm1561, %v1534
        %1576 = vst.msk [vmem:[#allocation2 + $0x70] sm:$0xff] %vm1561, %v1536
        %1577 = vst.msk [vmem:[#allocation2 + $0x78] sm:$0xff] %vm1561, %v1538
        %1578 = vst.msk [vmem:[#allocation2 + $0x80] sm:$0xff] %vm1561, %v1540
        %1579 = vst.msk [vmem:[#allocation2 + $0x88] sm:$0xff] %vm1561, %v1542
        %v1580 = vld [vmem:[%s203 + $0x8] sm:$0xc]
        %v1581 = vld [vmem:[%s203 + $0xc] sm:$0xf]
        %v1582 = vld [vmem:[%s203 + $0x10] sm:$0xf]
        %v1583 = vld [vmem:[%s203 + $0x14] sm:$0xf]
        %v1584 = vld [vmem:[%s203 + $0x18] sm:$0xf]
        %v1585 = vld [vmem:[%s203 + $0x1c] sm:$0xf]
        %v1586 = vld [vmem:[%s203 + $0x20] sm:$0xf]
        %v1587 = vld [vmem:[%s203 + $0x24] sm:$0xf]
        %v1588 = vld [vmem:[%s203 + $0x28] sm:$0xf]
        %v1589 = vld [vmem:[%s203 + $0x2c] sm:$0xf]
        %v1590 = vld [vmem:[%s203 + $0x30] sm:$0xf]
        %v1591 = vld [vmem:[%s203 + $0x34] sm:$0xf]
        %v1592 = vld [vmem:[%s203 + $0x38] sm:$0xf]
        %v1593 = vld [vmem:[%s203 + $0x3c] sm:$0xf]
        %v1594 = vld [vmem:[%s203 + $0x40] sm:$0xf]
        %v1595 = vld [vmem:[%s203 + $0x44] sm:$0xf]
        %v1596 = vld [vmem:[%s203 + $0x48] sm:$0xf]
        %v1597 = vld [vmem:[%s203 + $0x4c] sm:$0xf]
        %v1598 = vld [vmem:[%s203 + $0x50] sm:$0xf]
        %v1599 = vld [vmem:[%s203 + $0x54] sm:$0xf]
        %v1600 = vld [vmem:[%s203 + $0x58] sm:$0xf]
        %v1601 = vld [vmem:[%s203 + $0x5c] sm:$0xf]
        %v1602 = vld [vmem:[%s203 + $0x60] sm:$0xf]
        %v1603 = vld [vmem:[%s203 + $0x64] sm:$0xf]
        %v1604 = vld [vmem:[%s203 + $0x68] sm:$0xf]
        %v1605 = vld [vmem:[%s203 + $0x6c] sm:$0xf]
        %v1606 = vld [vmem:[%s203 + $0x70] sm:$0xf]
        %v1607 = vld [vmem:[%s203 + $0x74] sm:$0xf]
        %v1608 = vld [vmem:[%s203 + $0x78] sm:$0xf]
        %v1609 = vld [vmem:[%s203 + $0x7c] sm:$0xf]
        %v1610 = vld [vmem:[%s203 + $0x80] sm:$0xf]
        %v1611 = vld [vmem:[%s203 + $0x84] sm:$0xf]
        %v1612 = vld [vmem:[%s203 + $0x88] sm:$0xf]
        %v1613 = vld [vmem:[%s203 + $0x8c] sm:$0xf]
        %v1614 = vld [vmem:[%s203 + $0x90] sm:$0xf]
        %v1615 = vld [vmem:[%s203 + $0x94] sm:$0xf]
        %v1616 = vld [vmem:[%s203 + $0x98] sm:$0x3]
        %v1654 = vunpack.c.l.b16 %v1580
        %v1655 = vunpack.c.l.b16 %v1581
        %v1656 = vunpack.c.l.b16 %v1582
        %v1657 = vunpack.c.l.b16 %v1583
        %v1658 = vunpack.c.l.b16 %v1584
        %v1659 = vunpack.c.l.b16 %v1585
        %v1660 = vunpack.c.l.b16 %v1586
        %v1661 = vunpack.c.l.b16 %v1587
        %v1662 = vunpack.c.l.b16 %v1588
        %v1663 = vunpack.c.l.b16 %v1589
        %v1664 = vunpack.c.l.b16 %v1590
        %v1665 = vunpack.c.l.b16 %v1591
        %v1666 = vunpack.c.l.b16 %v1592
        %v1667 = vunpack.c.l.b16 %v1593
        %v1668 = vunpack.c.l.b16 %v1594
        %v1669 = vunpack.c.l.b16 %v1595
        %v1670 = vunpack.c.l.b16 %v1596
        %v1671 = vunpack.c.l.b16 %v1597
        %v1672 = vunpack.c.l.b16 %v1598
        %v1673 = vunpack.c.l.b16 %v1599
        %v1674 = vunpack.c.l.b16 %v1600
        %v1675 = vunpack.c.l.b16 %v1601
        %v1676 = vunpack.c.l.b16 %v1602
        %v1677 = vunpack.c.l.b16 %v1603
        %v1678 = vunpack.c.l.b16 %v1604
        %v1679 = vunpack.c.l.b16 %v1605
        %v1680 = vunpack.c.l.b16 %v1606
        %v1681 = vunpack.c.l.b16 %v1607
        %v1682 = vunpack.c.l.b16 %v1608
        %v1683 = vunpack.c.l.b16 %v1609
        %v1684 = vunpack.c.l.b16 %v1610
        %v1685 = vunpack.c.l.b16 %v1611
        %v1686 = vunpack.c.l.b16 %v1612
        %v1687 = vunpack.c.l.b16 %v1613
        %v1688 = vunpack.c.l.b16 %v1614
        %v1689 = vunpack.c.l.b16 %v1615
        %v1690 = vunpack.c.l.b16 %v1616
        %v1691 = vpack.c.b16 %v1655, %v1654
        %v1692 = vpack.c.b16 %v1657, %v1656
        %v1693 = vpack.c.b16 %v1659, %v1658
        %v1694 = vpack.c.b16 %v1661, %v1660
        %v1695 = vpack.c.b16 %v1663, %v1662
        %v1696 = vpack.c.b16 %v1665, %v1664
        %v1697 = vpack.c.b16 %v1667, %v1666
        %v1698 = vpack.c.b16 %v1669, %v1668
        %v1699 = vpack.c.b16 %v1671, %v1670
        %v1700 = vpack.c.b16 %v1673, %v1672
        %v1701 = vpack.c.b16 %v1675, %v1674
        %v1702 = vpack.c.b16 %v1677, %v1676
        %v1703 = vpack.c.b16 %v1679, %v1678
        %v1704 = vpack.c.b16 %v1681, %v1680
        %v1705 = vpack.c.b16 %v1683, %v1682
        %v1706 = vpack.c.b16 %v1685, %v1684
        %v1707 = vpack.c.b16 %v1687, %v1686
        %v1708 = vpack.c.b16 %v1689, %v1688
        %v1709 = vpack.c.b16 %v1690, %v1690
        %vm1710 = vcmask 1045504
        %v1711 = vrot.slane %v1691, 2
        %v1712 = vrot.slane %v1692, 2
        %v1713 = vsel %vm1710, %v1711, %v1712
        %v1714 = vrot.slane %v1693, 2
        %v1715 = vsel %vm1710, %v1712, %v1714
        %v1716 = vrot.slane %v1694, 2
        %v1717 = vsel %vm1710, %v1714, %v1716
        %v1718 = vrot.slane %v1695, 2
        %v1719 = vsel %vm1710, %v1716, %v1718
        %v1720 = vrot.slane %v1696, 2
        %v1721 = vsel %vm1710, %v1718, %v1720
        %v1722 = vrot.slane %v1697, 2
        %v1723 = vsel %vm1710, %v1720, %v1722
        %v1724 = vrot.slane %v1698, 2
        %v1725 = vsel %vm1710, %v1722, %v1724
        %v1726 = vrot.slane %v1699, 2
        %v1727 = vsel %vm1710, %v1724, %v1726
        %v1728 = vrot.slane %v1700, 2
        %v1729 = vsel %vm1710, %v1726, %v1728
        %v1730 = vrot.slane %v1701, 2
        %v1731 = vsel %vm1710, %v1728, %v1730
        %v1732 = vrot.slane %v1702, 2
        %v1733 = vsel %vm1710, %v1730, %v1732
        %v1734 = vrot.slane %v1703, 2
        %v1735 = vsel %vm1710, %v1732, %v1734
        %v1736 = vrot.slane %v1704, 2
        %v1737 = vsel %vm1710, %v1734, %v1736
        %v1738 = vrot.slane %v1705, 2
        %v1739 = vsel %vm1710, %v1736, %v1738
        %v1740 = vrot.slane %v1706, 2
        %v1741 = vsel %vm1710, %v1738, %v1740
        %v1742 = vrot.slane %v1707, 2
        %v1743 = vsel %vm1710, %v1740, %v1742
        %v1744 = vrot.slane %v1708, 2
        %v1745 = vsel %vm1710, %v1742, %v1744
        %v1746 = vrot.slane %v1709, 2
        %v1747 = vsel %vm1710, %v1744, %v1746
        %1748 = vrot.lane.b32.xlu0 %v1713, 20
        %v1749 = vpop.permute.xlu0 %1748
        %1750 = vrot.lane.b32.xlu0 %v1715, 20
        %v1751 = vpop.permute.xlu0 %1750
        %1752 = vrot.lane.b32.xlu0 %v1717, 20
        %v1753 = vpop.permute.xlu0 %1752
        %1754 = vrot.lane.b32.xlu0 %v1719, 20
        %v1755 = vpop.permute.xlu0 %1754
        %1756 = vrot.lane.b32.xlu0 %v1721, 20
        %v1757 = vpop.permute.xlu0 %1756
        %1758 = vrot.lane.b32.xlu0 %v1723, 20
        %v1759 = vpop.permute.xlu0 %1758
        %1760 = vrot.lane.b32.xlu0 %v1725, 20
        %v1761 = vpop.permute.xlu0 %1760
        %1762 = vrot.lane.b32.xlu0 %v1727, 20
        %v1763 = vpop.permute.xlu0 %1762
        %1764 = vrot.lane.b32.xlu0 %v1729, 20
        %v1765 = vpop.permute.xlu0 %1764
        %1766 = vrot.lane.b32.xlu0 %v1731, 20
        %v1767 = vpop.permute.xlu0 %1766
        %1768 = vrot.lane.b32.xlu0 %v1733, 20
        %v1769 = vpop.permute.xlu0 %1768
        %1770 = vrot.lane.b32.xlu0 %v1735, 20
        %v1771 = vpop.permute.xlu0 %1770
        %1772 = vrot.lane.b32.xlu0 %v1737, 20
        %v1773 = vpop.permute.xlu0 %1772
        %1774 = vrot.lane.b32.xlu0 %v1739, 20
        %v1775 = vpop.permute.xlu0 %1774
        %1776 = vrot.lane.b32.xlu0 %v1741, 20
        %v1777 = vpop.permute.xlu0 %1776
        %1778 = vrot.lane.b32.xlu0 %v1743, 20
        %v1779 = vpop.permute.xlu0 %1778
        %1780 = vrot.lane.b32.xlu0 %v1745, 20
        %v1781 = vpop.permute.xlu0 %1780
        %1782 = vrot.lane.b32.xlu0 %v1747, 20
        %v1783 = vpop.permute.xlu0 %1782
        %vm1802 = vcmask 195744
        %1803 = vst.msk [vmem:[#allocation2] sm:$0xff] %vm1802, %v1749
        %1804 = vst.msk [vmem:[#allocation2 + $0x8] sm:$0xff] %vm1802, %v1751
        %1805 = vst.msk [vmem:[#allocation2 + $0x10] sm:$0xff] %vm1802, %v1753
        %1806 = vst.msk [vmem:[#allocation2 + $0x18] sm:$0xff] %vm1802, %v1755
        %1807 = vst.msk [vmem:[#allocation2 + $0x20] sm:$0xff] %vm1802, %v1757
        %1808 = vst.msk [vmem:[#allocation2 + $0x28] sm:$0xff] %vm1802, %v1759
        %1809 = vst.msk [vmem:[#allocation2 + $0x30] sm:$0xff] %vm1802, %v1761
        %1810 = vst.msk [vmem:[#allocation2 + $0x38] sm:$0xff] %vm1802, %v1763
        %1811 = vst.msk [vmem:[#allocation2 + $0x40] sm:$0xff] %vm1802, %v1765
        %1812 = vst.msk [vmem:[#allocation2 + $0x48] sm:$0xff] %vm1802, %v1767
        %1813 = vst.msk [vmem:[#allocation2 + $0x50] sm:$0xff] %vm1802, %v1769
        %1814 = vst.msk [vmem:[#allocation2 + $0x58] sm:$0xff] %vm1802, %v1771
        %1815 = vst.msk [vmem:[#allocation2 + $0x60] sm:$0xff] %vm1802, %v1773
        %1816 = vst.msk [vmem:[#allocation2 + $0x68] sm:$0xff] %vm1802, %v1775
        %1817 = vst.msk [vmem:[#allocation2 + $0x70] sm:$0xff] %vm1802, %v1777
        %1818 = vst.msk [vmem:[#allocation2 + $0x78] sm:$0xff] %vm1802, %v1779
        %1819 = vst.msk [vmem:[#allocation2 + $0x80] sm:$0xff] %vm1802, %v1781
        %1820 = vst.msk [vmem:[#allocation2 + $0x88] sm:$0xff] %vm1802, %v1783
        %v1821 = vld [vmem:[%s203 + $0x10] sm:$0xc]
        %v1822 = vld [vmem:[%s203 + $0x14] sm:$0xf]
        %v1823 = vld [vmem:[%s203 + $0x18] sm:$0xf]
        %v1824 = vld [vmem:[%s203 + $0x1c] sm:$0xf]
        %v1825 = vld [vmem:[%s203 + $0x20] sm:$0xf]
        %v1826 = vld [vmem:[%s203 + $0x24] sm:$0xf]
        %v1827 = vld [vmem:[%s203 + $0x28] sm:$0xf]
        %v1828 = vld [vmem:[%s203 + $0x2c] sm:$0xf]
        %v1829 = vld [vmem:[%s203 + $0x30] sm:$0xf]
        %v1830 = vld [vmem:[%s203 + $0x34] sm:$0xf]
        %v1831 = vld [vmem:[%s203 + $0x38] sm:$0xf]
        %v1832 = vld [vmem:[%s203 + $0x3c] sm:$0xf]
        %v1833 = vld [vmem:[%s203 + $0x40] sm:$0xf]
        %v1834 = vld [vmem:[%s203 + $0x44] sm:$0xf]
        %v1835 = vld [vmem:[%s203 + $0x48] sm:$0xf]
        %v1836 = vld [vmem:[%s203 + $0x4c] sm:$0xf]
        %v1837 = vld [vmem:[%s203 + $0x50] sm:$0xf]
        %v1838 = vld [vmem:[%s203 + $0x54] sm:$0xf]
        %v1839 = vld [vmem:[%s203 + $0x58] sm:$0xf]
        %v1840 = vld [vmem:[%s203 + $0x5c] sm:$0xf]
        %v1841 = vld [vmem:[%s203 + $0x60] sm:$0xf]
        %v1842 = vld [vmem:[%s203 + $0x64] sm:$0xf]
        %v1843 = vld [vmem:[%s203 + $0x68] sm:$0xf]
        %v1844 = vld [vmem:[%s203 + $0x6c] sm:$0xf]
        %v1845 = vld [vmem:[%s203 + $0x70] sm:$0xf]
        %v1846 = vld [vmem:[%s203 + $0x74] sm:$0xf]
        %v1847 = vld [vmem:[%s203 + $0x78] sm:$0xf]
        %v1848 = vld [vmem:[%s203 + $0x7c] sm:$0xf]
        %v1849 = vld [vmem:[%s203 + $0x80] sm:$0xf]
        %v1850 = vld [vmem:[%s203 + $0x84] sm:$0xf]
        %v1851 = vld [vmem:[%s203 + $0x88] sm:$0xf]
        %v1852 = vld [vmem:[%s203 + $0x8c] sm:$0xf]
        %v1853 = vld [vmem:[%s203 + $0x90] sm:$0xf]
        %v1854 = vld [vmem:[%s203 + $0x94] sm:$0xf]
        %v1855 = vld [vmem:[%s203 + $0x98] sm:$0xf]
        %v1856 = vld [vmem:[%s203 + $0x9c] sm:$0xf]
        %v1857 = vld [vmem:[%s203 + $0xa0] sm:$0x3]
        %v1895 = vunpack.c.l.b16 %v1821
        %v1896 = vunpack.c.l.b16 %v1822
        %v1897 = vunpack.c.l.b16 %v1823
        %v1898 = vunpack.c.l.b16 %v1824
        %v1899 = vunpack.c.l.b16 %v1825
        %v1900 = vunpack.c.l.b16 %v1826
        %v1901 = vunpack.c.l.b16 %v1827
        %v1902 = vunpack.c.l.b16 %v1828
        %v1903 = vunpack.c.l.b16 %v1829
        %v1904 = vunpack.c.l.b16 %v1830
        %v1905 = vunpack.c.l.b16 %v1831
        %v1906 = vunpack.c.l.b16 %v1832
        %v1907 = vunpack.c.l.b16 %v1833
        %v1908 = vunpack.c.l.b16 %v1834
        %v1909 = vunpack.c.l.b16 %v1835
        %v1910 = vunpack.c.l.b16 %v1836
        %v1911 = vunpack.c.l.b16 %v1837
        %v1912 = vunpack.c.l.b16 %v1838
        %v1913 = vunpack.c.l.b16 %v1839
        %v1914 = vunpack.c.l.b16 %v1840
        %v1915 = vunpack.c.l.b16 %v1841
        %v1916 = vunpack.c.l.b16 %v1842
        %v1917 = vunpack.c.l.b16 %v1843
        %v1918 = vunpack.c.l.b16 %v1844
        %v1919 = vunpack.c.l.b16 %v1845
        %v1920 = vunpack.c.l.b16 %v1846
        %v1921 = vunpack.c.l.b16 %v1847
        %v1922 = vunpack.c.l.b16 %v1848
        %v1923 = vunpack.c.l.b16 %v1849
        %v1924 = vunpack.c.l.b16 %v1850
        %v1925 = vunpack.c.l.b16 %v1851
        %v1926 = vunpack.c.l.b16 %v1852
        %v1927 = vunpack.c.l.b16 %v1853
        %v1928 = vunpack.c.l.b16 %v1854
        %v1929 = vunpack.c.l.b16 %v1855
        %v1930 = vunpack.c.l.b16 %v1856
        %v1931 = vunpack.c.l.b16 %v1857
        %v1932 = vpack.c.b16 %v1896, %v1895
        %v1933 = vpack.c.b16 %v1898, %v1897
        %v1934 = vpack.c.b16 %v1900, %v1899
        %v1935 = vpack.c.b16 %v1902, %v1901
        %v1936 = vpack.c.b16 %v1904, %v1903
        %v1937 = vpack.c.b16 %v1906, %v1905
        %v1938 = vpack.c.b16 %v1908, %v1907
        %v1939 = vpack.c.b16 %v1910, %v1909
        %v1940 = vpack.c.b16 %v1912, %v1911
        %v1941 = vpack.c.b16 %v1914, %v1913
        %v1942 = vpack.c.b16 %v1916, %v1915
        %v1943 = vpack.c.b16 %v1918, %v1917
        %v1944 = vpack.c.b16 %v1920, %v1919
        %v1945 = vpack.c.b16 %v1922, %v1921
        %v1946 = vpack.c.b16 %v1924, %v1923
        %v1947 = vpack.c.b16 %v1926, %v1925
        %v1948 = vpack.c.b16 %v1928, %v1927
        %v1949 = vpack.c.b16 %v1930, %v1929
        %v1950 = vpack.c.b16 %v1931, %v1931
        %v1951 = vrot.slane %v1932, 2
        %v1952 = vrot.slane %v1933, 2
        %v1953 = vsel %vm1710, %v1951, %v1952
        %v1954 = vrot.slane %v1934, 2
        %v1955 = vsel %vm1710, %v1952, %v1954
        %v1956 = vrot.slane %v1935, 2
        %v1957 = vsel %vm1710, %v1954, %v1956
        %v1958 = vrot.slane %v1936, 2
        %v1959 = vsel %vm1710, %v1956, %v1958
        %v1960 = vrot.slane %v1937, 2
        %v1961 = vsel %vm1710, %v1958, %v1960
        %v1962 = vrot.slane %v1938, 2
        %v1963 = vsel %vm1710, %v1960, %v1962
        %v1964 = vrot.slane %v1939, 2
        %v1965 = vsel %vm1710, %v1962, %v1964
        %v1966 = vrot.slane %v1940, 2
        %v1967 = vsel %vm1710, %v1964, %v1966
        %v1968 = vrot.slane %v1941, 2
        %v1969 = vsel %vm1710, %v1966, %v1968
        %v1970 = vrot.slane %v1942, 2
        %v1971 = vsel %vm1710, %v1968, %v1970
        %v1972 = vrot.slane %v1943, 2
        %v1973 = vsel %vm1710, %v1970, %v1972
        %v1974 = vrot.slane %v1944, 2
        %v1975 = vsel %vm1710, %v1972, %v1974
        %v1976 = vrot.slane %v1945, 2
        %v1977 = vsel %vm1710, %v1974, %v1976
        %v1978 = vrot.slane %v1946, 2
        %v1979 = vsel %vm1710, %v1976, %v1978
        %v1980 = vrot.slane %v1947, 2
        %v1981 = vsel %vm1710, %v1978, %v1980
        %v1982 = vrot.slane %v1948, 2
        %v1983 = vsel %vm1710, %v1980, %v1982
        %v1984 = vrot.slane %v1949, 2
        %v1985 = vsel %vm1710, %v1982, %v1984
        %v1986 = vrot.slane %v1950, 2
        %v1987 = vsel %vm1710, %v1984, %v1986
        %1988 = vrot.lane.b32.xlu0 %v1953, 24
        %v1989 = vpop.permute.xlu0 %1988
        %1990 = vrot.lane.b32.xlu0 %v1955, 24
        %v1991 = vpop.permute.xlu0 %1990
        %1992 = vrot.lane.b32.xlu0 %v1957, 24
        %v1993 = vpop.permute.xlu0 %1992
        %1994 = vrot.lane.b32.xlu0 %v1959, 24
        %v1995 = vpop.permute.xlu0 %1994
        %1996 = vrot.lane.b32.xlu0 %v1961, 24
        %v1997 = vpop.permute.xlu0 %1996
        %1998 = vrot.lane.b32.xlu0 %v1963, 24
        %v1999 = vpop.permute.xlu0 %1998
        %2000 = vrot.lane.b32.xlu0 %v1965, 24
        %v2001 = vpop.permute.xlu0 %2000
        %2002 = vrot.lane.b32.xlu0 %v1967, 24
        %v2003 = vpop.permute.xlu0 %2002
        %2004 = vrot.lane.b32.xlu0 %v1969, 24
        %v2005 = vpop.permute.xlu0 %2004
        %2006 = vrot.lane.b32.xlu0 %v1971, 24
        %v2007 = vpop.permute.xlu0 %2006
        %2008 = vrot.lane.b32.xlu0 %v1973, 24
        %v2009 = vpop.permute.xlu0 %2008
        %2010 = vrot.lane.b32.xlu0 %v1975, 24
        %v2011 = vpop.permute.xlu0 %2010
        %2012 = vrot.lane.b32.xlu0 %v1977, 24
        %v2013 = vpop.permute.xlu0 %2012
        %2014 = vrot.lane.b32.xlu0 %v1979, 24
        %v2015 = vpop.permute.xlu0 %2014
        %2016 = vrot.lane.b32.xlu0 %v1981, 24
        %v2017 = vpop.permute.xlu0 %2016
        %2018 = vrot.lane.b32.xlu0 %v1983, 24
        %v2019 = vpop.permute.xlu0 %2018
        %2020 = vrot.lane.b32.xlu0 %v1985, 24
        %v2021 = vpop.permute.xlu0 %2020
        %2022 = vrot.lane.b32.xlu0 %v1987, 24
        %v2023 = vpop.permute.xlu0 %2022
        %vm2042 = vcmask 228544
        %2043 = vst.msk [vmem:[#allocation2] sm:$0xff] %vm2042, %v1989
        %2044 = vst.msk [vmem:[#allocation2 + $0x8] sm:$0xff] %vm2042, %v1991
        %2045 = vst.msk [vmem:[#allocation2 + $0x10] sm:$0xff] %vm2042, %v1993
        %2046 = vst.msk [vmem:[#allocation2 + $0x18] sm:$0xff] %vm2042, %v1995
        %2047 = vst.msk [vmem:[#allocation2 + $0x20] sm:$0xff] %vm2042, %v1997
        %2048 = vst.msk [vmem:[#allocation2 + $0x28] sm:$0xff] %vm2042, %v1999
        %2049 = vst.msk [vmem:[#allocation2 + $0x30] sm:$0xff] %vm2042, %v2001
        %2050 = vst.msk [vmem:[#allocation2 + $0x38] sm:$0xff] %vm2042, %v2003
        %2051 = vst.msk [vmem:[#allocation2 + $0x40] sm:$0xff] %vm2042, %v2005
        %2052 = vst.msk [vmem:[#allocation2 + $0x48] sm:$0xff] %vm2042, %v2007
        %2053 = vst.msk [vmem:[#allocation2 + $0x50] sm:$0xff] %vm2042, %v2009
        %2054 = vst.msk [vmem:[#allocation2 + $0x58] sm:$0xff] %vm2042, %v2011
        %2055 = vst.msk [vmem:[#allocation2 + $0x60] sm:$0xff] %vm2042, %v2013
        %2056 = vst.msk [vmem:[#allocation2 + $0x68] sm:$0xff] %vm2042, %v2015
        %2057 = vst.msk [vmem:[#allocation2 + $0x70] sm:$0xff] %vm2042, %v2017
        %2058 = vst.msk [vmem:[#allocation2 + $0x78] sm:$0xff] %vm2042, %v2019
        %2059 = vst.msk [vmem:[#allocation2 + $0x80] sm:$0xff] %vm2042, %v2021
        %2060 = vst.msk [vmem:[#allocation2 + $0x88] sm:$0xff] %vm2042, %v2023
        %v2061 = vld [vmem:[%s203 + $0x10] sm:$0xc]
        %v2062 = vld [vmem:[%s203 + $0x14] sm:$0xf]
        %v2063 = vld [vmem:[%s203 + $0x18] sm:$0xf]
        %v2064 = vld [vmem:[%s203 + $0x1c] sm:$0xf]
        %v2065 = vld [vmem:[%s203 + $0x20] sm:$0xf]
        %v2066 = vld [vmem:[%s203 + $0x24] sm:$0xf]
        %v2067 = vld [vmem:[%s203 + $0x28] sm:$0xf]
        %v2068 = vld [vmem:[%s203 + $0x2c] sm:$0xf]
        %v2069 = vld [vmem:[%s203 + $0x30] sm:$0xf]
        %v2070 = vld [vmem:[%s203 + $0x34] sm:$0xf]
        %v2071 = vld [vmem:[%s203 + $0x38] sm:$0xf]
        %v2072 = vld [vmem:[%s203 + $0x3c] sm:$0xf]
        %v2073 = vld [vmem:[%s203 + $0x40] sm:$0xf]
        %v2074 = vld [vmem:[%s203 + $0x44] sm:$0xf]
        %v2075 = vld [vmem:[%s203 + $0x48] sm:$0xf]
        %v2076 = vld [vmem:[%s203 + $0x4c] sm:$0xf]
        %v2077 = vld [vmem:[%s203 + $0x50] sm:$0xf]
        %v2078 = vld [vmem:[%s203 + $0x54] sm:$0xf]
        %v2079 = vld [vmem:[%s203 + $0x58] sm:$0xf]
        %v2080 = vld [vmem:[%s203 + $0x5c] sm:$0xf]
        %v2081 = vld [vmem:[%s203 + $0x60] sm:$0xf]
        %v2082 = vld [vmem:[%s203 + $0x64] sm:$0xf]
        %v2083 = vld [vmem:[%s203 + $0x68] sm:$0xf]
        %v2084 = vld [vmem:[%s203 + $0x6c] sm:$0xf]
        %v2085 = vld [vmem:[%s203 + $0x70] sm:$0xf]
        %v2086 = vld [vmem:[%s203 + $0x74] sm:$0xf]
        %v2087 = vld [vmem:[%s203 + $0x78] sm:$0xf]
        %v2088 = vld [vmem:[%s203 + $0x7c] sm:$0xf]
        %v2089 = vld [vmem:[%s203 + $0x80] sm:$0xf]
        %v2090 = vld [vmem:[%s203 + $0x84] sm:$0xf]
        %v2091 = vld [vmem:[%s203 + $0x88] sm:$0xf]
        %v2092 = vld [vmem:[%s203 + $0x8c] sm:$0xf]
        %v2093 = vld [vmem:[%s203 + $0x90] sm:$0xf]
        %v2094 = vld [vmem:[%s203 + $0x94] sm:$0xf]
        %v2095 = vld [vmem:[%s203 + $0x98] sm:$0xf]
        %v2096 = vld [vmem:[%s203 + $0x9c] sm:$0xf]
        %v2097 = vld [vmem:[%s203 + $0xa0] sm:$0x7]
        %v2135 = vunpack.c.l.b16 %v2061
        %v2136 = vunpack.c.l.b16 %v2062
        %v2137 = vunpack.c.l.b16 %v2063
        %v2138 = vunpack.c.l.b16 %v2064
        %v2139 = vunpack.c.l.b16 %v2065
        %v2140 = vunpack.c.l.b16 %v2066
        %v2141 = vunpack.c.l.b16 %v2067
        %v2142 = vunpack.c.l.b16 %v2068
        %v2143 = vunpack.c.l.b16 %v2069
        %v2144 = vunpack.c.l.b16 %v2070
        %v2145 = vunpack.c.l.b16 %v2071
        %v2146 = vunpack.c.l.b16 %v2072
        %v2147 = vunpack.c.l.b16 %v2073
        %v2148 = vunpack.c.l.b16 %v2074
        %v2149 = vunpack.c.l.b16 %v2075
        %v2150 = vunpack.c.l.b16 %v2076
        %v2151 = vunpack.c.l.b16 %v2077
        %v2152 = vunpack.c.l.b16 %v2078
        %v2153 = vunpack.c.l.b16 %v2079
        %v2154 = vunpack.c.l.b16 %v2080
        %v2155 = vunpack.c.l.b16 %v2081
        %v2156 = vunpack.c.l.b16 %v2082
        %v2157 = vunpack.c.l.b16 %v2083
        %v2158 = vunpack.c.l.b16 %v2084
        %v2159 = vunpack.c.l.b16 %v2085
        %v2160 = vunpack.c.l.b16 %v2086
        %v2161 = vunpack.c.l.b16 %v2087
        %v2162 = vunpack.c.l.b16 %v2088
        %v2163 = vunpack.c.l.b16 %v2089
        %v2164 = vunpack.c.l.b16 %v2090
        %v2165 = vunpack.c.l.b16 %v2091
        %v2166 = vunpack.c.l.b16 %v2092
        %v2167 = vunpack.c.l.b16 %v2093
        %v2168 = vunpack.c.l.b16 %v2094
        %v2169 = vunpack.c.l.b16 %v2095
        %v2170 = vunpack.c.l.b16 %v2096
        %v2171 = vunpack.c.l.b16 %v2097
        %v2172 = vpack.c.b16 %v2136, %v2135
        %v2173 = vpack.c.b16 %v2138, %v2137
        %v2174 = vpack.c.b16 %v2140, %v2139
        %v2175 = vpack.c.b16 %v2142, %v2141
        %v2176 = vpack.c.b16 %v2144, %v2143
        %v2177 = vpack.c.b16 %v2146, %v2145
        %v2178 = vpack.c.b16 %v2148, %v2147
        %v2179 = vpack.c.b16 %v2150, %v2149
        %v2180 = vpack.c.b16 %v2152, %v2151
        %v2181 = vpack.c.b16 %v2154, %v2153
        %v2182 = vpack.c.b16 %v2156, %v2155
        %v2183 = vpack.c.b16 %v2158, %v2157
        %v2184 = vpack.c.b16 %v2160, %v2159
        %v2185 = vpack.c.b16 %v2162, %v2161
        %v2186 = vpack.c.b16 %v2164, %v2163
        %v2187 = vpack.c.b16 %v2166, %v2165
        %v2188 = vpack.c.b16 %v2168, %v2167
        %v2189 = vpack.c.b16 %v2170, %v2169
        %v2190 = vpack.c.b16 %v2171, %v2171
        %vm2191 = vsmask.f32 5376
        %v2193 = vshrl.u32 %v2172, 16
        %v2195 = vrot.slane %v2193, 2
        %v2196 = vshll.u32 %v2172, 16
        %v2198 = vrot.slane %v2196, 3
        %v2199 = vor.u32 %v2195, %v2198
        %v2201 = vshrl.u32 %v2173, 16
        %v2203 = vrot.slane %v2201, 2
        %v2204 = vshll.u32 %v2173, 16
        %v2206 = vrot.slane %v2204, 3
        %v2207 = vor.u32 %v2203, %v2206
        %v2208 = vsel %vm2191, %v2199, %v2207
        %v2210 = vshrl.u32 %v2174, 16
        %v2212 = vrot.slane %v2210, 2
        %v2213 = vshll.u32 %v2174, 16
        %v2215 = vrot.slane %v2213, 3
        %v2216 = vor.u32 %v2212, %v2215
        %v2217 = vsel %vm2191, %v2207, %v2216
        %v2219 = vshrl.u32 %v2175, 16
        %v2221 = vrot.slane %v2219, 2
        %v2222 = vshll.u32 %v2175, 16
        %v2224 = vrot.slane %v2222, 3
        %v2225 = vor.u32 %v2221, %v2224
        %v2226 = vsel %vm2191, %v2216, %v2225
        %v2228 = vshrl.u32 %v2176, 16
        %v2230 = vrot.slane %v2228, 2
        %v2231 = vshll.u32 %v2176, 16
        %v2233 = vrot.slane %v2231, 3
        %v2234 = vor.u32 %v2230, %v2233
        %v2235 = vsel %vm2191, %v2225, %v2234
        %v2237 = vshrl.u32 %v2177, 16
        %v2239 = vrot.slane %v2237, 2
        %v2240 = vshll.u32 %v2177, 16
        %v2242 = vrot.slane %v2240, 3
        %v2243 = vor.u32 %v2239, %v2242
        %v2244 = vsel %vm2191, %v2234, %v2243
        %v2246 = vshrl.u32 %v2178, 16
        %v2248 = vrot.slane %v2246, 2
        %v2249 = vshll.u32 %v2178, 16
        %v2251 = vrot.slane %v2249, 3
        %v2252 = vor.u32 %v2248, %v2251
        %v2253 = vsel %vm2191, %v2243, %v2252
        %v2255 = vshrl.u32 %v2179, 16
        %v2257 = vrot.slane %v2255, 2
        %v2258 = vshll.u32 %v2179, 16
        %v2260 = vrot.slane %v2258, 3
        %v2261 = vor.u32 %v2257, %v2260
        %v2262 = vsel %vm2191, %v2252, %v2261
        %v2264 = vshrl.u32 %v2180, 16
        %v2266 = vrot.slane %v2264, 2
        %v2267 = vshll.u32 %v2180, 16
        %v2269 = vrot.slane %v2267, 3
        %v2270 = vor.u32 %v2266, %v2269
        %v2271 = vsel %vm2191, %v2261, %v2270
        %v2273 = vshrl.u32 %v2181, 16
        %v2275 = vrot.slane %v2273, 2
        %v2276 = vshll.u32 %v2181, 16
        %v2278 = vrot.slane %v2276, 3
        %v2279 = vor.u32 %v2275, %v2278
        %v2280 = vsel %vm2191, %v2270, %v2279
        %v2282 = vshrl.u32 %v2182, 16
        %v2284 = vrot.slane %v2282, 2
        %v2285 = vshll.u32 %v2182, 16
        %v2287 = vrot.slane %v2285, 3
        %v2288 = vor.u32 %v2284, %v2287
        %v2289 = vsel %vm2191, %v2279, %v2288
        %v2291 = vshrl.u32 %v2183, 16
        %v2293 = vrot.slane %v2291, 2
        %v2294 = vshll.u32 %v2183, 16
        %v2296 = vrot.slane %v2294, 3
        %v2297 = vor.u32 %v2293, %v2296
        %v2298 = vsel %vm2191, %v2288, %v2297
        %v2300 = vshrl.u32 %v2184, 16
        %v2302 = vrot.slane %v2300, 2
        %v2303 = vshll.u32 %v2184, 16
        %v2305 = vrot.slane %v2303, 3
        %v2306 = vor.u32 %v2302, %v2305
        %v2307 = vsel %vm2191, %v2297, %v2306
        %v2309 = vshrl.u32 %v2185, 16
        %v2311 = vrot.slane %v2309, 2
        %v2312 = vshll.u32 %v2185, 16
        %v2314 = vrot.slane %v2312, 3
        %v2315 = vor.u32 %v2311, %v2314
        %v2316 = vsel %vm2191, %v2306, %v2315
        %v2318 = vshrl.u32 %v2186, 16
        %v2320 = vrot.slane %v2318, 2
        %v2321 = vshll.u32 %v2186, 16
        %v2323 = vrot.slane %v2321, 3
        %v2324 = vor.u32 %v2320, %v2323
        %v2325 = vsel %vm2191, %v2315, %v2324
        %v2327 = vshrl.u32 %v2187, 16
        %v2329 = vrot.slane %v2327, 2
        %v2330 = vshll.u32 %v2187, 16
        %v2332 = vrot.slane %v2330, 3
        %v2333 = vor.u32 %v2329, %v2332
        %v2334 = vsel %vm2191, %v2324, %v2333
        %v2336 = vshrl.u32 %v2188, 16
        %v2338 = vrot.slane %v2336, 2
        %v2339 = vshll.u32 %v2188, 16
        %v2341 = vrot.slane %v2339, 3
        %v2342 = vor.u32 %v2338, %v2341
        %v2343 = vsel %vm2191, %v2333, %v2342
        %v2345 = vshrl.u32 %v2189, 16
        %v2347 = vrot.slane %v2345, 2
        %v2348 = vshll.u32 %v2189, 16
        %v2350 = vrot.slane %v2348, 3
        %v2351 = vor.u32 %v2347, %v2350
        %v2352 = vsel %vm2191, %v2342, %v2351
        %v2354 = vshrl.u32 %v2190, 16
        %v2356 = vrot.slane %v2354, 2
        %v2357 = vshll.u32 %v2190, 16
        %v2359 = vrot.slane %v2357, 3
        %v2360 = vor.u32 %v2356, %v2359
        %v2361 = vsel %vm2191, %v2351, %v2360
        %2362 = vrot.lane.b32.xlu0 %v2208, 28
        %v2363 = vpop.permute.xlu0 %2362
        %2364 = vrot.lane.b32.xlu0 %v2217, 28
        %v2365 = vpop.permute.xlu0 %2364
        %2366 = vrot.lane.b32.xlu0 %v2226, 28
        %v2367 = vpop.permute.xlu0 %2366
        %2368 = vrot.lane.b32.xlu0 %v2235, 28
        %v2369 = vpop.permute.xlu0 %2368
        %2370 = vrot.lane.b32.xlu0 %v2244, 28
        %v2371 = vpop.permute.xlu0 %2370
        %2372 = vrot.lane.b32.xlu0 %v2253, 28
        %v2373 = vpop.permute.xlu0 %2372
        %2374 = vrot.lane.b32.xlu0 %v2262, 28
        %v2375 = vpop.permute.xlu0 %2374
        %2376 = vrot.lane.b32.xlu0 %v2271, 28
        %v2377 = vpop.permute.xlu0 %2376
        %2378 = vrot.lane.b32.xlu0 %v2280, 28
        %v2379 = vpop.permute.xlu0 %2378
        %2380 = vrot.lane.b32.xlu0 %v2289, 28
        %v2381 = vpop.permute.xlu0 %2380
        %2382 = vrot.lane.b32.xlu0 %v2298, 28
        %v2383 = vpop.permute.xlu0 %2382
        %2384 = vrot.lane.b32.xlu0 %v2307, 28
        %v2385 = vpop.permute.xlu0 %2384
        %2386 = vrot.lane.b32.xlu0 %v2316, 28
        %v2387 = vpop.permute.xlu0 %2386
        %2388 = vrot.lane.b32.xlu0 %v2325, 28
        %v2389 = vpop.permute.xlu0 %2388
        %2390 = vrot.lane.b32.xlu0 %v2334, 28
        %v2391 = vpop.permute.xlu0 %2390
        %2392 = vrot.lane.b32.xlu0 %v2343, 28
        %v2393 = vpop.permute.xlu0 %2392
        %2394 = vrot.lane.b32.xlu0 %v2352, 28
        %v2395 = vpop.permute.xlu0 %2394
        %2396 = vrot.lane.b32.xlu0 %v2361, 28
        %v2397 = vpop.permute.xlu0 %2396
        %vm2416 = vcmask 261344
        %2417 = vst.msk [vmem:[#allocation2] sm:$0xff] %vm2416, %v2363
        %2418 = vst.msk [vmem:[#allocation2 + $0x8] sm:$0xff] %vm2416, %v2365
        %2419 = vst.msk [vmem:[#allocation2 + $0x10] sm:$0xff] %vm2416, %v2367
        %2420 = vst.msk [vmem:[#allocation2 + $0x18] sm:$0xff] %vm2416, %v2369
        %2421 = vst.msk [vmem:[#allocation2 + $0x20] sm:$0xff] %vm2416, %v2371
        %2422 = vst.msk [vmem:[#allocation2 + $0x28] sm:$0xff] %vm2416, %v2373
        %2423 = vst.msk [vmem:[#allocation2 + $0x30] sm:$0xff] %vm2416, %v2375
        %2424 = vst.msk [vmem:[#allocation2 + $0x38] sm:$0xff] %vm2416, %v2377
        %2425 = vst.msk [vmem:[#allocation2 + $0x40] sm:$0xff] %vm2416, %v2379
        %2426 = vst.msk [vmem:[#allocation2 + $0x48] sm:$0xff] %vm2416, %v2381
        %2427 = vst.msk [vmem:[#allocation2 + $0x50] sm:$0xff] %vm2416, %v2383
        %2428 = vst.msk [vmem:[#allocation2 + $0x58] sm:$0xff] %vm2416, %v2385
        %2429 = vst.msk [vmem:[#allocation2 + $0x60] sm:$0xff] %vm2416, %v2387
        %2430 = vst.msk [vmem:[#allocation2 + $0x68] sm:$0xff] %vm2416, %v2389
        %2431 = vst.msk [vmem:[#allocation2 + $0x70] sm:$0xff] %vm2416, %v2391
        %2432 = vst.msk [vmem:[#allocation2 + $0x78] sm:$0xff] %vm2416, %v2393
        %2433 = vst.msk [vmem:[#allocation2 + $0x80] sm:$0xff] %vm2416, %v2395
        %2434 = vst.msk [vmem:[#allocation2 + $0x88] sm:$0xff] %vm2416, %v2397
        %v2435 = vld [vmem:[%s203 + $0x10] sm:$0x8]
        %v2436 = vld [vmem:[%s203 + $0x14] sm:$0xf]
        %v2437 = vld [vmem:[%s203 + $0x18] sm:$0xf]
        %v2438 = vld [vmem:[%s203 + $0x1c] sm:$0xf]
        %v2439 = vld [vmem:[%s203 + $0x20] sm:$0xf]
        %v2440 = vld [vmem:[%s203 + $0x24] sm:$0xf]
        %v2441 = vld [vmem:[%s203 + $0x28] sm:$0xf]
        %v2442 = vld [vmem:[%s203 + $0x2c] sm:$0xf]
        %v2443 = vld [vmem:[%s203 + $0x30] sm:$0xf]
        %v2444 = vld [vmem:[%s203 + $0x34] sm:$0xf]
        %v2445 = vld [vmem:[%s203 + $0x38] sm:$0xf]
        %v2446 = vld [vmem:[%s203 + $0x3c] sm:$0xf]
        %v2447 = vld [vmem:[%s203 + $0x40] sm:$0xf]
        %v2448 = vld [vmem:[%s203 + $0x44] sm:$0xf]
        %v2449 = vld [vmem:[%s203 + $0x48] sm:$0xf]
        %v2450 = vld [vmem:[%s203 + $0x4c] sm:$0xf]
        %v2451 = vld [vmem:[%s203 + $0x50] sm:$0xf]
        %v2452 = vld [vmem:[%s203 + $0x54] sm:$0xf]
        %v2453 = vld [vmem:[%s203 + $0x58] sm:$0xf]
        %v2454 = vld [vmem:[%s203 + $0x5c] sm:$0xf]
        %v2455 = vld [vmem:[%s203 + $0x60] sm:$0xf]
        %v2456 = vld [vmem:[%s203 + $0x64] sm:$0xf]
        %v2457 = vld [vmem:[%s203 + $0x68] sm:$0xf]
        %v2458 = vld [vmem:[%s203 + $0x6c] sm:$0xf]
        %v2459 = vld [vmem:[%s203 + $0x70] sm:$0xf]
        %v2460 = vld [vmem:[%s203 + $0x74] sm:$0xf]
        %v2461 = vld [vmem:[%s203 + $0x78] sm:$0xf]
        %v2462 = vld [vmem:[%s203 + $0x7c] sm:$0xf]
        %v2463 = vld [vmem:[%s203 + $0x80] sm:$0xf]
        %v2464 = vld [vmem:[%s203 + $0x84] sm:$0xf]
        %v2465 = vld [vmem:[%s203 + $0x88] sm:$0xf]
        %v2466 = vld [vmem:[%s203 + $0x8c] sm:$0xf]
        %v2467 = vld [vmem:[%s203 + $0x90] sm:$0xf]
        %v2468 = vld [vmem:[%s203 + $0x94] sm:$0xf]
        %v2469 = vld [vmem:[%s203 + $0x98] sm:$0xf]
        %v2470 = vld [vmem:[%s203 + $0x9c] sm:$0xf]
        %v2471 = vld [vmem:[%s203 + $0xa0] sm:$0x7]
        %v2509 = vunpack.c.l.b16 %v2435
        %v2510 = vunpack.c.l.b16 %v2436
        %v2511 = vunpack.c.l.b16 %v2437
        %v2512 = vunpack.c.l.b16 %v2438
        %v2513 = vunpack.c.l.b16 %v2439
        %v2514 = vunpack.c.l.b16 %v2440
        %v2515 = vunpack.c.l.b16 %v2441
        %v2516 = vunpack.c.l.b16 %v2442
        %v2517 = vunpack.c.l.b16 %v2443
        %v2518 = vunpack.c.l.b16 %v2444
        %v2519 = vunpack.c.l.b16 %v2445
        %v2520 = vunpack.c.l.b16 %v2446
        %v2521 = vunpack.c.l.b16 %v2447
        %v2522 = vunpack.c.l.b16 %v2448
        %v2523 = vunpack.c.l.b16 %v2449
        %v2524 = vunpack.c.l.b16 %v2450
        %v2525 = vunpack.c.l.b16 %v2451
        %v2526 = vunpack.c.l.b16 %v2452
        %v2527 = vunpack.c.l.b16 %v2453
        %v2528 = vunpack.c.l.b16 %v2454
        %v2529 = vunpack.c.l.b16 %v2455
        %v2530 = vunpack.c.l.b16 %v2456
        %v2531 = vunpack.c.l.b16 %v2457
        %v2532 = vunpack.c.l.b16 %v2458
        %v2533 = vunpack.c.l.b16 %v2459
        %v2534 = vunpack.c.l.b16 %v2460
        %v2535 = vunpack.c.l.b16 %v2461
        %v2536 = vunpack.c.l.b16 %v2462
        %v2537 = vunpack.c.l.b16 %v2463
        %v2538 = vunpack.c.l.b16 %v2464
        %v2539 = vunpack.c.l.b16 %v2465
        %v2540 = vunpack.c.l.b16 %v2466
        %v2541 = vunpack.c.l.b16 %v2467
        %v2542 = vunpack.c.l.b16 %v2468
        %v2543 = vunpack.c.l.b16 %v2469
        %v2544 = vunpack.c.l.b16 %v2470
        %v2545 = vunpack.c.l.b16 %v2471
        %v2546 = vpack.c.b16 %v2510, %v2509
        %v2547 = vpack.c.b16 %v2512, %v2511
        %v2548 = vpack.c.b16 %v2514, %v2513
        %v2549 = vpack.c.b16 %v2516, %v2515
        %v2550 = vpack.c.b16 %v2518, %v2517
        %v2551 = vpack.c.b16 %v2520, %v2519
        %v2552 = vpack.c.b16 %v2522, %v2521
        %v2553 = vpack.c.b16 %v2524, %v2523
        %v2554 = vpack.c.b16 %v2526, %v2525
        %v2555 = vpack.c.b16 %v2528, %v2527
        %v2556 = vpack.c.b16 %v2530, %v2529
        %v2557 = vpack.c.b16 %v2532, %v2531
        %v2558 = vpack.c.b16 %v2534, %v2533
        %v2559 = vpack.c.b16 %v2536, %v2535
        %v2560 = vpack.c.b16 %v2538, %v2537
        %v2561 = vpack.c.b16 %v2540, %v2539
        %v2562 = vpack.c.b16 %v2542, %v2541
        %v2563 = vpack.c.b16 %v2544, %v2543
        %v2564 = vpack.c.b16 %v2545, %v2545
        %vm2565 = vcmask 1044480
        %v2566 = vrot.slane %v2546, 3
        %v2567 = vrot.slane %v2547, 3
        %v2568 = vsel %vm2565, %v2566, %v2567
        %v2569 = vrot.slane %v2548, 3
        %v2570 = vsel %vm2565, %v2567, %v2569
        %v2571 = vrot.slane %v2549, 3
        %v2572 = vsel %vm2565, %v2569, %v2571
        %v2573 = vrot.slane %v2550, 3
        %v2574 = vsel %vm2565, %v2571, %v2573
        %v2575 = vrot.slane %v2551, 3
        %v2576 = vsel %vm2565, %v2573, %v2575
        %v2577 = vrot.slane %v2552, 3
        %v2578 = vsel %vm2565, %v2575, %v2577
        %v2579 = vrot.slane %v2553, 3
        %v2580 = vsel %vm2565, %v2577, %v2579
        %v2581 = vrot.slane %v2554, 3
        %v2582 = vsel %vm2565, %v2579, %v2581
        %v2583 = vrot.slane %v2555, 3
        %v2584 = vsel %vm2565, %v2581, %v2583
        %v2585 = vrot.slane %v2556, 3
        %v2586 = vsel %vm2565, %v2583, %v2585
        %v2587 = vrot.slane %v2557, 3
        %v2588 = vsel %vm2565, %v2585, %v2587
        %v2589 = vrot.slane %v2558, 3
        %v2590 = vsel %vm2565, %v2587, %v2589
        %v2591 = vrot.slane %v2559, 3
        %v2592 = vsel %vm2565, %v2589, %v2591
        %v2593 = vrot.slane %v2560, 3
        %v2594 = vsel %vm2565, %v2591, %v2593
        %v2595 = vrot.slane %v2561, 3
        %v2596 = vsel %vm2565, %v2593, %v2595
        %v2597 = vrot.slane %v2562, 3
        %v2598 = vsel %vm2565, %v2595, %v2597
        %v2599 = vrot.slane %v2563, 3
        %v2600 = vsel %vm2565, %v2597, %v2599
        %v2601 = vrot.slane %v2564, 3
        %v2602 = vsel %vm2565, %v2599, %v2601
        %2603 = vrot.lane.b32.xlu0 %v2568, 32
        %v2604 = vpop.permute.xlu0 %2603
        %2605 = vrot.lane.b32.xlu0 %v2570, 32
        %v2606 = vpop.permute.xlu0 %2605
        %2607 = vrot.lane.b32.xlu0 %v2572, 32
        %v2608 = vpop.permute.xlu0 %2607
        %2609 = vrot.lane.b32.xlu0 %v2574, 32
        %v2610 = vpop.permute.xlu0 %2609
        %2611 = vrot.lane.b32.xlu0 %v2576, 32
        %v2612 = vpop.permute.xlu0 %2611
        %2613 = vrot.lane.b32.xlu0 %v2578, 32
        %v2614 = vpop.permute.xlu0 %2613
        %2615 = vrot.lane.b32.xlu0 %v2580, 32
        %v2616 = vpop.permute.xlu0 %2615
        %2617 = vrot.lane.b32.xlu0 %v2582, 32
        %v2618 = vpop.permute.xlu0 %2617
        %2619 = vrot.lane.b32.xlu0 %v2584, 32
        %v2620 = vpop.permute.xlu0 %2619
        %2621 = vrot.lane.b32.xlu0 %v2586, 32
        %v2622 = vpop.permute.xlu0 %2621
        %2623 = vrot.lane.b32.xlu0 %v2588, 32
        %v2624 = vpop.permute.xlu0 %2623
        %2625 = vrot.lane.b32.xlu0 %v2590, 32
        %v2626 = vpop.permute.xlu0 %2625
        %2627 = vrot.lane.b32.xlu0 %v2592, 32
        %v2628 = vpop.permute.xlu0 %2627
        %2629 = vrot.lane.b32.xlu0 %v2594, 32
        %v2630 = vpop.permute.xlu0 %2629
        %2631 = vrot.lane.b32.xlu0 %v2596, 32
        %v2632 = vpop.permute.xlu0 %2631
        %2633 = vrot.lane.b32.xlu0 %v2598, 32
        %v2634 = vpop.permute.xlu0 %2633
        %2635 = vrot.lane.b32.xlu0 %v2600, 32
        %v2636 = vpop.permute.xlu0 %2635
        %2637 = vrot.lane.b32.xlu0 %v2602, 32
        %v2638 = vpop.permute.xlu0 %2637
        %vm2657 = vcmask 294144
        %2658 = vst.msk [vmem:[#allocation2] sm:$0xff] %vm2657, %v2604
        %2659 = vst.msk [vmem:[#allocation2 + $0x8] sm:$0xff] %vm2657, %v2606
        %2660 = vst.msk [vmem:[#allocation2 + $0x10] sm:$0xff] %vm2657, %v2608
        %2661 = vst.msk [vmem:[#allocation2 + $0x18] sm:$0xff] %vm2657, %v2610
        %2662 = vst.msk [vmem:[#allocation2 + $0x20] sm:$0xff] %vm2657, %v2612
        %2663 = vst.msk [vmem:[#allocation2 + $0x28] sm:$0xff] %vm2657, %v2614
        %2664 = vst.msk [vmem:[#allocation2 + $0x30] sm:$0xff] %vm2657, %v2616
        %2665 = vst.msk [vmem:[#allocation2 + $0x38] sm:$0xff] %vm2657, %v2618
        %2666 = vst.msk [vmem:[#allocation2 + $0x40] sm:$0xff] %vm2657, %v2620
        %2667 = vst.msk [vmem:[#allocation2 + $0x48] sm:$0xff] %vm2657, %v2622
        %2668 = vst.msk [vmem:[#allocation2 + $0x50] sm:$0xff] %vm2657, %v2624
        %2669 = vst.msk [vmem:[#allocation2 + $0x58] sm:$0xff] %vm2657, %v2626
        %2670 = vst.msk [vmem:[#allocation2 + $0x60] sm:$0xff] %vm2657, %v2628
        %2671 = vst.msk [vmem:[#allocation2 + $0x68] sm:$0xff] %vm2657, %v2630
        %2672 = vst.msk [vmem:[#allocation2 + $0x70] sm:$0xff] %vm2657, %v2632
        %2673 = vst.msk [vmem:[#allocation2 + $0x78] sm:$0xff] %vm2657, %v2634
        %2674 = vst.msk [vmem:[#allocation2 + $0x80] sm:$0xff] %vm2657, %v2636
        %2675 = vst.msk [vmem:[#allocation2 + $0x88] sm:$0xff] %vm2657, %v2638
        %v2676 = vld [vmem:[#allocation2] sm:$0xff]
        %v2677 = vld [vmem:[#allocation2 + $0x8] sm:$0xff]
        %v2678 = vld [vmem:[#allocation2 + $0x10] sm:$0xff]
        %v2679 = vld [vmem:[#allocation2 + $0x18] sm:$0xff]
        %v2680 = vld [vmem:[#allocation2 + $0x20] sm:$0xff]
        %v2681 = vld [vmem:[#allocation2 + $0x28] sm:$0xff]
        %v2682 = vld [vmem:[#allocation2 + $0x30] sm:$0xff]
        %v2683 = vld [vmem:[#allocation2 + $0x38] sm:$0xff]
        %v2684 = vld [vmem:[#allocation2 + $0x40] sm:$0xff]
        %v2685 = vld [vmem:[#allocation2 + $0x48] sm:$0xff]
        %v2686 = vld [vmem:[#allocation2 + $0x50] sm:$0xff]
        %v2687 = vld [vmem:[#allocation2 + $0x58] sm:$0xff]
        %v2688 = vld [vmem:[#allocation2 + $0x60] sm:$0xff]
        %v2689 = vld [vmem:[#allocation2 + $0x68] sm:$0xff]
        %v2690 = vld [vmem:[#allocation2 + $0x70] sm:$0xff]
        %v2691 = vld [vmem:[#allocation2 + $0x78] sm:$0xff]
        %v2692 = vld [vmem:[#allocation2 + $0x80] sm:$0xff]
        %v2693 = vld [vmem:[#allocation2 + $0x88] sm:$0xff]
        %v2694 = vld [vmem:[%s1] sm:$0xf]
        %v2695 = vld [vmem:[%s1 + $0x4] sm:$0xf]
        %v2696 = vld [vmem:[%s1 + $0x8] sm:$0xf]
        %v2697 = vld [vmem:[%s1 + $0xc] sm:$0xf]
        %v2698 = vld [vmem:[%s1 + $0x10] sm:$0x3]
        %v2704 = vunpack.c.l.b16 %v2694
        %v2705 = vunpack.c.l.b16 %v2695
        %v2706 = vunpack.c.l.b16 %v2696
        %v2707 = vunpack.c.l.b16 %v2697
        %v2708 = vunpack.c.l.b16 %v2698
        %v2709 = vpack.c.b16 %v2705, %v2704
        %v2710 = vpack.c.b16 %v2707, %v2706
        %v2711 = vpack.c.b16 %v2708, %v2708
        %vm2714 = vcmask 293888
        %v2716 = vsel %vm2714, %v2676, 0
        %v2719 = vsel %vm2714, %v2677, 0
        %v2722 = vsel %vm2714, %v2678, 0
        %v2725 = vsel %vm2714, %v2679, 0
        %v2728 = vsel %vm2714, %v2680, 0
        %v2731 = vsel %vm2714, %v2681, 0
        %v2734 = vsel %vm2714, %v2682, 0
        %v2737 = vsel %vm2714, %v2683, 0
        %v2740 = vsel %vm2714, %v2684, 0
        %v2743 = vsel %vm2714, %v2685, 0
        %v2746 = vsel %vm2714, %v2686, 0
        %v2749 = vsel %vm2714, %v2687, 0
        %v2752 = vsel %vm2714, %v2688, 0
        %v2755 = vsel %vm2714, %v2689, 0
        %v2758 = vsel %vm2714, %v2690, 0
        %v2761 = vsel %vm2714, %v2691, 0
        %v2764 = vsel %vm2714, %v2692, 0
        %v2767 = vsel %vm2714, %v2693, 0
        %vm2769 = vcmask 1041408
        %v2771 = vsel %vm2769, %v2711, 0
        %2773 = vmatprep.subr.bf16.mxu0 0
        %2774 = vmatpush1.bf16.msra.mxu0 %v2709
        %2775 = vmatprep.subr.bf16.mxu0 0
        %2776 = vmatpush1.bf16.msra.mxu0 %v2710
        %2777 = vmatprep.subr.bf16.mxu0 0
        %2778 = vmatpush1.bf16.msra.mxu0 %v2771
        %2779 = vmatprep.subr.bf16.mxu0 0
        %2780 = vmatpush1.bf16.msra.mxu0 0
        %2781 = vmatprep.subr.bf16.mxu0 0
        %2782 = vmatpush1.bf16.msra.mxu0 0
        %2783 = vmatprep.subr.bf16.mxu0 0
        %2784 = vmatpush1.bf16.msra.mxu0 0
        %2785 = vmatprep.subr.bf16.mxu0 0
        %2786 = vmatpush1.bf16.msra.mxu0 0
        %2787 = vmatprep.subr.bf16.mxu0 0
        %2788 = vmatpush1.bf16.msra.mxu0 0
        %2789 = vmatprep.subr.bf16.mxu0 0
        %2790 = vmatpush1.bf16.msra.mxu0 0
        %2791 = vmatprep.subr.bf16.mxu0 0
        %2792 = vmatpush1.bf16.msra.mxu0 0
        %2793 = vmatprep.subr.bf16.mxu0 0
        %2794 = vmatpush1.bf16.msra.mxu0 0
        %2795 = vmatprep.subr.bf16.mxu0 0
        %2796 = vmatpush1.bf16.msra.mxu0 0
        %2797 = vmatprep.subr.bf16.mxu0 0
        %2798 = vmatpush1.bf16.msra.mxu0 0
        %2799 = vmatprep.subr.bf16.mxu0 0
        %2800 = vmatpush1.bf16.msra.mxu0 0
        %2801 = vmatprep.subr.bf16.mxu0 0
        %2802 = vmatpush1.bf16.msra.mxu0 0
        %2803 = vmatprep.subr.bf16.mxu0 0
        %2804 = vmatpush1.bf16.msra.mxu0 0
        %2805 = vmatprep.mubr.bf16.mxu0 0
        %2806 = vmatmul.mubr.bf16.gmra.mrb[0].mxu0 %v2716
        %v2807 = vpop.f32.mrb[0].mxu0
        %v2808 = vadd.f32 0.0, %v2807
        %v2809 = vpop.f32.mrb[0].mxu0
        %v2810 = vpop.f32.mrb[0].mxu0
        %v2811 = vadd.f32 0.0, %v2810
        %v2812 = vpop.f32.mrb[0].mxu0
        %2813 = vmatprep.mubr.bf16.mxu0 0
        %2814 = vmatmul.mubr.bf16.gmra.mrb[0].mxu0 %v2719
        %v2815 = vpop.f32.mrb[0].mxu0
        %v2816 = vadd.f32 0.0, %v2815
        %v2817 = vpop.f32.mrb[0].mxu0
        %v2818 = vpop.f32.mrb[0].mxu0
        %v2819 = vadd.f32 0.0, %v2818
        %v2820 = vpop.f32.mrb[0].mxu0
        %2821 = vmatprep.mubr.bf16.mxu0 0
        %2822 = vmatmul.mubr.bf16.gmra.mrb[0].mxu0 %v2722
        %v2823 = vpop.f32.mrb[0].mxu0
        %v2824 = vadd.f32 0.0, %v2823
        %v2825 = vpop.f32.mrb[0].mxu0
        %v2826 = vpop.f32.mrb[0].mxu0
        %v2827 = vadd.f32 0.0, %v2826
        %v2828 = vpop.f32.mrb[0].mxu0
        %2829 = vmatprep.mubr.bf16.mxu0 0
        %2830 = vmatmul.mubr.bf16.gmra.mrb[0].mxu0 %v2725
        %v2831 = vpop.f32.mrb[0].mxu0
        %v2832 = vadd.f32 0.0, %v2831
        %v2833 = vpop.f32.mrb[0].mxu0
        %v2834 = vpop.f32.mrb[0].mxu0
        %v2835 = vadd.f32 0.0, %v2834
        %v2836 = vpop.f32.mrb[0].mxu0
        %2837 = vmatprep.mubr.bf16.mxu0 0
        %2838 = vmatmul.mubr.bf16.gmra.mrb[0].mxu0 %v2728
        %v2839 = vpop.f32.mrb[0].mxu0
        %v2840 = vadd.f32 0.0, %v2839
        %v2841 = vpop.f32.mrb[0].mxu0
        %v2842 = vpop.f32.mrb[0].mxu0
        %v2843 = vadd.f32 0.0, %v2842
        %v2844 = vpop.f32.mrb[0].mxu0
        %2845 = vmatprep.mubr.bf16.mxu0 0
        %2846 = vmatmul.mubr.bf16.gmra.mrb[0].mxu0 %v2731
        %v2847 = vpop.f32.mrb[0].mxu0
        %v2848 = vadd.f32 0.0, %v2847
        %v2849 = vpop.f32.mrb[0].mxu0
        %v2850 = vpop.f32.mrb[0].mxu0
        %v2851 = vadd.f32 0.0, %v2850
        %v2852 = vpop.f32.mrb[0].mxu0
        %2853 = vmatprep.mubr.bf16.mxu0 0
        %2854 = vmatmul.mubr.bf16.gmra.mrb[0].mxu0 %v2734
        %v2855 = vpop.f32.mrb[0].mxu0
        %v2856 = vadd.f32 0.0, %v2855
        %v2857 = vpop.f32.mrb[0].mxu0
        %v2858 = vpop.f32.mrb[0].mxu0
        %v2859 = vadd.f32 0.0, %v2858
        %v2860 = vpop.f32.mrb[0].mxu0
        %2861 = vmatprep.mubr.bf16.mxu0 0
        %2862 = vmatmul.mubr.bf16.gmra.mrb[0].mxu0 %v2737
        %v2863 = vpop.f32.mrb[0].mxu0
        %v2864 = vadd.f32 0.0, %v2863
        %v2865 = vpop.f32.mrb[0].mxu0
        %v2866 = vpop.f32.mrb[0].mxu0
        %v2867 = vadd.f32 0.0, %v2866
        %v2868 = vpop.f32.mrb[0].mxu0
        %2869 = vmatprep.mubr.bf16.mxu0 0
        %2870 = vmatmul.mubr.bf16.gmra.mrb[0].mxu0 %v2740
        %v2871 = vpop.f32.mrb[0].mxu0
        %v2872 = vadd.f32 0.0, %v2871
        %v2873 = vpop.f32.mrb[0].mxu0
        %v2874 = vpop.f32.mrb[0].mxu0
        %v2875 = vadd.f32 0.0, %v2874
        %v2876 = vpop.f32.mrb[0].mxu0
        %2877 = vmatprep.mubr.bf16.mxu0 0
        %2878 = vmatmul.mubr.bf16.gmra.mrb[0].mxu0 %v2743
        %v2879 = vpop.f32.mrb[0].mxu0
        %v2880 = vadd.f32 0.0, %v2879
        %v2881 = vpop.f32.mrb[0].mxu0
        %v2882 = vpop.f32.mrb[0].mxu0
        %v2883 = vadd.f32 0.0, %v2882
        %v2884 = vpop.f32.mrb[0].mxu0
        %2885 = vmatprep.mubr.bf16.mxu0 0
        %2886 = vmatmul.mubr.bf16.gmra.mrb[0].mxu0 %v2746
        %v2887 = vpop.f32.mrb[0].mxu0
        %v2888 = vadd.f32 0.0, %v2887
        %v2889 = vpop.f32.mrb[0].mxu0
        %v2890 = vpop.f32.mrb[0].mxu0
        %v2891 = vadd.f32 0.0, %v2890
        %v2892 = vpop.f32.mrb[0].mxu0
        %2893 = vmatprep.mubr.bf16.mxu0 0
        %2894 = vmatmul.mubr.bf16.gmra.mrb[0].mxu0 %v2749
        %v2895 = vpop.f32.mrb[0].mxu0
        %v2896 = vadd.f32 0.0, %v2895
        %v2897 = vpop.f32.mrb[0].mxu0
        %v2898 = vpop.f32.mrb[0].mxu0
        %v2899 = vadd.f32 0.0, %v2898
        %v2900 = vpop.f32.mrb[0].mxu0
        %2901 = vmatprep.mubr.bf16.mxu0 0
        %2902 = vmatmul.mubr.bf16.gmra.mrb[0].mxu0 %v2752
        %v2903 = vpop.f32.mrb[0].mxu0
        %v2904 = vadd.f32 0.0, %v2903
        %v2905 = vpop.f32.mrb[0].mxu0
        %v2906 = vpop.f32.mrb[0].mxu0
        %v2907 = vadd.f32 0.0, %v2906
        %v2908 = vpop.f32.mrb[0].mxu0
        %2909 = vmatprep.mubr.bf16.mxu0 0
        %2910 = vmatmul.mubr.bf16.gmra.mrb[0].mxu0 %v2755
        %v2911 = vpop.f32.mrb[0].mxu0
        %v2912 = vadd.f32 0.0, %v2911
        %v2913 = vpop.f32.mrb[0].mxu0
        %v2914 = vpop.f32.mrb[0].mxu0
        %v2915 = vadd.f32 0.0, %v2914
        %v2916 = vpop.f32.mrb[0].mxu0
        %2917 = vmatprep.mubr.bf16.mxu0 0
        %2918 = vmatmul.mubr.bf16.gmra.mrb[0].mxu0 %v2758
        %v2919 = vpop.f32.mrb[0].mxu0
        %v2920 = vadd.f32 0.0, %v2919
        %v2921 = vpop.f32.mrb[0].mxu0
        %v2922 = vpop.f32.mrb[0].mxu0
        %v2923 = vadd.f32 0.0, %v2922
        %v2924 = vpop.f32.mrb[0].mxu0
        %2925 = vmatprep.mubr.bf16.mxu0 0
        %2926 = vmatmul.mubr.bf16.gmra.mrb[0].mxu0 %v2761
        %v2927 = vpop.f32.mrb[0].mxu0
        %v2928 = vadd.f32 0.0, %v2927
        %v2929 = vpop.f32.mrb[0].mxu0
        %v2930 = vpop.f32.mrb[0].mxu0
        %v2931 = vadd.f32 0.0, %v2930
        %v2932 = vpop.f32.mrb[0].mxu0
        %2933 = vmatprep.mubr.bf16.mxu0 0
        %2934 = vmatmul.mubr.bf16.gmra.mrb[0].mxu0 %v2764
        %v2935 = vpop.f32.mrb[0].mxu0
        %v2936 = vadd.f32 0.0, %v2935
        %v2937 = vpop.f32.mrb[0].mxu0
        %v2938 = vpop.f32.mrb[0].mxu0
        %v2939 = vadd.f32 0.0, %v2938
        %v2940 = vpop.f32.mrb[0].mxu0
        %2941 = vmatprep.mubr.bf16.mxu0 0
        %2942 = vmatmul.mubr.bf16.gmra.mrb[0].mxu0 %v2767
        %v2943 = vpop.f32.mrb[0].mxu0
        %v2944 = vadd.f32 0.0, %v2943
        %v2945 = vpop.f32.mrb[0].mxu0
        %v2946 = vpop.f32.mrb[0].mxu0
        %v2947 = vadd.f32 0.0, %v2946
        %v2948 = vpop.f32.mrb[0].mxu0
        %2949 = vdwg.mxu0
        %v2950 = vld [vmem:[%s2] sm:$0xff]
        %v2951 = vld [vmem:[%s2 + $0x8] sm:$0xff]
        %v2952 = vld [vmem:[%s2 + $0x10] sm:$0xff]
        %v2953 = vld [vmem:[%s2 + $0x18] sm:$0xff]
        %v2954 = vld [vmem:[%s2 + $0x20] sm:$0xff]
        %v2955 = vld [vmem:[%s2 + $0x28] sm:$0xff]
        %v2956 = vld [vmem:[%s2 + $0x30] sm:$0xff]
        %v2957 = vld [vmem:[%s2 + $0x38] sm:$0xff]
        %v2958 = vld [vmem:[%s2 + $0x40] sm:$0xff]
        %v2959 = vld [vmem:[%s2 + $0x48] sm:$0xff]
        %v2960 = vld [vmem:[%s2 + $0x50] sm:$0xff]
        %v2961 = vld [vmem:[%s2 + $0x58] sm:$0xff]
        %v2962 = vld [vmem:[%s2 + $0x60] sm:$0xff]
        %v2963 = vld [vmem:[%s2 + $0x68] sm:$0xff]
        %v2964 = vld [vmem:[%s2 + $0x70] sm:$0xff]
        %v2965 = vld [vmem:[%s2 + $0x78] sm:$0xff]
        %v2966 = vld [vmem:[%s2 + $0x80] sm:$0xff]
        %v2967 = vld [vmem:[%s2 + $0x88] sm:$0xff]
        %v2968 = vld [vmem:[%s2 + $0x90] sm:$0xff]
        %v2969 = vld [vmem:[%s2 + $0x98] sm:$0xff]
        %v2970 = vld [vmem:[%s2 + $0xa0] sm:$0xff]
        %v2971 = vld [vmem:[%s2 + $0xa8] sm:$0xff]
        %v2972 = vld [vmem:[%s2 + $0xb0] sm:$0xff]
        %v2973 = vld [vmem:[%s2 + $0xb8] sm:$0xff]
        %v2974 = vld [vmem:[%s2 + $0xc0] sm:$0xff]
        %v2975 = vld [vmem:[%s2 + $0xc8] sm:$0xff]
        %v2976 = vld [vmem:[%s2 + $0xd0] sm:$0xff]
        %v2977 = vld [vmem:[%s2 + $0xd8] sm:$0xff]
        %v2978 = vld [vmem:[%s2 + $0xe0] sm:$0xff]
        %v2979 = vld [vmem:[%s2 + $0xe8] sm:$0xff]
        %v2980 = vld [vmem:[%s2 + $0xf0] sm:$0xff]
        %v2981 = vld [vmem:[%s2 + $0xf8] sm:$0xff]
        %v2982 = vld [vmem:[%s2 + $0x100] sm:$0xff]
        %v2983 = vld [vmem:[%s2 + $0x108] sm:$0xff]
        %v2984 = vld [vmem:[%s2 + $0x110] sm:$0xff]
        %v2985 = vld [vmem:[%s2 + $0x118] sm:$0xff]
        %2987 = vset.pattern.permute.xlu0 0
        %2988 = vperm.xlu0 %2987, %v2950
        %v2989 = vpop.permute.xlu0 %2988
        %2992 = vset.pattern.permute.xlu0 0
        %2993 = vperm.xlu0 %2992, %v2951
        %v2994 = vpop.permute.xlu0 %2993
        %2997 = vset.pattern.permute.xlu0 0
        %2998 = vperm.xlu0 %2997, %v2952
        %v2999 = vpop.permute.xlu0 %2998
        %3002 = vset.pattern.permute.xlu0 0
        %3003 = vperm.xlu0 %3002, %v2953
        %v3004 = vpop.permute.xlu0 %3003
        %3007 = vset.pattern.permute.xlu0 0
        %3008 = vperm.xlu0 %3007, %v2954
        %v3009 = vpop.permute.xlu0 %3008
        %3012 = vset.pattern.permute.xlu0 0
        %3013 = vperm.xlu0 %3012, %v2955
        %v3014 = vpop.permute.xlu0 %3013
        %3017 = vset.pattern.permute.xlu0 0
        %3018 = vperm.xlu0 %3017, %v2956
        %v3019 = vpop.permute.xlu0 %3018
        %3022 = vset.pattern.permute.xlu0 0
        %3023 = vperm.xlu0 %3022, %v2957
        %v3024 = vpop.permute.xlu0 %3023
        %3027 = vset.pattern.permute.xlu0 0
        %3028 = vperm.xlu0 %3027, %v2958
        %v3029 = vpop.permute.xlu0 %3028
        %3032 = vset.pattern.permute.xlu0 0
        %3033 = vperm.xlu0 %3032, %v2959
        %v3034 = vpop.permute.xlu0 %3033
        %3037 = vset.pattern.permute.xlu0 0
        %3038 = vperm.xlu0 %3037, %v2960
        %v3039 = vpop.permute.xlu0 %3038
        %3042 = vset.pattern.permute.xlu0 0
        %3043 = vperm.xlu0 %3042, %v2961
        %v3044 = vpop.permute.xlu0 %3043
        %3047 = vset.pattern.permute.xlu0 0
        %3048 = vperm.xlu0 %3047, %v2962
        %v3049 = vpop.permute.xlu0 %3048
        %3052 = vset.pattern.permute.xlu0 0
        %3053 = vperm.xlu0 %3052, %v2963
        %v3054 = vpop.permute.xlu0 %3053
        %3057 = vset.pattern.permute.xlu0 0
        %3058 = vperm.xlu0 %3057, %v2964
        %v3059 = vpop.permute.xlu0 %3058
        %3062 = vset.pattern.permute.xlu0 0
        %3063 = vperm.xlu0 %3062, %v2965
        %v3064 = vpop.permute.xlu0 %3063
        %3067 = vset.pattern.permute.xlu0 0
        %3068 = vperm.xlu0 %3067, %v2966
        %v3069 = vpop.permute.xlu0 %3068
        %3072 = vset.pattern.permute.xlu0 0
        %3073 = vperm.xlu0 %3072, %v2967
        %v3074 = vpop.permute.xlu0 %3073
        %3077 = vset.pattern.permute.xlu0 0
        %3078 = vperm.xlu0 %3077, %v2968
        %v3079 = vpop.permute.xlu0 %3078
        %3082 = vset.pattern.permute.xlu0 0
        %3083 = vperm.xlu0 %3082, %v2969
        %v3084 = vpop.permute.xlu0 %3083
        %3087 = vset.pattern.permute.xlu0 0
        %3088 = vperm.xlu0 %3087, %v2970
        %v3089 = vpop.permute.xlu0 %3088
        %3092 = vset.pattern.permute.xlu0 0
        %3093 = vperm.xlu0 %3092, %v2971
        %v3094 = vpop.permute.xlu0 %3093
        %3097 = vset.pattern.permute.xlu0 0
        %3098 = vperm.xlu0 %3097, %v2972
        %v3099 = vpop.permute.xlu0 %3098
        %3102 = vset.pattern.permute.xlu0 0
        %3103 = vperm.xlu0 %3102, %v2973
        %v3104 = vpop.permute.xlu0 %3103
        %3107 = vset.pattern.permute.xlu0 0
        %3108 = vperm.xlu0 %3107, %v2974
        %v3109 = vpop.permute.xlu0 %3108
        %3112 = vset.pattern.permute.xlu0 0
        %3113 = vperm.xlu0 %3112, %v2975
        %v3114 = vpop.permute.xlu0 %3113
        %3117 = vset.pattern.permute.xlu0 0
        %3118 = vperm.xlu0 %3117, %v2976
        %v3119 = vpop.permute.xlu0 %3118
        %3122 = vset.pattern.permute.xlu0 0
        %3123 = vperm.xlu0 %3122, %v2977
        %v3124 = vpop.permute.xlu0 %3123
        %3127 = vset.pattern.permute.xlu0 0
        %3128 = vperm.xlu0 %3127, %v2978
        %v3129 = vpop.permute.xlu0 %3128
        %3132 = vset.pattern.permute.xlu0 0
        %3133 = vperm.xlu0 %3132, %v2979
        %v3134 = vpop.permute.xlu0 %3133
        %3137 = vset.pattern.permute.xlu0 0
        %3138 = vperm.xlu0 %3137, %v2980
        %v3139 = vpop.permute.xlu0 %3138
        %3142 = vset.pattern.permute.xlu0 0
        %3143 = vperm.xlu0 %3142, %v2981
        %v3144 = vpop.permute.xlu0 %3143
        %3147 = vset.pattern.permute.xlu0 0
        %3148 = vperm.xlu0 %3147, %v2982
        %v3149 = vpop.permute.xlu0 %3148
        %3152 = vset.pattern.permute.xlu0 0
        %3153 = vperm.xlu0 %3152, %v2983
        %v3154 = vpop.permute.xlu0 %3153
        %3157 = vset.pattern.permute.xlu0 0
        %3158 = vperm.xlu0 %3157, %v2984
        %v3159 = vpop.permute.xlu0 %3158
        %3162 = vset.pattern.permute.xlu0 0
        %3163 = vperm.xlu0 %3162, %v2985
        %v3164 = vpop.permute.xlu0 %3163
        %v3166 = vmul.f32 %v2808, %v2989
        %v3167 = vmul.f32 %v2811, %v2994
        %v3168 = vmul.f32 %v2816, %v2999
        %v3169 = vmul.f32 %v2819, %v3004
        %v3170 = vmul.f32 %v2824, %v3009
        %v3171 = vmul.f32 %v2827, %v3014
        %v3172 = vmul.f32 %v2832, %v3019
        %v3173 = vmul.f32 %v2835, %v3024
        %v3174 = vmul.f32 %v2840, %v3029
        %v3175 = vmul.f32 %v2843, %v3034
        %v3176 = vmul.f32 %v2848, %v3039
        %v3177 = vmul.f32 %v2851, %v3044
        %v3178 = vmul.f32 %v2856, %v3049
        %v3179 = vmul.f32 %v2859, %v3054
        %v3180 = vmul.f32 %v2864, %v3059
        %v3181 = vmul.f32 %v2867, %v3064
        %v3182 = vmul.f32 %v2872, %v3069
        %v3183 = vmul.f32 %v2875, %v3074
        %v3184 = vmul.f32 %v2880, %v3079
        %v3185 = vmul.f32 %v2883, %v3084
        %v3186 = vmul.f32 %v2888, %v3089
        %v3187 = vmul.f32 %v2891, %v3094
        %v3188 = vmul.f32 %v2896, %v3099
        %v3189 = vmul.f32 %v2899, %v3104
        %v3190 = vmul.f32 %v2904, %v3109
        %v3191 = vmul.f32 %v2907, %v3114
        %v3192 = vmul.f32 %v2912, %v3119
        %v3193 = vmul.f32 %v2915, %v3124
        %v3194 = vmul.f32 %v2920, %v3129
        %v3195 = vmul.f32 %v2923, %v3134
        %v3196 = vmul.f32 %v2928, %v3139
        %v3197 = vmul.f32 %v2931, %v3144
        %v3198 = vmul.f32 %v2936, %v3149
        %v3199 = vmul.f32 %v2939, %v3154
        %v3200 = vmul.f32 %v2944, %v3159
        %v3201 = vmul.f32 %v2947, %v3164
        %vm3202 = vcmask 261120
        %v3203 = vsel %vm3202, %v3166, 0.0
        %v3204 = vsel %vm3202, %v3167, 0.0
        %v3205 = vadd.f32 %v3203, %v3204
        %v3206 = vsel %vm3202, %v3168, 0.0
        %v3207 = vadd.f32 %v3205, %v3206
        %v3208 = vsel %vm3202, %v3169, 0.0
        %v3209 = vadd.f32 %v3207, %v3208
        %v3210 = vsel %vm3202, %v3170, 0.0
        %v3211 = vadd.f32 %v3209, %v3210
        %v3212 = vsel %vm3202, %v3171, 0.0
        %v3213 = vadd.f32 %v3211, %v3212
        %v3214 = vsel %vm3202, %v3172, 0.0
        %v3215 = vadd.f32 %v3213, %v3214
        %v3216 = vsel %vm3202, %v3173, 0.0
        %v3217 = vadd.f32 %v3215, %v3216
        %v3218 = vsel %vm3202, %v3174, 0.0
        %v3219 = vadd.f32 %v3217, %v3218
        %v3220 = vsel %vm3202, %v3175, 0.0
        %v3221 = vadd.f32 %v3219, %v3220
        %v3222 = vsel %vm3202, %v3176, 0.0
        %v3223 = vadd.f32 %v3221, %v3222
        %v3224 = vsel %vm3202, %v3177, 0.0
        %v3225 = vadd.f32 %v3223, %v3224
        %v3226 = vsel %vm3202, %v3178, 0.0
        %v3227 = vadd.f32 %v3225, %v3226
        %v3228 = vsel %vm3202, %v3179, 0.0
        %v3229 = vadd.f32 %v3227, %v3228
        %v3230 = vsel %vm3202, %v3180, 0.0
        %v3231 = vadd.f32 %v3229, %v3230
        %v3232 = vsel %vm3202, %v3181, 0.0
        %v3233 = vadd.f32 %v3231, %v3232
        %v3234 = vsel %vm3202, %v3182, 0.0
        %v3235 = vadd.f32 %v3233, %v3234
        %v3236 = vsel %vm3202, %v3183, 0.0
        %v3237 = vadd.f32 %v3235, %v3236
        %v3238 = vsel %vm3202, %v3184, 0.0
        %v3239 = vadd.f32 %v3237, %v3238
        %v3240 = vsel %vm3202, %v3185, 0.0
        %v3241 = vadd.f32 %v3239, %v3240
        %v3242 = vsel %vm3202, %v3186, 0.0
        %v3243 = vadd.f32 %v3241, %v3242
        %v3244 = vsel %vm3202, %v3187, 0.0
        %v3245 = vadd.f32 %v3243, %v3244
        %v3246 = vsel %vm3202, %v3188, 0.0
        %v3247 = vadd.f32 %v3245, %v3246
        %v3248 = vsel %vm3202, %v3189, 0.0
        %v3249 = vadd.f32 %v3247, %v3248
        %v3250 = vsel %vm3202, %v3190, 0.0
        %v3251 = vadd.f32 %v3249, %v3250
        %v3252 = vsel %vm3202, %v3191, 0.0
        %v3253 = vadd.f32 %v3251, %v3252
        %v3254 = vsel %vm3202, %v3192, 0.0
        %v3255 = vadd.f32 %v3253, %v3254
        %v3256 = vsel %vm3202, %v3193, 0.0
        %v3257 = vadd.f32 %v3255, %v3256
        %v3258 = vsel %vm3202, %v3194, 0.0
        %v3259 = vadd.f32 %v3257, %v3258
        %v3260 = vsel %vm3202, %v3195, 0.0
        %v3261 = vadd.f32 %v3259, %v3260
        %v3262 = vsel %vm3202, %v3196, 0.0
        %v3263 = vadd.f32 %v3261, %v3262
        %v3264 = vsel %vm3202, %v3197, 0.0
        %v3265 = vadd.f32 %v3263, %v3264
        %v3266 = vsel %vm3202, %v3198, 0.0
        %v3267 = vadd.f32 %v3265, %v3266
        %v3268 = vsel %vm3202, %v3199, 0.0
        %v3269 = vadd.f32 %v3267, %v3268
        %v3270 = vsel %vm3202, %v3200, 0.0
        %v3271 = vadd.f32 %v3269, %v3270
        %v3272 = vsel %vm3202, %v3201, 0.0
        %v3273 = vadd.f32 %v3271, %v3272
        %v3274 = vrot.slane %v3273, 4
        %v3275 = vadd.f32 %v3273, %v3274
        %v3276 = vrot.slane %v3275, 2
        %v3277 = vadd.f32 %v3275, %v3276
        %v3278 = vrot.slane %v3277, 1
        %v3279 = vadd.f32 %v3277, %v3278
        %vm3280 = vcmask 253952
        %3281 = vst.msk [vmem:[%s198] sm:$0x1] %vm3280, %v3279
        %v3282 = vmul.f32 %v3166, %v2808
        %v3283 = vmul.f32 %v3167, %v2811
        %v3284 = vmul.f32 %v3168, %v2816
        %v3285 = vmul.f32 %v3169, %v2819
        %v3286 = vmul.f32 %v3170, %v2824
        %v3287 = vmul.f32 %v3171, %v2827
        %v3288 = vmul.f32 %v3172, %v2832
        %v3289 = vmul.f32 %v3173, %v2835
        %v3290 = vmul.f32 %v3174, %v2840
        %v3291 = vmul.f32 %v3175, %v2843
        %v3292 = vmul.f32 %v3176, %v2848
        %v3293 = vmul.f32 %v3177, %v2851
        %v3294 = vmul.f32 %v3178, %v2856
        %v3295 = vmul.f32 %v3179, %v2859
        %v3296 = vmul.f32 %v3180, %v2864
        %v3297 = vmul.f32 %v3181, %v2867
        %v3298 = vmul.f32 %v3182, %v2872
        %v3299 = vmul.f32 %v3183, %v2875
        %v3300 = vmul.f32 %v3184, %v2880
        %v3301 = vmul.f32 %v3185, %v2883
        %v3302 = vmul.f32 %v3186, %v2888
        %v3303 = vmul.f32 %v3187, %v2891
        %v3304 = vmul.f32 %v3188, %v2896
        %v3305 = vmul.f32 %v3189, %v2899
        %v3306 = vmul.f32 %v3190, %v2904
        %v3307 = vmul.f32 %v3191, %v2907
        %v3308 = vmul.f32 %v3192, %v2912
        %v3309 = vmul.f32 %v3193, %v2915
        %v3310 = vmul.f32 %v3194, %v2920
        %v3311 = vmul.f32 %v3195, %v2923
        %v3312 = vmul.f32 %v3196, %v2928
        %v3313 = vmul.f32 %v3197, %v2931
        %v3314 = vmul.f32 %v3198, %v2936
        %v3315 = vmul.f32 %v3199, %v2939
        %v3316 = vmul.f32 %v3200, %v2944
        %v3317 = vmul.f32 %v3201, %v2947
        %v3318 = vsel %vm3202, %v3282, 0.0
        %v3319 = vsel %vm3202, %v3283, 0.0
        %v3320 = vadd.f32 %v3318, %v3319
        %v3321 = vsel %vm3202, %v3284, 0.0
        %v3322 = vadd.f32 %v3320, %v3321
        %v3323 = vsel %vm3202, %v3285, 0.0
        %v3324 = vadd.f32 %v3322, %v3323
        %v3325 = vsel %vm3202, %v3286, 0.0
        %v3326 = vadd.f32 %v3324, %v3325
        %v3327 = vsel %vm3202, %v3287, 0.0
        %v3328 = vadd.f32 %v3326, %v3327
        %v3329 = vsel %vm3202, %v3288, 0.0
        %v3330 = vadd.f32 %v3328, %v3329
        %v3331 = vsel %vm3202, %v3289, 0.0
        %v3332 = vadd.f32 %v3330, %v3331
        %v3333 = vsel %vm3202, %v3290, 0.0
        %v3334 = vadd.f32 %v3332, %v3333
        %v3335 = vsel %vm3202, %v3291, 0.0
        %v3336 = vadd.f32 %v3334, %v3335
        %v3337 = vsel %vm3202, %v3292, 0.0
        %v3338 = vadd.f32 %v3336, %v3337
        %v3339 = vsel %vm3202, %v3293, 0.0
        %v3340 = vadd.f32 %v3338, %v3339
        %v3341 = vsel %vm3202, %v3294, 0.0
        %v3342 = vadd.f32 %v3340, %v3341
        %v3343 = vsel %vm3202, %v3295, 0.0
        %v3344 = vadd.f32 %v3342, %v3343
        %v3345 = vsel %vm3202, %v3296, 0.0
        %v3346 = vadd.f32 %v3344, %v3345
        %v3347 = vsel %vm3202, %v3297, 0.0
        %v3348 = vadd.f32 %v3346, %v3347
        %v3349 = vsel %vm3202, %v3298, 0.0
        %v3350 = vadd.f32 %v3348, %v3349
        %v3351 = vsel %vm3202, %v3299, 0.0
        %v3352 = vadd.f32 %v3350, %v3351
        %v3353 = vsel %vm3202, %v3300, 0.0
        %v3354 = vadd.f32 %v3352, %v3353
        %v3355 = vsel %vm3202, %v3301, 0.0
        %v3356 = vadd.f32 %v3354, %v3355
        %v3357 = vsel %vm3202, %v3302, 0.0
        %v3358 = vadd.f32 %v3356, %v3357
        %v3359 = vsel %vm3202, %v3303, 0.0
        %v3360 = vadd.f32 %v3358, %v3359
        %v3361 = vsel %vm3202, %v3304, 0.0
        %v3362 = vadd.f32 %v3360, %v3361
        %v3363 = vsel %vm3202, %v3305, 0.0
        %v3364 = vadd.f32 %v3362, %v3363
        %v3365 = vsel %vm3202, %v3306, 0.0
        %v3366 = vadd.f32 %v3364, %v3365
        %v3367 = vsel %vm3202, %v3307, 0.0
        %v3368 = vadd.f32 %v3366, %v3367
        %v3369 = vsel %vm3202, %v3308, 0.0
        %v3370 = vadd.f32 %v3368, %v3369
        %v3371 = vsel %vm3202, %v3309, 0.0
        %v3372 = vadd.f32 %v3370, %v3371
        %v3373 = vsel %vm3202, %v3310, 0.0
        %v3374 = vadd.f32 %v3372, %v3373
        %v3375 = vsel %vm3202, %v3311, 0.0
        %v3376 = vadd.f32 %v3374, %v3375
        %v3377 = vsel %vm3202, %v3312, 0.0
        %v3378 = vadd.f32 %v3376, %v3377
        %v3379 = vsel %vm3202, %v3313, 0.0
        %v3380 = vadd.f32 %v3378, %v3379
        %v3381 = vsel %vm3202, %v3314, 0.0
        %v3382 = vadd.f32 %v3380, %v3381
        %v3383 = vsel %vm3202, %v3315, 0.0
        %v3384 = vadd.f32 %v3382, %v3383
        %v3385 = vsel %vm3202, %v3316, 0.0
        %v3386 = vadd.f32 %v3384, %v3385
        %v3387 = vsel %vm3202, %v3317, 0.0
        %v3388 = vadd.f32 %v3386, %v3387
        %v3389 = vrot.slane %v3388, 4
        %v3390 = vadd.f32 %v3388, %v3389
        %v3391 = vrot.slane %v3390, 2
        %v3392 = vadd.f32 %v3390, %v3391
        %v3393 = vrot.slane %v3392, 1
        %v3394 = vadd.f32 %v3392, %v3393
        %3395 = vst.msk [vmem:[%s198 + $0x1] sm:$0x1] %vm3280, %v3394
        %v3396 = vpack.c.bf16 %v2811, %v2808
        %v3397 = vpack.c.bf16 %v2819, %v2816
        %v3398 = vpack.c.bf16 %v2827, %v2824
        %v3399 = vpack.c.bf16 %v2835, %v2832
        %v3400 = vpack.c.bf16 %v2843, %v2840
        %v3401 = vpack.c.bf16 %v2851, %v2848
        %v3402 = vpack.c.bf16 %v2859, %v2856
        %v3403 = vpack.c.bf16 %v2867, %v2864
        %v3404 = vpack.c.bf16 %v2875, %v2872
        %v3405 = vpack.c.bf16 %v2883, %v2880
        %v3406 = vpack.c.bf16 %v2891, %v2888
        %v3407 = vpack.c.bf16 %v2899, %v2896
        %v3408 = vpack.c.bf16 %v2907, %v2904
        %v3409 = vpack.c.bf16 %v2915, %v2912
        %v3410 = vpack.c.bf16 %v2923, %v2920
        %v3411 = vpack.c.bf16 %v2931, %v2928
        %v3412 = vpack.c.bf16 %v2939, %v2936
        %v3413 = vpack.c.bf16 %v2947, %v2944
        %v3432 = vunpack.c.l.b16 %v3396
        %v3433 = vunpack.c.h.b16 %v3396
        %v3434 = vunpack.c.l.b16 %v3397
        %v3435 = vunpack.c.h.b16 %v3397
        %v3436 = vunpack.c.l.b16 %v3398
        %v3437 = vunpack.c.h.b16 %v3398
        %v3438 = vunpack.c.l.b16 %v3399
        %v3439 = vunpack.c.h.b16 %v3399
        %v3440 = vunpack.c.l.b16 %v3400
        %v3441 = vunpack.c.h.b16 %v3400
        %v3442 = vunpack.c.l.b16 %v3401
        %v3443 = vunpack.c.h.b16 %v3401
        %v3444 = vunpack.c.l.b16 %v3402
        %v3445 = vunpack.c.h.b16 %v3402
        %v3446 = vunpack.c.l.b16 %v3403
        %v3447 = vunpack.c.h.b16 %v3403
        %v3448 = vunpack.c.l.b16 %v3404
        %v3449 = vunpack.c.h.b16 %v3404
        %v3450 = vunpack.c.l.b16 %v3405
        %v3451 = vunpack.c.h.b16 %v3405
        %v3452 = vunpack.c.l.b16 %v3406
        %v3453 = vunpack.c.h.b16 %v3406
        %v3454 = vunpack.c.l.b16 %v3407
        %v3455 = vunpack.c.h.b16 %v3407
        %v3456 = vunpack.c.l.b16 %v3408
        %v3457 = vunpack.c.h.b16 %v3408
        %v3458 = vunpack.c.l.b16 %v3409
        %v3459 = vunpack.c.h.b16 %v3409
        %v3460 = vunpack.c.l.b16 %v3410
        %v3461 = vunpack.c.h.b16 %v3410
        %v3462 = vunpack.c.l.b16 %v3411
        %v3463 = vunpack.c.h.b16 %v3411
        %v3464 = vunpack.c.l.b16 %v3412
        %v3465 = vunpack.c.h.b16 %v3412
        %v3466 = vunpack.c.l.b16 %v3413
        %v3467 = vunpack.c.h.b16 %v3413
        %v3468 = vpack.c.b16 %v3432, %v3432
        %v3469 = vpack.c.b16 %v3433, %v3433
        %v3470 = vpack.c.b16 %v3434, %v3434
        %v3471 = vpack.c.b16 %v3435, %v3435
        %v3472 = vpack.c.b16 %v3436, %v3436
        %v3473 = vpack.c.b16 %v3437, %v3437
        %v3474 = vpack.c.b16 %v3438, %v3438
        %v3475 = vpack.c.b16 %v3439, %v3439
        %v3476 = vpack.c.b16 %v3440, %v3440
        %v3477 = vpack.c.b16 %v3441, %v3441
        %v3478 = vpack.c.b16 %v3442, %v3442
        %v3479 = vpack.c.b16 %v3443, %v3443
        %v3480 = vpack.c.b16 %v3444, %v3444
        %v3481 = vpack.c.b16 %v3445, %v3445
        %v3482 = vpack.c.b16 %v3446, %v3446
        %v3483 = vpack.c.b16 %v3447, %v3447
        %v3484 = vpack.c.b16 %v3448, %v3448
        %v3485 = vpack.c.b16 %v3449, %v3449
        %v3486 = vpack.c.b16 %v3450, %v3450
        %v3487 = vpack.c.b16 %v3451, %v3451
        %v3488 = vpack.c.b16 %v3452, %v3452
        %v3489 = vpack.c.b16 %v3453, %v3453
        %v3490 = vpack.c.b16 %v3454, %v3454
        %v3491 = vpack.c.b16 %v3455, %v3455
        %v3492 = vpack.c.b16 %v3456, %v3456
        %v3493 = vpack.c.b16 %v3457, %v3457
        %v3494 = vpack.c.b16 %v3458, %v3458
        %v3495 = vpack.c.b16 %v3459, %v3459
        %v3496 = vpack.c.b16 %v3460, %v3460
        %v3497 = vpack.c.b16 %v3461, %v3461
        %v3498 = vpack.c.b16 %v3462, %v3462
        %v3499 = vpack.c.b16 %v3463, %v3463
        %v3500 = vpack.c.b16 %v3464, %v3464
        %v3501 = vpack.c.b16 %v3465, %v3465
        %v3502 = vpack.c.b16 %v3466, %v3466
        %v3503 = vpack.c.b16 %v3467, %v3467
        %vm3540 = vcmask 257024
        %3541 = vst.msk [vmem:[%s208] sm:$0xf] %vm3540, %v3468
        %3542 = vst.msk [vmem:[%s208 + $0x4] sm:$0xf] %vm3540, %v3469
        %3543 = vst.msk [vmem:[%s208 + $0x8] sm:$0xf] %vm3540, %v3470
        %3544 = vst.msk [vmem:[%s208 + $0xc] sm:$0xf] %vm3540, %v3471
        %3545 = vst.msk [vmem:[%s208 + $0x10] sm:$0xf] %vm3540, %v3472
        %3546 = vst.msk [vmem:[%s208 + $0x14] sm:$0xf] %vm3540, %v3473
        %3547 = vst.msk [vmem:[%s208 + $0x18] sm:$0xf] %vm3540, %v3474
        %3548 = vst.msk [vmem:[%s208 + $0x1c] sm:$0xf] %vm3540, %v3475
        %3549 = vst.msk [vmem:[%s208 + $0x20] sm:$0xf] %vm3540, %v3476
        %3550 = vst.msk [vmem:[%s208 + $0x24] sm:$0xf] %vm3540, %v3477
        %3551 = vst.msk [vmem:[%s208 + $0x28] sm:$0xf] %vm3540, %v3478
        %3552 = vst.msk [vmem:[%s208 + $0x2c] sm:$0xf] %vm3540, %v3479
        %3553 = vst.msk [vmem:[%s208 + $0x30] sm:$0xf] %vm3540, %v3480
        %3554 = vst.msk [vmem:[%s208 + $0x34] sm:$0xf] %vm3540, %v3481
        %3555 = vst.msk [vmem:[%s208 + $0x38] sm:$0xf] %vm3540, %v3482
        %3556 = vst.msk [vmem:[%s208 + $0x3c] sm:$0xf] %vm3540, %v3483
        %3557 = vst.msk [vmem:[%s208 + $0x40] sm:$0xf] %vm3540, %v3484
        %3558 = vst.msk [vmem:[%s208 + $0x44] sm:$0xf] %vm3540, %v3485
        %3559 = vst.msk [vmem:[%s208 + $0x48] sm:$0xf] %vm3540, %v3486
        %3560 = vst.msk [vmem:[%s208 + $0x4c] sm:$0xf] %vm3540, %v3487
        %3561 = vst.msk [vmem:[%s208 + $0x50] sm:$0xf] %vm3540, %v3488
        %3562 = vst.msk [vmem:[%s208 + $0x54] sm:$0xf] %vm3540, %v3489
        %3563 = vst.msk [vmem:[%s208 + $0x58] sm:$0xf] %vm3540, %v3490
        %3564 = vst.msk [vmem:[%s208 + $0x5c] sm:$0xf] %vm3540, %v3491
        %3565 = vst.msk [vmem:[%s208 + $0x60] sm:$0xf] %vm3540, %v3492
        %3566 = vst.msk [vmem:[%s208 + $0x64] sm:$0xf] %vm3540, %v3493
        %3567 = vst.msk [vmem:[%s208 + $0x68] sm:$0xf] %vm3540, %v3494
        %3568 = vst.msk [vmem:[%s208 + $0x6c] sm:$0xf] %vm3540, %v3495
        %3569 = vst.msk [vmem:[%s208 + $0x70] sm:$0xf] %vm3540, %v3496
        %3570 = vst.msk [vmem:[%s208 + $0x74] sm:$0xf] %vm3540, %v3497
        %3571 = vst.msk [vmem:[%s208 + $0x78] sm:$0xf] %vm3540, %v3498
        %3572 = vst.msk [vmem:[%s208 + $0x7c] sm:$0xf] %vm3540, %v3499
        %3573 = vst.msk [vmem:[%s208 + $0x80] sm:$0xf] %vm3540, %v3500
        %3574 = vst.msk [vmem:[%s208 + $0x84] sm:$0xf] %vm3540, %v3501
        %3575 = vst.msk [vmem:[%s208 + $0x88] sm:$0xf] %vm3540, %v3502
        %3576 = vst.msk [vmem:[%s208 + $0x8c] sm:$0xf] %vm3540, %v3503
        %p3577 = scmp.lt.s32.totalorder %s19, 1
        %s3578 = scalar_select %p3577, %s19, 1
        %s3579 = smul.addr %s3578, 36
        %s3580 = smul.addr %s3579, 4
        %s3581 = scalar_lea.vmem %s3, %s3580
        %s3582 = sand.u32 %s121, 1
        %s3583 = scalar_lea.sflag [#allocation4], %s3582
        %s3584 = sand.u32 %s121, 1
        %s3585 = smul.addr %s3584, 2
        %s3586 = scalar_lea.vmem [#allocation3], %s3585
        // Predicated region
        $region33: #{tpu_custom_call.1} parent=31 // pred_check
          %p3587 = pneg %p105
        $region34: #{tpu_custom_call.1} parent=31 // pred_check_branch
          %3589 = sbr.rel (%p3587) target = $region36
        $region35: #{tpu_custom_call.1} parent=31 // pred_region
          _
        $region36: #{tpu_custom_call.1} parent=31 // pred_fallthru
          _
        // Predicated region
        $region37: #{tpu_custom_call.1} parent=31 // pred_check
          %p3590 = pneg %p131
        $region38: #{tpu_custom_call.1} parent=31 // pred_check_branch
          %3592 = sbr.rel (%p3590) target = $region40
        $region39: #{tpu_custom_call.1} parent=31 // pred_region
          %s3594 = ssub.s32 32, 32
          %3595 = vsyncadd %s3583, %s3594
          %s3596 = smul.addr %s19, 32
          %s3597 = scalar_lea.hbm %s4, %s3596
          %s3599 = sshll.u32 %s3586, 4
          %s3600 = int_to_ptr.vmem [resolvable:$true] %s3599
          %3602 = dma.vmem_to_hbm [thread:$0]  %s3600, 32, %s3597, %s3583
        $region40: #{tpu_custom_call.1} parent=31 // pred_fallthru
          _
      $region32: #{tpu_custom_call.1} parent=5 // pred_fallthru
        _
      %p3603 = scmp.le.s32.totalorder 2, %s14
      // Predicated region
      $region41: #{tpu_custom_call.1} parent=5 // pred_check
        %p3604 = pneg %p3603
      $region42: #{tpu_custom_call.1} parent=5 // pred_check_branch
        %3606 = sbr.rel (%p3604) target = $region44
      $region43: #{tpu_custom_call.1} parent=5 // pred_region
        %s3607 = ssub.s32 %s14, 2
        // Predicated region
        $region45: #{tpu_custom_call.1} parent=43 // pred_check
          %p3608 = pneg %p111
        $region46: #{tpu_custom_call.1} parent=43 // pred_check_branch
          %3610 = sbr.rel (%p3608) target = $region48
        $region47: #{tpu_custom_call.1} parent=43 // pred_region
          %p3611 = scmp.lt.s32.totalorder %s20, 1
          %s3612 = scalar_select %p3611, %s20, 1
          %s3613 = smul.addr %s3612, 36
          %s3614 = smul.addr %s3613, 4
          %s3615 = scalar_lea.vmem %s3, %s3614
        $region48: #{tpu_custom_call.1} parent=43 // pred_fallthru
          _
        // Predicated region
        $region49: #{tpu_custom_call.1} parent=43 // pred_check
          %p3616 = pneg %p137
        $region50: #{tpu_custom_call.1} parent=43 // pred_check_branch
          %3618 = sbr.rel (%p3616) target = $region52
        $region51: #{tpu_custom_call.1} parent=43 // pred_region
          %s3619 = sand.u32 %s122, 1
          %s3620 = scalar_lea.sflag [#allocation4], %s3619
          %s3621 = sand.u32 %s122, 1
          %s3622 = smul.addr %s3621, 2
          %s3623 = scalar_lea.vmem [#allocation3], %s3622
          %3624 = dma.done %s3620, 32
        $region52: #{tpu_custom_call.1} parent=43 // pred_fallthru
          _
      $region44: #{tpu_custom_call.1} parent=5 // pred_fallthru
        _
    $region6: #{tpu_custom_call.1} parent=1 // loop_footer
      %s18 = sadd.s32 1, %s14
    $region7: #{tpu_custom_call.1} parent=1 // loop_footer_branch
      %13 = sbr.rel target = $region3
    $region8: #{tpu_custom_call.1} parent=1 // loop_exit
      _
    %3625 = vsyncpa [#allocation4], 1
    %s3626 = scalar_lea.sflag [#allocation4], 1
    %3627 = vsyncpa %s3626, 1

</llo_original>
